<compile_context>
chip_gen: v7x
topology: tpu7x:2x2x1
jax: 0.10.0
libtpu: 0.0.40
codegen_flags: <defaults>
</compile_context>

<pallas_src>
import functools

import jax
import jax.numpy as jnp
from jax.experimental import pallas as pl
from jax.experimental.pallas import tpu as pltpu


# ----------------------------- Pallas hot path ------------------------------

def _matmul_bias_act_kernel(x_ref, w_ref, b_ref, o_ref, *, act):
    # MXU matmul: bf16 inputs, f32 accumulation.
    y = jnp.dot(x_ref[...], w_ref[...], preferred_element_type=jnp.float32)
    y = y + b_ref[...]                      # bias kept in f32
    if act == "relu":
        y = jnp.maximum(y, 0.0)
    elif act == "sigmoid":
        # exp + approx reciprocal both run on the EUP slot (idle in a matmul kernel).
        y = pl.reciprocal(1.0 + jnp.exp(-y), approx=True)
    o_ref[...] = y.astype(o_ref.dtype)


def _round_up(v, m):
    return (v + m - 1) // m * m


_VMEM_TILE_BUDGET = 12 * 1024 * 1024   # per-kernel working-set budget (safe everywhere)


def _pick_tile_m(M, K, N, tm_max=512):
    """Largest M-tile (multiple of 8, <= tm_max) whose double-buffered footprint fits."""
    tm = min(_round_up(M, 8), tm_max)

    def footprint(t):
        # 2x bf16 X blocks + 2x f32 out blocks + 2x bf16 weight + bias
        return (2 * t * K * 2) + (2 * t * N * 4) + (2 * K * N * 2) + (2 * N * 4)

    while tm > 8 and footprint(tm) > _VMEM_TILE_BUDGET:
        tm -= 8
    return tm


def matmul_bias_act(x, w, b, act):
    """Fused act(X @ W + b) on TPU, tiled & pipelined over M.

    x: (M, K) f32, w: (K, N) f32, b: (N,) f32 -> (M, N) f32.
    """
    M, K = x.shape
    K2, N = w.shape
    assert K == K2

    tm = _pick_tile_m(M, K, N)
    Mtot = _round_up(M, tm)
    if Mtot != M:
        x = jnp.pad(x, ((0, Mtot - M), (0, 0)))

    xb = x.astype(jnp.bfloat16)                      # halve DMA bytes, 2x MXU rate
    wb = w.astype(jnp.bfloat16)
    b2 = b.reshape(1, N).astype(jnp.float32)         # epilogue stays f32

    kernel = functools.partial(_matmul_bias_act_kernel, act=act)
    out = pl.pallas_call(
        kernel,
        out_shape=jax.ShapeDtypeStruct((Mtot, N), jnp.float32),
        grid=(Mtot // tm,),
        in_specs=[
            pl.BlockSpec((tm, K), lambda i: (i, 0)),   # streamed, double-buffered
            pl.BlockSpec((K, N), lambda i: (0, 0)),    # resident weight
            pl.BlockSpec((1, N), lambda i: (0, 0)),    # resident bias
        ],
        out_specs=pl.BlockSpec((tm, N), lambda i: (i, 0)),
        compiler_params=pltpu.CompilerParams(
            dimension_semantics=("parallel",),          # shard M tiles on v7x's 2 TCs
            vmem_limit_bytes=32 * 1024 * 1024,          # explicit budget (v7x: 64 MiB phys)
        ),
    )(xb, wb, b2)

    return out[:M] if Mtot != M else out


# ------------------------------ JAX-side glue (NHWC) ------------------------

def _im2col_nhwc(x, k, stride, pad):
    """x: (B, H, W, C) -> X: (B*Ho*Wo, k*k*C), patch column order (ky, kx, c)."""
    B, H, W, C = x.shape
    xp = jnp.pad(x, ((0, 0), (pad, pad), (pad, pad), (0, 0)))
    Ho = (H + 2 * pad - k) // stride + 1
    Wo = (W + 2 * pad - k) // stride + 1
    cols = []
    for ky in range(k):
        for kx in range(k):
            cols.append(xp[:, ky:ky + stride * Ho:stride, kx:kx + stride * Wo:stride, :])
    patches = jnp.concatenate(cols, axis=-1)          # (B, Ho, Wo, k*k*C)
    return patches.reshape(B * Ho * Wo, k * k * C), B, Ho, Wo


def conv2d_nhwc(x, w, b, act, stride=2, pad=1):
    """PyTorch-semantics Conv2d on NHWC activations. w: (Cout, Cin, kh, kw)."""
    Cout, Cin, kh, kw = w.shape
    X, B, Ho, Wo = _im2col_nhwc(x, kh, stride, pad)
    Wm = w.transpose(2, 3, 1, 0).reshape(kh * kw * Cin, Cout)   # (ky,kx,cin) x cout
    Y = matmul_bias_act(X, Wm, b, act)                           # (B*Ho*Wo, Cout)
    return Y.reshape(B, Ho, Wo, Cout)                            # NHWC, no transpose


def conv_transpose2d_nhwc(x, w_t, b, act):
    """PyTorch-semantics ConvTranspose2d (k=4, s=2, p=1) via sub-pixel decomposition.

    x: (B, H, W, Cin), w_t: (Cin, Cout, 4, 4) (PyTorch layout) -> (B, 2H, 2W, Cout).

    out[2p+ph, 2q+pw] is a stride-1 2x2 conv of x (padded by 1) with the parity-
    selected sub-kernel: even parity taps (kh=3, kh=1), odd parity taps (kh=2, kh=0).
    """
    B, H, W, Cin = x.shape
    Cin2, Cout, kh, kw = w_t.shape
    assert Cin == Cin2 and kh == 4 and kw == 4
    xp = jnp.pad(x, ((0, 0), (1, 1), (1, 1), (0, 0)))
    taps = {0: (3, 1), 1: (2, 0)}                     # parity -> kernel index per dy/dx

    rows = []
    for ph in (0, 1):
        cols_out = []
        for pw in (0, 1):
            # 2x2 im2col on the (shared) padded input, window offset = parity.
            cols = []
            for dy in (0, 1):
                for dx in (0, 1):
                    cols.append(xp[:, ph + dy:ph + dy + H, pw + dx:pw + dx + W, :])
            X = jnp.concatenate(cols, axis=-1).reshape(B * H * W, 4 * Cin)
            # Sub-kernel, row order (dy, dx, cin).
            Wm = jnp.stack(
                [jnp.stack([w_t[:, :, taps[ph][dy], taps[pw][dx]] for dx in (0, 1)],
                           axis=0) for dy in (0, 1)],
                axis=0,
            ).reshape(4 * Cin, Cout)
            Y = matmul_bias_act(X, Wm, b, act).reshape(B, H, W, Cout)
            cols_out.append(Y)
        rows.append(jnp.stack(cols_out, axis=3))      # (B, H, W, 2, Cout)  (pw axis)
    out = jnp.stack(rows, axis=2)                     # (B, H, 2, W, 2, Cout)
    return out.reshape(B, 2 * H, 2 * W, Cout)


# ------------------------------- Autoencoder --------------------------------

def init_params(key, capacity, channel):
    c = capacity
    enc_dims = [(channel, c), (c, 2 * c), (2 * c, 4 * c), (4 * c, 8 * c), (8 * c, 16 * c)]
    dec_dims = [(16 * c, 8 * c), (8 * c, 4 * c), (4 * c, 2 * c), (2 * c, c), (c, channel)]
    keys = jax.random.split(key, 4 * len(enc_dims))
    ki = 0
    enc, dec = [], []
    for cin, cout in enc_dims:
        w = 0.05 * jax.random.normal(keys[ki], (cout, cin, 4, 4), jnp.float32); ki += 1
        b = 0.05 * jax.random.normal(keys[ki], (cout,), jnp.float32); ki += 1
        enc.append((w, b))
    for cin, cout in dec_dims:
        # PyTorch ConvTranspose2d weight layout: (in_channels, out_channels, kh, kw)
        w = 0.05 * jax.random.normal(keys[ki], (cin, cout, 4, 4), jnp.float32); ki += 1
        b = 0.05 * jax.random.normal(keys[ki], (cout,), jnp.float32); ki += 1
        dec.append((w, b))
    return enc, dec


def autoencoder_forward(x, enc, dec):
    """x: NCHW f32 -> reconstruction: NCHW f32 (matches the PyTorch module)."""
    h = jnp.transpose(x, (0, 2, 3, 1))                # NCHW -> NHWC once
    # ---- encoder: 5 x (Conv2d k4 s2 p1 -> ReLU) ----
    for w, b in enc:
        h = conv2d_nhwc(h, w, b, act="relu")
    # PyTorch's x.view(B, 16c, img//32, img//32) is an identity for consistent shapes
    # (encoder output spatial size is exactly img//32 after 5 stride-2 convs).
    # ---- decoder: 5 x ConvTranspose2d (ReLU x4, sigmoid last) ----
    for i, (w, b) in enumerate(dec):
        act = "sigmoid" if i == len(dec) - 1 else "relu"
        h = conv_transpose2d_nhwc(h, w, b, act=act)
    return jnp.transpose(h, (0, 3, 1, 2))             # NHWC -> NCHW once


if __name__ == "__main__":
    # Small, self-consistent shapes: img_size divisible by 32 so the decoder's view
    # (B, 16*capacity, img//32, img//32) is an identity, as in the module.
    img_size = 64
    capacity = 4
    channel = 3
    batch = 2

    key = jax.random.PRNGKey(0)
    k_x, k_p = jax.random.split(key)
    x = jax.random.uniform(k_x, (batch, channel, img_size, img_size), jnp.float32)
    enc, dec = init_params(k_p, capacity, channel)

    fwd = jax.jit(autoencoder_forward)
    y = jax.block_until_ready(fwd(x, enc, dec))

    assert y.shape == (batch, channel, img_size, img_size), y.shape
    assert bool(jnp.all(jnp.isfinite(y)))
    # sigmoid output range sanity (tiny slack for the approx-reciprocal epilogue)
    assert bool(jnp.all((y >= 0.0) & (y <= 1.0 + 1e-3)))
    print("KERNEL_OK")
</pallas_src>

<mosaic_0001>
module attributes {stable_mosaic.version = 11 : i64} {
  func.func @_matmul_bias_act_kernel(%arg0: i32, %arg1: memref<512x48xbf16, #tpu.memory_space<vmem>>, %arg2: memref<48x4xbf16, #tpu.memory_space<vmem>>, %arg3: memref<1x4xf32, #tpu.memory_space<vmem>>, %arg4: memref<512x4xf32, #tpu.memory_space<vmem>>) attributes {dimension_semantics = [#tpu.dimension_semantics<parallel>], iteration_bounds = array<i64: 4>, scalar_prefetch = 0 : i64, scratch_operands = 0 : i64, tpu.core_type = #tpu.core_type<tc>, window_params = [{transform_indices = @transform_0, window_bounds = array<i64: 512, 48>}, {pipeline_mode = #tpu.pipeline_mode<synchronous>, transform_indices = @transform_1, window_bounds = array<i64: 48, 4>}, {pipeline_mode = #tpu.pipeline_mode<synchronous>, transform_indices = @transform_2, window_bounds = array<i64: 1, 4>}, {transform_indices = @transform_3, window_bounds = array<i64: 512, 4>}]} {
    %c0 = arith.constant 0 : index
    %c0_0 = arith.constant 0 : index
    %0 = vector.load %arg1[%c0, %c0_0] : memref<512x48xbf16, #tpu.memory_space<vmem>>, vector<512x48xbf16>
    %c0_1 = arith.constant 0 : index
    %c0_2 = arith.constant 0 : index
    %1 = vector.load %arg2[%c0_1, %c0_2] : memref<48x4xbf16, #tpu.memory_space<vmem>>, vector<48x4xbf16>
    %cst = arith.constant dense<0.000000e+00> : vector<512x4xf32>
    %2 = tpu.matmul %0, %1, %cst {dimension_numbers = #tpu.dot_dimension_numbers<[1], [0], [0], [1], [0, 0, 1, 1], [], []>} : vector<512x48xbf16>, vector<48x4xbf16>, vector<512x4xf32> -> vector<512x4xf32>
    %c0_3 = arith.constant 0 : index
    %c0_4 = arith.constant 0 : index
    %3 = vector.load %arg3[%c0_3, %c0_4] : memref<1x4xf32, #tpu.memory_space<vmem>>, vector<1x4xf32>
    %4 = vector.broadcast %3 : vector<1x4xf32> to vector<512x4xf32>
    %5 = arith.addf %2, %4 : vector<512x4xf32>
    %cst_5 = arith.constant 0.000000e+00 : f32
    %6 = vector.broadcast %cst_5 : f32 to vector<512x4xf32>
    %7 = arith.maximumf %5, %6 : vector<512x4xf32>
    %c0_6 = arith.constant 0 : index
    %c0_7 = arith.constant 0 : index
    %8 = vector.load %arg4[%c0_6, %c0_7] : memref<512x4xf32, #tpu.memory_space<vmem>>, vector<512x4xf32>
    tpu.vector_store %arg4[%c0_6, %c0_7], %7 {strides = array<i32>} : memref<512x4xf32, #tpu.memory_space<vmem>>, vector<512x4xf32>,
    return
  }
  func.func @transform_0(%arg0: i32) -> (i32, i32) {
    %c0_i32 = arith.constant 0 : i32
    %c0_i32_0 = arith.constant 0 : i32
    return %arg0, %c0_i32 : i32, i32
  }
  func.func @transform_1(%arg0: i32) -> (i32, i32) {
    %c0_i32 = arith.constant 0 : i32
    %c0_i32_0 = arith.constant 0 : i32
    %c0_i32_1 = arith.constant 0 : i32
    return %c0_i32, %c0_i32_0 : i32, i32
  }
  func.func @transform_2(%arg0: i32) -> (i32, i32) {
    %c0_i32 = arith.constant 0 : i32
    %c0_i32_0 = arith.constant 0 : i32
    %c0_i32_1 = arith.constant 0 : i32
    return %c0_i32, %c0_i32_0 : i32, i32
  }
  func.func @transform_3(%arg0: i32) -> (i32, i32) {
    %c0_i32 = arith.constant 0 : i32
    %c0_i32_0 = arith.constant 0 : i32
    return %arg0, %c0_i32 : i32, i32
  }
}

module attributes {stable_mosaic.version = 11 : i64} {
  func.func @_matmul_bias_act_kernel(%arg0: i32, %arg1: memref<512x64xbf16, #tpu.memory_space<vmem>>, %arg2: memref<64x8xbf16, #tpu.memory_space<vmem>>, %arg3: memref<1x8xf32, #tpu.memory_space<vmem>>, %arg4: memref<512x8xf32, #tpu.memory_space<vmem>>) attributes {dimension_semantics = [#tpu.dimension_semantics<parallel>], iteration_bounds = array<i64: 1>, scalar_prefetch = 0 : i64, scratch_operands = 0 : i64, tpu.core_type = #tpu.core_type<tc>, window_params = [{transform_indices = @transform_0, window_bounds = array<i64: 512, 64>}, {pipeline_mode = #tpu.pipeline_mode<synchronous>, transform_indices = @transform_1, window_bounds = array<i64: 64, 8>}, {pipeline_mode = #tpu.pipeline_mode<synchronous>, transform_indices = @transform_2, window_bounds = array<i64: 1, 8>}, {transform_indices = @transform_3, window_bounds = array<i64: 512, 8>}]} {
    %c0 = arith.constant 0 : index
    %c0_0 = arith.constant 0 : index
    %0 = vector.load %arg1[%c0, %c0_0] : memref<512x64xbf16, #tpu.memory_space<vmem>>, vector<512x64xbf16>
    %c0_1 = arith.constant 0 : index
    %c0_2 = arith.constant 0 : index
    %1 = vector.load %arg2[%c0_1, %c0_2] : memref<64x8xbf16, #tpu.memory_space<vmem>>, vector<64x8xbf16>
    %cst = arith.constant dense<0.000000e+00> : vector<512x8xf32>
    %2 = tpu.matmul %0, %1, %cst {dimension_numbers = #tpu.dot_dimension_numbers<[1], [0], [0], [1], [0, 0, 1, 1], [], []>} : vector<512x64xbf16>, vector<64x8xbf16>, vector<512x8xf32> -> vector<512x8xf32>
    %c0_3 = arith.constant 0 : index
    %c0_4 = arith.constant 0 : index
    %3 = vector.load %arg3[%c0_3, %c0_4] : memref<1x8xf32, #tpu.memory_space<vmem>>, vector<1x8xf32>
    %4 = vector.broadcast %3 : vector<1x8xf32> to vector<512x8xf32>
    %5 = arith.addf %2, %4 : vector<512x8xf32>
    %cst_5 = arith.constant 0.000000e+00 : f32
    %6 = vector.broadcast %cst_5 : f32 to vector<512x8xf32>
    %7 = arith.maximumf %5, %6 : vector<512x8xf32>
    %c0_6 = arith.constant 0 : index
    %c0_7 = arith.constant 0 : index
    %8 = vector.load %arg4[%c0_6, %c0_7] : memref<512x8xf32, #tpu.memory_space<vmem>>, vector<512x8xf32>
    tpu.vector_store %arg4[%c0_6, %c0_7], %7 {strides = array<i32>} : memref<512x8xf32, #tpu.memory_space<vmem>>, vector<512x8xf32>,
    return
  }
  func.func @transform_0(%arg0: i32) -> (i32, i32) {
    %c0_i32 = arith.constant 0 : i32
    %c0_i32_0 = arith.constant 0 : i32
    return %arg0, %c0_i32 : i32, i32
  }
  func.func @transform_1(%arg0: i32) -> (i32, i32) {
    %c0_i32 = arith.constant 0 : i32
    %c0_i32_0 = arith.constant 0 : i32
    %c0_i32_1 = arith.constant 0 : i32
    return %c0_i32, %c0_i32_0 : i32, i32
  }
  func.func @transform_2(%arg0: i32) -> (i32, i32) {
    %c0_i32 = arith.constant 0 : i32
    %c0_i32_0 = arith.constant 0 : i32
    %c0_i32_1 = arith.constant 0 : i32
    return %c0_i32, %c0_i32_0 : i32, i32
  }
  func.func @transform_3(%arg0: i32) -> (i32, i32) {
    %c0_i32 = arith.constant 0 : i32
    %c0_i32_0 = arith.constant 0 : i32
    return %arg0, %c0_i32 : i32, i32
  }
}

module attributes {stable_mosaic.version = 11 : i64} {
  func.func @_matmul_bias_act_kernel(%arg0: i32, %arg1: memref<128x128xbf16, #tpu.memory_space<vmem>>, %arg2: memref<128x16xbf16, #tpu.memory_space<vmem>>, %arg3: memref<1x16xf32, #tpu.memory_space<vmem>>, %arg4: memref<128x16xf32, #tpu.memory_space<vmem>>) attributes {dimension_semantics = [#tpu.dimension_semantics<parallel>], iteration_bounds = array<i64: 1>, scalar_prefetch = 0 : i64, scratch_operands = 0 : i64, tpu.core_type = #tpu.core_type<tc>, window_params = [{transform_indices = @transform_0, window_bounds = array<i64: 128, 128>}, {pipeline_mode = #tpu.pipeline_mode<synchronous>, transform_indices = @transform_1, window_bounds = array<i64: 128, 16>}, {pipeline_mode = #tpu.pipeline_mode<synchronous>, transform_indices = @transform_2, window_bounds = array<i64: 1, 16>}, {transform_indices = @transform_3, window_bounds = array<i64: 128, 16>}]} {
    %c0 = arith.constant 0 : index
    %c0_0 = arith.constant 0 : index
    %0 = vector.load %arg1[%c0, %c0_0] : memref<128x128xbf16, #tpu.memory_space<vmem>>, vector<128x128xbf16>
    %c0_1 = arith.constant 0 : index
    %c0_2 = arith.constant 0 : index
    %1 = vector.load %arg2[%c0_1, %c0_2] : memref<128x16xbf16, #tpu.memory_space<vmem>>, vector<128x16xbf16>
    %cst = arith.constant dense<0.000000e+00> : vector<128x16xf32>
    %2 = tpu.matmul %0, %1, %cst {dimension_numbers = #tpu.dot_dimension_numbers<[1], [0], [0], [1], [0, 0, 1, 1], [], []>} : vector<128x128xbf16>, vector<128x16xbf16>, vector<128x16xf32> -> vector<128x16xf32>
    %c0_3 = arith.constant 0 : index
    %c0_4 = arith.constant 0 : index
    %3 = vector.load %arg3[%c0_3, %c0_4] : memref<1x16xf32, #tpu.memory_space<vmem>>, vector<1x16xf32>
    %4 = vector.broadcast %3 : vector<1x16xf32> to vector<128x16xf32>
    %5 = arith.addf %2, %4 : vector<128x16xf32>
    %cst_5 = arith.constant 0.000000e+00 : f32
    %6 = vector.broadcast %cst_5 : f32 to vector<128x16xf32>
    %7 = arith.maximumf %5, %6 : vector<128x16xf32>
    %c0_6 = arith.constant 0 : index
    %c0_7 = arith.constant 0 : index
    %8 = vector.load %arg4[%c0_6, %c0_7] : memref<128x16xf32, #tpu.memory_space<vmem>>, vector<128x16xf32>
    tpu.vector_store %arg4[%c0_6, %c0_7], %7 {strides = array<i32>} : memref<128x16xf32, #tpu.memory_space<vmem>>, vector<128x16xf32>,
    return
  }
  func.func @transform_0(%arg0: i32) -> (i32, i32) {
    %c0_i32 = arith.constant 0 : i32
    %c0_i32_0 = arith.constant 0 : i32
    return %arg0, %c0_i32 : i32, i32
  }
  func.func @transform_1(%arg0: i32) -> (i32, i32) {
    %c0_i32 = arith.constant 0 : i32
    %c0_i32_0 = arith.constant 0 : i32
    %c0_i32_1 = arith.constant 0 : i32
    return %c0_i32, %c0_i32_0 : i32, i32
  }
  func.func @transform_2(%arg0: i32) -> (i32, i32) {
    %c0_i32 = arith.constant 0 : i32
    %c0_i32_0 = arith.constant 0 : i32
    %c0_i32_1 = arith.constant 0 : i32
    return %c0_i32, %c0_i32_0 : i32, i32
  }
  func.func @transform_3(%arg0: i32) -> (i32, i32) {
    %c0_i32 = arith.constant 0 : i32
    %c0_i32_0 = arith.constant 0 : i32
    return %arg0, %c0_i32 : i32, i32
  }
}

module attributes {stable_mosaic.version = 11 : i64} {
  func.func @_matmul_bias_act_kernel(%arg0: i32, %arg1: memref<32x256xbf16, #tpu.memory_space<vmem>>, %arg2: memref<256x32xbf16, #tpu.memory_space<vmem>>, %arg3: memref<1x32xf32, #tpu.memory_space<vmem>>, %arg4: memref<32x32xf32, #tpu.memory_space<vmem>>) attributes {dimension_semantics = [#tpu.dimension_semantics<parallel>], iteration_bounds = array<i64: 1>, scalar_prefetch = 0 : i64, scratch_operands = 0 : i64, tpu.core_type = #tpu.core_type<tc>, window_params = [{transform_indices = @transform_0, window_bounds = array<i64: 32, 256>}, {pipeline_mode = #tpu.pipeline_mode<synchronous>, transform_indices = @transform_1, window_bounds = array<i64: 256, 32>}, {pipeline_mode = #tpu.pipeline_mode<synchronous>, transform_indices = @transform_2, window_bounds = array<i64: 1, 32>}, {transform_indices = @transform_3, window_bounds = array<i64: 32, 32>}]} {
    %c0 = arith.constant 0 : index
    %c0_0 = arith.constant 0 : index
    %0 = vector.load %arg1[%c0, %c0_0] : memref<32x256xbf16, #tpu.memory_space<vmem>>, vector<32x256xbf16>
    %c0_1 = arith.constant 0 : index
    %c0_2 = arith.constant 0 : index
    %1 = vector.load %arg2[%c0_1, %c0_2] : memref<256x32xbf16, #tpu.memory_space<vmem>>, vector<256x32xbf16>
    %cst = arith.constant dense<0.000000e+00> : vector<32x32xf32>
    %2 = tpu.matmul %0, %1, %cst {dimension_numbers = #tpu.dot_dimension_numbers<[1], [0], [0], [1], [0, 0, 1, 1], [], []>} : vector<32x256xbf16>, vector<256x32xbf16>, vector<32x32xf32> -> vector<32x32xf32>
    %c0_3 = arith.constant 0 : index
    %c0_4 = arith.constant 0 : index
    %3 = vector.load %arg3[%c0_3, %c0_4] : memref<1x32xf32, #tpu.memory_space<vmem>>, vector<1x32xf32>
    %4 = vector.broadcast %3 : vector<1x32xf32> to vector<32x32xf32>
    %5 = arith.addf %2, %4 : vector<32x32xf32>
    %cst_5 = arith.constant 0.000000e+00 : f32
    %6 = vector.broadcast %cst_5 : f32 to vector<32x32xf32>
    %7 = arith.maximumf %5, %6 : vector<32x32xf32>
    %c0_6 = arith.constant 0 : index
    %c0_7 = arith.constant 0 : index
    %8 = vector.load %arg4[%c0_6, %c0_7] : memref<32x32xf32, #tpu.memory_space<vmem>>, vector<32x32xf32>
    tpu.vector_store %arg4[%c0_6, %c0_7], %7 {strides = array<i32>} : memref<32x32xf32, #tpu.memory_space<vmem>>, vector<32x32xf32>,
    return
  }
  func.func @transform_0(%arg0: i32) -> (i32, i32) {
    %c0_i32 = arith.constant 0 : i32
    %c0_i32_0 = arith.constant 0 : i32
    return %arg0, %c0_i32 : i32, i32
  }
  func.func @transform_1(%arg0: i32) -> (i32, i32) {
    %c0_i32 = arith.constant 0 : i32
    %c0_i32_0 = arith.constant 0 : i32
    %c0_i32_1 = arith.constant 0 : i32
    return %c0_i32, %c0_i32_0 : i32, i32
  }
  func.func @transform_2(%arg0: i32) -> (i32, i32) {
    %c0_i32 = arith.constant 0 : i32
    %c0_i32_0 = arith.constant 0 : i32
    %c0_i32_1 = arith.constant 0 : i32
    return %c0_i32, %c0_i32_0 : i32, i32
  }
  func.func @transform_3(%arg0: i32) -> (i32, i32) {
    %c0_i32 = arith.constant 0 : i32
    %c0_i32_0 = arith.constant 0 : i32
    return %arg0, %c0_i32 : i32, i32
  }
}

module attributes {stable_mosaic.version = 11 : i64} {
  func.func @_matmul_bias_act_kernel(%arg0: i32, %arg1: memref<8x512xbf16, #tpu.memory_space<vmem>>, %arg2: memref<512x64xbf16, #tpu.memory_space<vmem>>, %arg3: memref<1x64xf32, #tpu.memory_space<vmem>>, %arg4: memref<8x64xf32, #tpu.memory_space<vmem>>) attributes {dimension_semantics = [#tpu.dimension_semantics<parallel>], iteration_bounds = array<i64: 1>, scalar_prefetch = 0 : i64, scratch_operands = 0 : i64, tpu.core_type = #tpu.core_type<tc>, window_params = [{transform_indices = @transform_0, window_bounds = array<i64: 8, 512>}, {pipeline_mode = #tpu.pipeline_mode<synchronous>, transform_indices = @transform_1, window_bounds = array<i64: 512, 64>}, {pipeline_mode = #tpu.pipeline_mode<synchronous>, transform_indices = @transform_2, window_bounds = array<i64: 1, 64>}, {transform_indices = @transform_3, window_bounds = array<i64: 8, 64>}]} {
    %c0 = arith.constant 0 : index
    %c0_0 = arith.constant 0 : index
    %0 = vector.load %arg1[%c0, %c0_0] : memref<8x512xbf16, #tpu.memory_space<vmem>>, vector<8x512xbf16>
    %c0_1 = arith.constant 0 : index
    %c0_2 = arith.constant 0 : index
    %1 = vector.load %arg2[%c0_1, %c0_2] : memref<512x64xbf16, #tpu.memory_space<vmem>>, vector<512x64xbf16>
    %cst = arith.constant dense<0.000000e+00> : vector<8x64xf32>
    %2 = tpu.matmul %0, %1, %cst {dimension_numbers = #tpu.dot_dimension_numbers<[1], [0], [0], [1], [0, 0, 1, 1], [], []>} : vector<8x512xbf16>, vector<512x64xbf16>, vector<8x64xf32> -> vector<8x64xf32>
    %c0_3 = arith.constant 0 : index
    %c0_4 = arith.constant 0 : index
    %3 = vector.load %arg3[%c0_3, %c0_4] : memref<1x64xf32, #tpu.memory_space<vmem>>, vector<1x64xf32>
    %4 = vector.broadcast %3 : vector<1x64xf32> to vector<8x64xf32>
    %5 = arith.addf %2, %4 : vector<8x64xf32>
    %cst_5 = arith.constant 0.000000e+00 : f32
    %6 = vector.broadcast %cst_5 : f32 to vector<8x64xf32>
    %7 = arith.maximumf %5, %6 : vector<8x64xf32>
    %c0_6 = arith.constant 0 : index
    %c0_7 = arith.constant 0 : index
    %8 = vector.load %arg4[%c0_6, %c0_7] : memref<8x64xf32, #tpu.memory_space<vmem>>, vector<8x64xf32>
    tpu.vector_store %arg4[%c0_6, %c0_7], %7 {strides = array<i32>} : memref<8x64xf32, #tpu.memory_space<vmem>>, vector<8x64xf32>,
    return
  }
  func.func @transform_0(%arg0: i32) -> (i32, i32) {
    %c0_i32 = arith.constant 0 : i32
    %c0_i32_0 = arith.constant 0 : i32
    return %arg0, %c0_i32 : i32, i32
  }
  func.func @transform_1(%arg0: i32) -> (i32, i32) {
    %c0_i32 = arith.constant 0 : i32
    %c0_i32_0 = arith.constant 0 : i32
    %c0_i32_1 = arith.constant 0 : i32
    return %c0_i32, %c0_i32_0 : i32, i32
  }
  func.func @transform_2(%arg0: i32) -> (i32, i32) {
    %c0_i32 = arith.constant 0 : i32
    %c0_i32_0 = arith.constant 0 : i32
    %c0_i32_1 = arith.constant 0 : i32
    return %c0_i32, %c0_i32_0 : i32, i32
  }
  func.func @transform_3(%arg0: i32) -> (i32, i32) {
    %c0_i32 = arith.constant 0 : i32
    %c0_i32_0 = arith.constant 0 : i32
    return %arg0, %c0_i32 : i32, i32
  }
}

module attributes {stable_mosaic.version = 11 : i64} {
  func.func @_matmul_bias_act_kernel(%arg0: i32, %arg1: memref<8x256xbf16, #tpu.memory_space<vmem>>, %arg2: memref<256x32xbf16, #tpu.memory_space<vmem>>, %arg3: memref<1x32xf32, #tpu.memory_space<vmem>>, %arg4: memref<8x32xf32, #tpu.memory_space<vmem>>) attributes {dimension_semantics = [#tpu.dimension_semantics<parallel>], iteration_bounds = array<i64: 1>, scalar_prefetch = 0 : i64, scratch_operands = 0 : i64, tpu.core_type = #tpu.core_type<tc>, window_params = [{transform_indices = @transform_0, window_bounds = array<i64: 8, 256>}, {pipeline_mode = #tpu.pipeline_mode<synchronous>, transform_indices = @transform_1, window_bounds = array<i64: 256, 32>}, {pipeline_mode = #tpu.pipeline_mode<synchronous>, transform_indices = @transform_2, window_bounds = array<i64: 1, 32>}, {transform_indices = @transform_3, window_bounds = array<i64: 8, 32>}]} {
    %c0 = arith.constant 0 : index
    %c0_0 = arith.constant 0 : index
    %0 = vector.load %arg1[%c0, %c0_0] : memref<8x256xbf16, #tpu.memory_space<vmem>>, vector<8x256xbf16>
    %c0_1 = arith.constant 0 : index
    %c0_2 = arith.constant 0 : index
    %1 = vector.load %arg2[%c0_1, %c0_2] : memref<256x32xbf16, #tpu.memory_space<vmem>>, vector<256x32xbf16>
    %cst = arith.constant dense<0.000000e+00> : vector<8x32xf32>
    %2 = tpu.matmul %0, %1, %cst {dimension_numbers = #tpu.dot_dimension_numbers<[1], [0], [0], [1], [0, 0, 1, 1], [], []>} : vector<8x256xbf16>, vector<256x32xbf16>, vector<8x32xf32> -> vector<8x32xf32>
    %c0_3 = arith.constant 0 : index
    %c0_4 = arith.constant 0 : index
    %3 = vector.load %arg3[%c0_3, %c0_4] : memref<1x32xf32, #tpu.memory_space<vmem>>, vector<1x32xf32>
    %4 = vector.broadcast %3 : vector<1x32xf32> to vector<8x32xf32>
    %5 = arith.addf %2, %4 : vector<8x32xf32>
    %cst_5 = arith.constant 0.000000e+00 : f32
    %6 = vector.broadcast %cst_5 : f32 to vector<8x32xf32>
    %7 = arith.maximumf %5, %6 : vector<8x32xf32>
    %c0_6 = arith.constant 0 : index
    %c0_7 = arith.constant 0 : index
    %8 = vector.load %arg4[%c0_6, %c0_7] : memref<8x32xf32, #tpu.memory_space<vmem>>, vector<8x32xf32>
    tpu.vector_store %arg4[%c0_6, %c0_7], %7 {strides = array<i32>} : memref<8x32xf32, #tpu.memory_space<vmem>>, vector<8x32xf32>,
    return
  }
  func.func @transform_0(%arg0: i32) -> (i32, i32) {
    %c0_i32 = arith.constant 0 : i32
    %c0_i32_0 = arith.constant 0 : i32
    return %arg0, %c0_i32 : i32, i32
  }
  func.func @transform_1(%arg0: i32) -> (i32, i32) {
    %c0_i32 = arith.constant 0 : i32
    %c0_i32_0 = arith.constant 0 : i32
    %c0_i32_1 = arith.constant 0 : i32
    return %c0_i32, %c0_i32_0 : i32, i32
  }
  func.func @transform_2(%arg0: i32) -> (i32, i32) {
    %c0_i32 = arith.constant 0 : i32
    %c0_i32_0 = arith.constant 0 : i32
    %c0_i32_1 = arith.constant 0 : i32
    return %c0_i32, %c0_i32_0 : i32, i32
  }
  func.func @transform_3(%arg0: i32) -> (i32, i32) {
    %c0_i32 = arith.constant 0 : i32
    %c0_i32_0 = arith.constant 0 : i32
    return %arg0, %c0_i32 : i32, i32
  }
}

module attributes {stable_mosaic.version = 11 : i64} {
  func.func @_matmul_bias_act_kernel(%arg0: i32, %arg1: memref<32x128xbf16, #tpu.memory_space<vmem>>, %arg2: memref<128x16xbf16, #tpu.memory_space<vmem>>, %arg3: memref<1x16xf32, #tpu.memory_space<vmem>>, %arg4: memref<32x16xf32, #tpu.memory_space<vmem>>) attributes {dimension_semantics = [#tpu.dimension_semantics<parallel>], iteration_bounds = array<i64: 1>, scalar_prefetch = 0 : i64, scratch_operands = 0 : i64, tpu.core_type = #tpu.core_type<tc>, window_params = [{transform_indices = @transform_0, window_bounds = array<i64: 32, 128>}, {pipeline_mode = #tpu.pipeline_mode<synchronous>, transform_indices = @transform_1, window_bounds = array<i64: 128, 16>}, {pipeline_mode = #tpu.pipeline_mode<synchronous>, transform_indices = @transform_2, window_bounds = array<i64: 1, 16>}, {transform_indices = @transform_3, window_bounds = array<i64: 32, 16>}]} {
    %c0 = arith.constant 0 : index
    %c0_0 = arith.constant 0 : index
    %0 = vector.load %arg1[%c0, %c0_0] : memref<32x128xbf16, #tpu.memory_space<vmem>>, vector<32x128xbf16>
    %c0_1 = arith.constant 0 : index
    %c0_2 = arith.constant 0 : index
    %1 = vector.load %arg2[%c0_1, %c0_2] : memref<128x16xbf16, #tpu.memory_space<vmem>>, vector<128x16xbf16>
    %cst = arith.constant dense<0.000000e+00> : vector<32x16xf32>
    %2 = tpu.matmul %0, %1, %cst {dimension_numbers = #tpu.dot_dimension_numbers<[1], [0], [0], [1], [0, 0, 1, 1], [], []>} : vector<32x128xbf16>, vector<128x16xbf16>, vector<32x16xf32> -> vector<32x16xf32>
    %c0_3 = arith.constant 0 : index
    %c0_4 = arith.constant 0 : index
    %3 = vector.load %arg3[%c0_3, %c0_4] : memref<1x16xf32, #tpu.memory_space<vmem>>, vector<1x16xf32>
    %4 = vector.broadcast %3 : vector<1x16xf32> to vector<32x16xf32>
    %5 = arith.addf %2, %4 : vector<32x16xf32>
    %cst_5 = arith.constant 0.000000e+00 : f32
    %6 = vector.broadcast %cst_5 : f32 to vector<32x16xf32>
    %7 = arith.maximumf %5, %6 : vector<32x16xf32>
    %c0_6 = arith.constant 0 : index
    %c0_7 = arith.constant 0 : index
    %8 = vector.load %arg4[%c0_6, %c0_7] : memref<32x16xf32, #tpu.memory_space<vmem>>, vector<32x16xf32>
    tpu.vector_store %arg4[%c0_6, %c0_7], %7 {strides = array<i32>} : memref<32x16xf32, #tpu.memory_space<vmem>>, vector<32x16xf32>,
    return
  }
  func.func @transform_0(%arg0: i32) -> (i32, i32) {
    %c0_i32 = arith.constant 0 : i32
    %c0_i32_0 = arith.constant 0 : i32
    return %arg0, %c0_i32 : i32, i32
  }
  func.func @transform_1(%arg0: i32) -> (i32, i32) {
    %c0_i32 = arith.constant 0 : i32
    %c0_i32_0 = arith.constant 0 : i32
    %c0_i32_1 = arith.constant 0 : i32
    return %c0_i32, %c0_i32_0 : i32, i32
  }
  func.func @transform_2(%arg0: i32) -> (i32, i32) {
    %c0_i32 = arith.constant 0 : i32
    %c0_i32_0 = arith.constant 0 : i32
    %c0_i32_1 = arith.constant 0 : i32
    return %c0_i32, %c0_i32_0 : i32, i32
  }
  func.func @transform_3(%arg0: i32) -> (i32, i32) {
    %c0_i32 = arith.constant 0 : i32
    %c0_i32_0 = arith.constant 0 : i32
    return %arg0, %c0_i32 : i32, i32
  }
}

module attributes {stable_mosaic.version = 11 : i64} {
  func.func @_matmul_bias_act_kernel(%arg0: i32, %arg1: memref<128x64xbf16, #tpu.memory_space<vmem>>, %arg2: memref<64x8xbf16, #tpu.memory_space<vmem>>, %arg3: memref<1x8xf32, #tpu.memory_space<vmem>>, %arg4: memref<128x8xf32, #tpu.memory_space<vmem>>) attributes {dimension_semantics = [#tpu.dimension_semantics<parallel>], iteration_bounds = array<i64: 1>, scalar_prefetch = 0 : i64, scratch_operands = 0 : i64, tpu.core_type = #tpu.core_type<tc>, window_params = [{transform_indices = @transform_0, window_bounds = array<i64: 128, 64>}, {pipeline_mode = #tpu.pipeline_mode<synchronous>, transform_indices = @transform_1, window_bounds = array<i64: 64, 8>}, {pipeline_mode = #tpu.pipeline_mode<synchronous>, transform_indices = @transform_2, window_bounds = array<i64: 1, 8>}, {transform_indices = @transform_3, window_bounds = array<i64: 128, 8>}]} {
    %c0 = arith.constant 0 : index
    %c0_0 = arith.constant 0 : index
    %0 = vector.load %arg1[%c0, %c0_0] : memref<128x64xbf16, #tpu.memory_space<vmem>>, vector<128x64xbf16>
    %c0_1 = arith.constant 0 : index
    %c0_2 = arith.constant 0 : index
    %1 = vector.load %arg2[%c0_1, %c0_2] : memref<64x8xbf16, #tpu.memory_space<vmem>>, vector<64x8xbf16>
    %cst = arith.constant dense<0.000000e+00> : vector<128x8xf32>
    %2 = tpu.matmul %0, %1, %cst {dimension_numbers = #tpu.dot_dimension_numbers<[1], [0], [0], [1], [0, 0, 1, 1], [], []>} : vector<128x64xbf16>, vector<64x8xbf16>, vector<128x8xf32> -> vector<128x8xf32>
    %c0_3 = arith.constant 0 : index
    %c0_4 = arith.constant 0 : index
    %3 = vector.load %arg3[%c0_3, %c0_4] : memref<1x8xf32, #tpu.memory_space<vmem>>, vector<1x8xf32>
    %4 = vector.broadcast %3 : vector<1x8xf32> to vector<128x8xf32>
    %5 = arith.addf %2, %4 : vector<128x8xf32>
    %cst_5 = arith.constant 0.000000e+00 : f32
    %6 = vector.broadcast %cst_5 : f32 to vector<128x8xf32>
    %7 = arith.maximumf %5, %6 : vector<128x8xf32>
    %c0_6 = arith.constant 0 : index
    %c0_7 = arith.constant 0 : index
    %8 = vector.load %arg4[%c0_6, %c0_7] : memref<128x8xf32, #tpu.memory_space<vmem>>, vector<128x8xf32>
    tpu.vector_store %arg4[%c0_6, %c0_7], %7 {strides = array<i32>} : memref<128x8xf32, #tpu.memory_space<vmem>>, vector<128x8xf32>,
    return
  }
  func.func @transform_0(%arg0: i32) -> (i32, i32) {
    %c0_i32 = arith.constant 0 : i32
    %c0_i32_0 = arith.constant 0 : i32
    return %arg0, %c0_i32 : i32, i32
  }
  func.func @transform_1(%arg0: i32) -> (i32, i32) {
    %c0_i32 = arith.constant 0 : i32
    %c0_i32_0 = arith.constant 0 : i32
    %c0_i32_1 = arith.constant 0 : i32
    return %c0_i32, %c0_i32_0 : i32, i32
  }
  func.func @transform_2(%arg0: i32) -> (i32, i32) {
    %c0_i32 = arith.constant 0 : i32
    %c0_i32_0 = arith.constant 0 : i32
    %c0_i32_1 = arith.constant 0 : i32
    return %c0_i32, %c0_i32_0 : i32, i32
  }
  func.func @transform_3(%arg0: i32) -> (i32, i32) {
    %c0_i32 = arith.constant 0 : i32
    %c0_i32_0 = arith.constant 0 : i32
    return %arg0, %c0_i32 : i32, i32
  }
}

module attributes {stable_mosaic.version = 11 : i64} {
  func.func @_matmul_bias_act_kernel(%arg0: i32, %arg1: memref<512x32xbf16, #tpu.memory_space<vmem>>, %arg2: memref<32x4xbf16, #tpu.memory_space<vmem>>, %arg3: memref<1x4xf32, #tpu.memory_space<vmem>>, %arg4: memref<512x4xf32, #tpu.memory_space<vmem>>) attributes {dimension_semantics = [#tpu.dimension_semantics<parallel>], iteration_bounds = array<i64: 1>, scalar_prefetch = 0 : i64, scratch_operands = 0 : i64, tpu.core_type = #tpu.core_type<tc>, window_params = [{transform_indices = @transform_0, window_bounds = array<i64: 512, 32>}, {pipeline_mode = #tpu.pipeline_mode<synchronous>, transform_indices = @transform_1, window_bounds = array<i64: 32, 4>}, {pipeline_mode = #tpu.pipeline_mode<synchronous>, transform_indices = @transform_2, window_bounds = array<i64: 1, 4>}, {transform_indices = @transform_3, window_bounds = array<i64: 512, 4>}]} {
    %c0 = arith.constant 0 : index
    %c0_0 = arith.constant 0 : index
    %0 = vector.load %arg1[%c0, %c0_0] : memref<512x32xbf16, #tpu.memory_space<vmem>>, vector<512x32xbf16>
    %c0_1 = arith.constant 0 : index
    %c0_2 = arith.constant 0 : index
    %1 = vector.load %arg2[%c0_1, %c0_2] : memref<32x4xbf16, #tpu.memory_space<vmem>>, vector<32x4xbf16>
    %cst = arith.constant dense<0.000000e+00> : vector<512x4xf32>
    %2 = tpu.matmul %0, %1, %cst {dimension_numbers = #tpu.dot_dimension_numbers<[1], [0], [0], [1], [0, 0, 1, 1], [], []>} : vector<512x32xbf16>, vector<32x4xbf16>, vector<512x4xf32> -> vector<512x4xf32>
    %c0_3 = arith.constant 0 : index
    %c0_4 = arith.constant 0 : index
    %3 = vector.load %arg3[%c0_3, %c0_4] : memref<1x4xf32, #tpu.memory_space<vmem>>, vector<1x4xf32>
    %4 = vector.broadcast %3 : vector<1x4xf32> to vector<512x4xf32>
    %5 = arith.addf %2, %4 : vector<512x4xf32>
    %cst_5 = arith.constant 0.000000e+00 : f32
    %6 = vector.broadcast %cst_5 : f32 to vector<512x4xf32>
    %7 = arith.maximumf %5, %6 : vector<512x4xf32>
    %c0_6 = arith.constant 0 : index
    %c0_7 = arith.constant 0 : index
    %8 = vector.load %arg4[%c0_6, %c0_7] : memref<512x4xf32, #tpu.memory_space<vmem>>, vector<512x4xf32>
    tpu.vector_store %arg4[%c0_6, %c0_7], %7 {strides = array<i32>} : memref<512x4xf32, #tpu.memory_space<vmem>>, vector<512x4xf32>,
    return
  }
  func.func @transform_0(%arg0: i32) -> (i32, i32) {
    %c0_i32 = arith.constant 0 : i32
    %c0_i32_0 = arith.constant 0 : i32
    return %arg0, %c0_i32 : i32, i32
  }
  func.func @transform_1(%arg0: i32) -> (i32, i32) {
    %c0_i32 = arith.constant 0 : i32
    %c0_i32_0 = arith.constant 0 : i32
    %c0_i32_1 = arith.constant 0 : i32
    return %c0_i32, %c0_i32_0 : i32, i32
  }
  func.func @transform_2(%arg0: i32) -> (i32, i32) {
    %c0_i32 = arith.constant 0 : i32
    %c0_i32_0 = arith.constant 0 : i32
    %c0_i32_1 = arith.constant 0 : i32
    return %c0_i32, %c0_i32_0 : i32, i32
  }
  func.func @transform_3(%arg0: i32) -> (i32, i32) {
    %c0_i32 = arith.constant 0 : i32
    %c0_i32_0 = arith.constant 0 : i32
    return %arg0, %c0_i32 : i32, i32
  }
}

module attributes {stable_mosaic.version = 11 : i64} {
  func.func @_matmul_bias_act_kernel(%arg0: i32, %arg1: memref<512x16xbf16, #tpu.memory_space<vmem>>, %arg2: memref<16x3xbf16, #tpu.memory_space<vmem>>, %arg3: memref<1x3xf32, #tpu.memory_space<vmem>>, %arg4: memref<512x3xf32, #tpu.memory_space<vmem>>) attributes {dimension_semantics = [#tpu.dimension_semantics<parallel>], iteration_bounds = array<i64: 4>, scalar_prefetch = 0 : i64, scratch_operands = 0 : i64, tpu.core_type = #tpu.core_type<tc>, window_params = [{transform_indices = @transform_0, window_bounds = array<i64: 512, 16>}, {pipeline_mode = #tpu.pipeline_mode<synchronous>, transform_indices = @transform_1, window_bounds = array<i64: 16, 3>}, {pipeline_mode = #tpu.pipeline_mode<synchronous>, transform_indices = @transform_2, window_bounds = array<i64: 1, 3>}, {transform_indices = @transform_3, window_bounds = array<i64: 512, 3>}]} {
    %c0 = arith.constant 0 : index
    %c0_0 = arith.constant 0 : index
    %0 = vector.load %arg1[%c0, %c0_0] : memref<512x16xbf16, #tpu.memory_space<vmem>>, vector<512x16xbf16>
    %c0_1 = arith.constant 0 : index
    %c0_2 = arith.constant 0 : index
    %1 = vector.load %arg2[%c0_1, %c0_2] : memref<16x3xbf16, #tpu.memory_space<vmem>>, vector<16x3xbf16>
    %cst = arith.constant dense<0.000000e+00> : vector<512x3xf32>
    %2 = tpu.matmul %0, %1, %cst {dimension_numbers = #tpu.dot_dimension_numbers<[1], [0], [0], [1], [0, 0, 1, 1], [], []>} : vector<512x16xbf16>, vector<16x3xbf16>, vector<512x3xf32> -> vector<512x3xf32>
    %c0_3 = arith.constant 0 : index
    %c0_4 = arith.constant 0 : index
    %3 = vector.load %arg3[%c0_3, %c0_4] : memref<1x3xf32, #tpu.memory_space<vmem>>, vector<1x3xf32>
    %4 = vector.broadcast %3 : vector<1x3xf32> to vector<512x3xf32>
    %5 = arith.addf %2, %4 : vector<512x3xf32>
    %cst_5 = arith.constant 0.000000e+00 : f32
    %6 = vector.broadcast %cst_5 : f32 to vector<512x3xf32>
    %7 = arith.subf %6, %5 : vector<512x3xf32>
    %8 = math.exp %7 : vector<512x3xf32>
    %cst_6 = arith.constant 1.000000e+00 : f32
    %9 = vector.broadcast %cst_6 : f32 to vector<512x3xf32>
    %10 = arith.addf %9, %8 : vector<512x3xf32>
    %11 = tpu.reciprocal %10 {approx = true} : vector<512x3xf32> -> vector<512x3xf32>
    %c0_7 = arith.constant 0 : index
    %c0_8 = arith.constant 0 : index
    %12 = vector.load %arg4[%c0_7, %c0_8] : memref<512x3xf32, #tpu.memory_space<vmem>>, vector<512x3xf32>
    tpu.vector_store %arg4[%c0_7, %c0_8], %11 {strides = array<i32>} : memref<512x3xf32, #tpu.memory_space<vmem>>, vector<512x3xf32>,
    return
  }
  func.func @transform_0(%arg0: i32) -> (i32, i32) {
    %c0_i32 = arith.constant 0 : i32
    %c0_i32_0 = arith.constant 0 : i32
    return %arg0, %c0_i32 : i32, i32
  }
  func.func @transform_1(%arg0: i32) -> (i32, i32) {
    %c0_i32 = arith.constant 0 : i32
    %c0_i32_0 = arith.constant 0 : i32
    %c0_i32_1 = arith.constant 0 : i32
    return %c0_i32, %c0_i32_0 : i32, i32
  }
  func.func @transform_2(%arg0: i32) -> (i32, i32) {
    %c0_i32 = arith.constant 0 : i32
    %c0_i32_0 = arith.constant 0 : i32
    %c0_i32_1 = arith.constant 0 : i32
    return %c0_i32, %c0_i32_0 : i32, i32
  }
  func.func @transform_3(%arg0: i32) -> (i32, i32) {
    %c0_i32 = arith.constant 0 : i32
    %c0_i32_0 = arith.constant 0 : i32
    return %arg0, %c0_i32 : i32, i32
  }
}

</mosaic_0001>

<llo_original>
// kernel: autoencoder_forward.25
$region0: #{autoencoder_forward.25}
  #allocation0 [shape = 'u32[]', space=smem, size = 0x4, offset = 0x4, fixed_abs, tag = 'smem constant byte address 0x4 - core index']
  #allocation1 [shape = 'u32[144,128]{1,0:T(1,128)}', space=vmem, size = 0x12000, scoped, tag = 'internal scratch']
  %s0 = inlined_call_operand.vmem [shape: bf16[2048,48], index: 0, kind: input, shape index: {}]
  %s1 = inlined_call_operand.vmem [shape: bf16[48,4], index: 1, kind: input, shape index: {}]
  %s2 = inlined_call_operand.hbm [shape: f32[1,4], index: 2, kind: input, shape index: {}]
  %s3 = inlined_call_operand.vmem [shape: f32[2048,4], index: 3, kind: output, shape index: {}]
  %s4 = sld [smem:[#allocation0]]
  $region49: #{autoencoder_forward.25} parent=0
    _
  %s6 = ssub.s32 1, %s4
  %s7 = scalar_select 0, %s6, %s4
  $region1: #{autoencoder_forward.25} parent=0
    #allocation2 [shape = 'u8[512]{0}', space=vmem, size = 0x400, scoped, tag = 'input window, operand 2, single buffered']
    #allocation3 [shape = 's32[2]{0}', space=sflag, size = 0x8, scoped, tag = 'scoped memory for autoencoder_forward.25']
    %8 = vsyncpa [#allocation3], 0
    loop: start=0, step=1, limit=6
    $region2: #{autoencoder_forward.25} parent=1 // loop_pre_header
      _
    $region3: #{autoencoder_forward.25} parent=1 // loop_header
      %s10 = sphi 0, %s14
      %p11 = scmp.ge.s32.totalorder %s10, 6
      %s20 = sphi 0, %s22
      %s23 = sphi 0, %s20
      %s24 = sphi 0, %s23
      %s40 = sphi 0, %s24
      %s44 = sphi 0, %s44
      %s46 = sphi 0, %s44
      %s47 = sphi 0, %s46
      %s61 = sphi 0, %s47
      %s65 = sphi 0, %s65
      %s67 = sphi 0, %s65
      %s68 = sphi 0, %s67
      %s82 = sphi 0, %s68
      %s88 = sphi 0, %s90
      %s91 = sphi 0, %s88
      %s92 = sphi 0, %s91
      %s108 = sphi 0, %s92
    $region4: #{autoencoder_forward.25} parent=1 // loop_header_branch
      %13 = sbr.rel (%p11) target = $region8
    $region5: #{autoencoder_forward.25} parent=1 // loop_body
      %s15 = ssub.s32 %s10, 1
      %s16 = ssub.s32 %s10, 2
      %s17 = sadd.s32 %s10, 1
      %s18 = ssub.s32 %s10, %s17
      %p19 = scmp.eq.s32.totalorder %s18, 0
      %s21 = sadd.s32 %s20, 1
      %s22 = scalar_select %p19, %s20, %s21
      %p25 = pneg %p19
      %p26 = scmp.eq.s32.totalorder %s10, 3
      %p27 = por %p25, %p26
      %p28 = scmp.ne.s32.totalorder %s20, %s23
      %p29 = scmp.eq.s32.totalorder %s10, 0
      %p30 = por %p28, %p29
      %p31 = scmp.ne.s32.totalorder %s20, %s23
      %p32 = scmp.eq.s32.totalorder %s15, 3
      %p33 = por %p31, %p32
      %p34 = scmp.ne.s32.totalorder %s23, %s24
      %p35 = scmp.eq.s32.totalorder %s15, 0
      %p36 = por %p34, %p35
      %p37 = scmp.ne.s32.totalorder %s23, %s24
      %p38 = scmp.eq.s32.totalorder %s16, 3
      %p39 = por %p37, %p38
      %p41 = scmp.ne.s32.totalorder %s24, %s40
      %p42 = scmp.eq.s32.totalorder %s16, 0
      %p43 = por %p41, %p42
      %s45 = sadd.s32 %s44, 1
      %p48 = scmp.eq.s32.totalorder %s10, 3
      %p49 = scmp.ne.s32.totalorder %s44, %s46
      %p50 = scmp.eq.s32.totalorder %s10, 0
      %p51 = por %p49, %p50
      %p52 = scmp.ne.s32.totalorder %s44, %s46
      %p53 = scmp.eq.s32.totalorder %s15, 3
      %p54 = por %p52, %p53
      %p55 = scmp.ne.s32.totalorder %s46, %s47
      %p56 = scmp.eq.s32.totalorder %s15, 0
      %p57 = por %p55, %p56
      %p58 = scmp.ne.s32.totalorder %s46, %s47
      %p59 = scmp.eq.s32.totalorder %s16, 3
      %p60 = por %p58, %p59
      %p62 = scmp.ne.s32.totalorder %s47, %s61
      %p63 = scmp.eq.s32.totalorder %s16, 0
      %p64 = por %p62, %p63
      %s66 = sadd.s32 %s65, 1
      %p69 = scmp.eq.s32.totalorder %s10, 3
      %p70 = scmp.ne.s32.totalorder %s65, %s67
      %p71 = scmp.eq.s32.totalorder %s10, 0
      %p72 = por %p70, %p71
      %p73 = scmp.ne.s32.totalorder %s65, %s67
      %p74 = scmp.eq.s32.totalorder %s15, 3
      %p75 = por %p73, %p74
      %p76 = scmp.ne.s32.totalorder %s67, %s68
      %p77 = scmp.eq.s32.totalorder %s15, 0
      %p78 = por %p76, %p77
      %p79 = scmp.ne.s32.totalorder %s67, %s68
      %p80 = scmp.eq.s32.totalorder %s16, 3
      %p81 = por %p79, %p80
      %p83 = scmp.ne.s32.totalorder %s68, %s82
      %p84 = scmp.eq.s32.totalorder %s16, 0
      %p85 = por %p83, %p84
      %s86 = ssub.s32 %s10, %s17
      %p87 = scmp.eq.s32.totalorder %s86, 0
      %s89 = sadd.s32 %s88, 1
      %s90 = scalar_select %p87, %s88, %s89
      %p93 = pneg %p87
      %p94 = scmp.eq.s32.totalorder %s10, 3
      %p95 = por %p93, %p94
      %p96 = scmp.ne.s32.totalorder %s88, %s91
      %p97 = scmp.eq.s32.totalorder %s10, 0
      %p98 = por %p96, %p97
      %p99 = scmp.ne.s32.totalorder %s88, %s91
      %p100 = scmp.eq.s32.totalorder %s15, 3
      %p101 = por %p99, %p100
      %p102 = scmp.ne.s32.totalorder %s91, %s92
      %p103 = scmp.eq.s32.totalorder %s15, 0
      %p104 = por %p102, %p103
      %p105 = scmp.ne.s32.totalorder %s91, %s92
      %p106 = scmp.eq.s32.totalorder %s16, 3
      %p107 = por %p105, %p106
      %p109 = scmp.ne.s32.totalorder %s92, %s108
      %p110 = scmp.eq.s32.totalorder %s16, 0
      %p111 = por %p109, %p110
      %p112 = scmp.le.s32.totalorder 1, %s10
      %p113 = scmp.lt.s32.totalorder %s10, 5
      %p114 = pnand %p112, %p113
      %p115 = pneg %p114
      // Predicated region
      $region9: #{autoencoder_forward.25} parent=5 // pred_check
        _
      $region10: #{autoencoder_forward.25} parent=5 // pred_check_branch
        %117 = sbr.rel (%p114) target = $region12
      $region11: #{autoencoder_forward.25} parent=5 // pred_region
        %s118 = ssub.s32 %s10, 1
        // Predicated region
        $region13: #{autoencoder_forward.25} parent=11 // pred_check
          %p119 = pneg %p57
        $region14: #{autoencoder_forward.25} parent=11 // pred_check_branch
          %121 = sbr.rel (%p119) target = $region16
        $region15: #{autoencoder_forward.25} parent=11 // pred_region
          _
        $region16: #{autoencoder_forward.25} parent=11 // pred_fallthru
          _
        // Predicated region
        $region17: #{autoencoder_forward.25} parent=11 // pred_check
          %p122 = pneg %p78
        $region18: #{autoencoder_forward.25} parent=11 // pred_check_branch
          %124 = sbr.rel (%p122) target = $region20
        $region19: #{autoencoder_forward.25} parent=11 // pred_region
          %s126 = ssub.s32 16, 16
          %127 = vsyncadd [#allocation3], %s126
          %s129 = sshll.u32 [#allocation2], 4
          %s130 = int_to_ptr.vmem [resolvable:$true] %s129
          %132 = dma.hbm_to_vmem [thread:$0]  %s2, 16, %s130, [#allocation3]
        $region20: #{autoencoder_forward.25} parent=11 // pred_fallthru
          _
      $region12: #{autoencoder_forward.25} parent=5 // pred_fallthru
        _
      %p133 = scmp.lt.s32.totalorder %s10, 4
      // Predicated region
      $region21: #{autoencoder_forward.25} parent=5 // pred_check
        %p134 = pneg %p133
      $region22: #{autoencoder_forward.25} parent=5 // pred_check_branch
        %136 = sbr.rel (%p134) target = $region24
      $region23: #{autoencoder_forward.25} parent=5 // pred_region
        // Predicated region
        $region25: #{autoencoder_forward.25} parent=23 // pred_check
          %p137 = pneg %p30
        $region26: #{autoencoder_forward.25} parent=23 // pred_check_branch
          %139 = sbr.rel (%p137) target = $region28
        $region27: #{autoencoder_forward.25} parent=23 // pred_region
          %s140 = smul.u32 64, %s10
          %p141 = scmp.lt.s32.totalorder %s140, 255
          %s142 = scalar_select %p141, %s140, 255
          %s143 = smul.addr %s142, 4
          %s144 = scalar_lea.vmem %s0, %s143
          %s145 = smul.u32 64, %s10
        $region28: #{autoencoder_forward.25} parent=23 // pred_fallthru
          _
      $region24: #{autoencoder_forward.25} parent=5 // pred_fallthru
        _
      %p146 = scmp.le.s32.totalorder 1, %s10
      %p147 = scmp.lt.s32.totalorder %s10, 5
      %p148 = pnand %p146, %p147
      %p149 = pneg %p148
      // Predicated region
      $region29: #{autoencoder_forward.25} parent=5 // pred_check
        _
      $region30: #{autoencoder_forward.25} parent=5 // pred_check_branch
        %151 = sbr.rel (%p148) target = $region32
      $region31: #{autoencoder_forward.25} parent=5 // pred_region
        %s152 = ssub.s32 %s10, 1
        // Predicated region
        $region33: #{autoencoder_forward.25} parent=31 // pred_check
          %p153 = pneg %p78
        $region34: #{autoencoder_forward.25} parent=31 // pred_check_branch
          %155 = sbr.rel (%p153) target = $region36
        $region35: #{autoencoder_forward.25} parent=31 // pred_region
          %156 = dma.done [#allocation3], 16
        $region36: #{autoencoder_forward.25} parent=31 // pred_fallthru
          _
        %s157 = smul.u32 64, %s15
        %p158 = scmp.lt.s32.totalorder %s157, 255
        %s159 = scalar_select %p158, %s157, 255
        %s160 = smul.addr %s159, 4
        %s161 = scalar_lea.vmem %s0, %s160
        %p162 = pneg %p36
        %p163 = pneg %p33
        %p164 = pneg %p57
        %p165 = pneg %p54
        %p166 = pneg %p78
        %p167 = pneg %p75
        %p168 = pneg %p104
        %p169 = pneg %p101
        %s170 = smul.u32 64, %s15
        %p171 = scmp.lt.s32.totalorder %s170, 255
        %s172 = scalar_select %p171, %s170, 255
        %s173 = smul.addr %s172, 8
        %s174 = scalar_lea.vmem %s3, %s173
        %s175 = smul.u32 64, %s15
        %p176 = scmp.lt.s32.totalorder %s175, 255
        %s177 = scalar_select %p176, %s175, 255
        %s178 = smul.addr %s177, 4
        %s179 = scalar_lea.vmem %s0, %s178
        %s180 = smul.u32 64, %s15
        %s181 = smul.u32 64, %s15
        %p182 = scmp.lt.s32.totalorder %s181, 255
        %s183 = scalar_select %p182, %s181, 255
        %s184 = smul.addr %s183, 8
        %s185 = scalar_lea.vmem %s3, %s184
        %s186 = smul.u32 64, %s15
        %v188 = vld [vmem:[%s179] sm:$0xf]
        %v189 = vld [vmem:[%s179 + $0x4] sm:$0xf]
        %v190 = vld [vmem:[%s179 + $0x8] sm:$0xf]
        %v191 = vld [vmem:[%s179 + $0xc] sm:$0xf]
        %v192 = vld [vmem:[%s179 + $0x10] sm:$0xf]
        %v193 = vld [vmem:[%s179 + $0x14] sm:$0xf]
        %v194 = vld [vmem:[%s179 + $0x18] sm:$0xf]
        %v195 = vld [vmem:[%s179 + $0x1c] sm:$0xf]
        %v196 = vld [vmem:[%s179 + $0x20] sm:$0xf]
        %v197 = vld [vmem:[%s179 + $0x24] sm:$0xf]
        %v198 = vld [vmem:[%s179 + $0x28] sm:$0xf]
        %v199 = vld [vmem:[%s179 + $0x2c] sm:$0xf]
        %v200 = vld [vmem:[%s179 + $0x30] sm:$0xf]
        %v201 = vld [vmem:[%s179 + $0x34] sm:$0xf]
        %v202 = vld [vmem:[%s179 + $0x38] sm:$0xf]
        %v203 = vld [vmem:[%s179 + $0x3c] sm:$0xf]
        %v204 = vld [vmem:[%s179 + $0x40] sm:$0xf]
        %v205 = vld [vmem:[%s179 + $0x44] sm:$0xf]
        %v206 = vld [vmem:[%s179 + $0x48] sm:$0xf]
        %v207 = vld [vmem:[%s179 + $0x4c] sm:$0xf]
        %v208 = vld [vmem:[%s179 + $0x50] sm:$0xf]
        %v209 = vld [vmem:[%s179 + $0x54] sm:$0xf]
        %v210 = vld [vmem:[%s179 + $0x58] sm:$0xf]
        %v211 = vld [vmem:[%s179 + $0x5c] sm:$0xf]
        %v212 = vld [vmem:[%s179 + $0x60] sm:$0xf]
        %v213 = vld [vmem:[%s179 + $0x64] sm:$0xf]
        %v214 = vld [vmem:[%s179 + $0x68] sm:$0xf]
        %v215 = vld [vmem:[%s179 + $0x6c] sm:$0xf]
        %v216 = vld [vmem:[%s179 + $0x70] sm:$0xf]
        %v217 = vld [vmem:[%s179 + $0x74] sm:$0xf]
        %v218 = vld [vmem:[%s179 + $0x78] sm:$0xf]
        %v219 = vld [vmem:[%s179 + $0x7c] sm:$0xf]
        %v220 = vld [vmem:[%s179 + $0x80] sm:$0xf]
        %v221 = vld [vmem:[%s179 + $0x84] sm:$0xf]
        %v222 = vld [vmem:[%s179 + $0x88] sm:$0xf]
        %v223 = vld [vmem:[%s179 + $0x8c] sm:$0xf]
        %v224 = vld [vmem:[%s179 + $0x90] sm:$0xf]
        %v225 = vld [vmem:[%s179 + $0x94] sm:$0xf]
        %v226 = vld [vmem:[%s179 + $0x98] sm:$0xf]
        %v227 = vld [vmem:[%s179 + $0x9c] sm:$0xf]
        %v228 = vld [vmem:[%s179 + $0xa0] sm:$0xf]
        %v229 = vld [vmem:[%s179 + $0xa4] sm:$0xf]
        %v230 = vld [vmem:[%s179 + $0xa8] sm:$0xf]
        %v231 = vld [vmem:[%s179 + $0xac] sm:$0xf]
        %v232 = vld [vmem:[%s179 + $0xb0] sm:$0xf]
        %v233 = vld [vmem:[%s179 + $0xb4] sm:$0xf]
        %v234 = vld [vmem:[%s179 + $0xb8] sm:$0xf]
        %v235 = vld [vmem:[%s179 + $0xbc] sm:$0xf]
        %v236 = vld [vmem:[%s179 + $0xc0] sm:$0xf]
        %v237 = vld [vmem:[%s179 + $0xc4] sm:$0xf]
        %v238 = vld [vmem:[%s179 + $0xc8] sm:$0xf]
        %v239 = vld [vmem:[%s179 + $0xcc] sm:$0xf]
        %v240 = vld [vmem:[%s179 + $0xd0] sm:$0xf]
        %v241 = vld [vmem:[%s179 + $0xd4] sm:$0xf]
        %v242 = vld [vmem:[%s179 + $0xd8] sm:$0xf]
        %v243 = vld [vmem:[%s179 + $0xdc] sm:$0xf]
        %v244 = vld [vmem:[%s179 + $0xe0] sm:$0xf]
        %v245 = vld [vmem:[%s179 + $0xe4] sm:$0xf]
        %v246 = vld [vmem:[%s179 + $0xe8] sm:$0xf]
        %v247 = vld [vmem:[%s179 + $0xec] sm:$0xf]
        %v248 = vld [vmem:[%s179 + $0xf0] sm:$0xf]
        %v249 = vld [vmem:[%s179 + $0xf4] sm:$0xf]
        %v250 = vld [vmem:[%s179 + $0xf8] sm:$0xf]
        %v251 = vld [vmem:[%s179 + $0xfc] sm:$0xf]
        %v252 = vld [vmem:[%s1] sm:$0xf]
        %v253 = vld [vmem:[%s1 + $0x4] sm:$0xf]
        %v254 = vld [vmem:[%s1 + $0x8] sm:$0xf]
        %v255 = vld [vmem:[%s1 + $0xc] sm:$0xf]
        %v256 = vld [vmem:[%s1 + $0x10] sm:$0xf]
        %v257 = vld [vmem:[%s1 + $0x14] sm:$0xf]
        %v258 = vld [vmem:[#allocation2] sm:$0x1]
        %v260 = vlaneseq
        %v261 = vshrl.u32 %v260, 7
        %v262 = vsub.s32 0, %v261
        %v263 = vrot.slane %v258, %v262
        %v329 = vunpack.c.l.b16 %v188
        %v330 = vunpack.c.l.b16 %v189
        %v331 = vunpack.c.l.b16 %v190
        %v332 = vunpack.c.l.b16 %v191
        %v333 = vunpack.c.l.b16 %v192
        %v334 = vunpack.c.l.b16 %v193
        %v335 = vunpack.c.l.b16 %v194
        %v336 = vunpack.c.l.b16 %v195
        %v337 = vunpack.c.l.b16 %v196
        %v338 = vunpack.c.l.b16 %v197
        %v339 = vunpack.c.l.b16 %v198
        %v340 = vunpack.c.l.b16 %v199
        %v341 = vunpack.c.l.b16 %v200
        %v342 = vunpack.c.l.b16 %v201
        %v343 = vunpack.c.l.b16 %v202
        %v344 = vunpack.c.l.b16 %v203
        %v345 = vunpack.c.l.b16 %v204
        %v346 = vunpack.c.l.b16 %v205
        %v347 = vunpack.c.l.b16 %v206
        %v348 = vunpack.c.l.b16 %v207
        %v349 = vunpack.c.l.b16 %v208
        %v350 = vunpack.c.l.b16 %v209
        %v351 = vunpack.c.l.b16 %v210
        %v352 = vunpack.c.l.b16 %v211
        %v353 = vunpack.c.l.b16 %v212
        %v354 = vunpack.c.l.b16 %v213
        %v355 = vunpack.c.l.b16 %v214
        %v356 = vunpack.c.l.b16 %v215
        %v357 = vunpack.c.l.b16 %v216
        %v358 = vunpack.c.l.b16 %v217
        %v359 = vunpack.c.l.b16 %v218
        %v360 = vunpack.c.l.b16 %v219
        %v361 = vunpack.c.l.b16 %v220
        %v362 = vunpack.c.l.b16 %v221
        %v363 = vunpack.c.l.b16 %v222
        %v364 = vunpack.c.l.b16 %v223
        %v365 = vunpack.c.l.b16 %v224
        %v366 = vunpack.c.l.b16 %v225
        %v367 = vunpack.c.l.b16 %v226
        %v368 = vunpack.c.l.b16 %v227
        %v369 = vunpack.c.l.b16 %v228
        %v370 = vunpack.c.l.b16 %v229
        %v371 = vunpack.c.l.b16 %v230
        %v372 = vunpack.c.l.b16 %v231
        %v373 = vunpack.c.l.b16 %v232
        %v374 = vunpack.c.l.b16 %v233
        %v375 = vunpack.c.l.b16 %v234
        %v376 = vunpack.c.l.b16 %v235
        %v377 = vunpack.c.l.b16 %v236
        %v378 = vunpack.c.l.b16 %v237
        %v379 = vunpack.c.l.b16 %v238
        %v380 = vunpack.c.l.b16 %v239
        %v381 = vunpack.c.l.b16 %v240
        %v382 = vunpack.c.l.b16 %v241
        %v383 = vunpack.c.l.b16 %v242
        %v384 = vunpack.c.l.b16 %v243
        %v385 = vunpack.c.l.b16 %v244
        %v386 = vunpack.c.l.b16 %v245
        %v387 = vunpack.c.l.b16 %v246
        %v388 = vunpack.c.l.b16 %v247
        %v389 = vunpack.c.l.b16 %v248
        %v390 = vunpack.c.l.b16 %v249
        %v391 = vunpack.c.l.b16 %v250
        %v392 = vunpack.c.l.b16 %v251
        %v393 = vpack.c.b16 %v330, %v329
        %v394 = vpack.c.b16 %v332, %v331
        %v395 = vpack.c.b16 %v334, %v333
        %v396 = vpack.c.b16 %v336, %v335
        %v397 = vpack.c.b16 %v338, %v337
        %v398 = vpack.c.b16 %v340, %v339
        %v399 = vpack.c.b16 %v342, %v341
        %v400 = vpack.c.b16 %v344, %v343
        %v401 = vpack.c.b16 %v346, %v345
        %v402 = vpack.c.b16 %v348, %v347
        %v403 = vpack.c.b16 %v350, %v349
        %v404 = vpack.c.b16 %v352, %v351
        %v405 = vpack.c.b16 %v354, %v353
        %v406 = vpack.c.b16 %v356, %v355
        %v407 = vpack.c.b16 %v358, %v357
        %v408 = vpack.c.b16 %v360, %v359
        %v409 = vpack.c.b16 %v362, %v361
        %v410 = vpack.c.b16 %v364, %v363
        %v411 = vpack.c.b16 %v366, %v365
        %v412 = vpack.c.b16 %v368, %v367
        %v413 = vpack.c.b16 %v370, %v369
        %v414 = vpack.c.b16 %v372, %v371
        %v415 = vpack.c.b16 %v374, %v373
        %v416 = vpack.c.b16 %v376, %v375
        %v417 = vpack.c.b16 %v378, %v377
        %v418 = vpack.c.b16 %v380, %v379
        %v419 = vpack.c.b16 %v382, %v381
        %v420 = vpack.c.b16 %v384, %v383
        %v421 = vpack.c.b16 %v386, %v385
        %v422 = vpack.c.b16 %v388, %v387
        %v423 = vpack.c.b16 %v390, %v389
        %v424 = vpack.c.b16 %v392, %v391
        %v431 = vunpack.c.l.b16 %v252
        %v432 = vunpack.c.l.b16 %v253
        %v433 = vunpack.c.l.b16 %v254
        %v434 = vunpack.c.l.b16 %v255
        %v435 = vunpack.c.l.b16 %v256
        %v436 = vunpack.c.l.b16 %v257
        %v437 = vpack.c.b16 %v432, %v431
        %v438 = vpack.c.b16 %v434, %v433
        %v439 = vpack.c.b16 %v436, %v435
        %vm443 = vcmask 392192
        %v445 = vsel %vm443, %v393, 0
        %v448 = vsel %vm443, %v394, 0
        %v451 = vsel %vm443, %v395, 0
        %v454 = vsel %vm443, %v396, 0
        %v457 = vsel %vm443, %v397, 0
        %v460 = vsel %vm443, %v398, 0
        %v463 = vsel %vm443, %v399, 0
        %v466 = vsel %vm443, %v400, 0
        %v469 = vsel %vm443, %v401, 0
        %v472 = vsel %vm443, %v402, 0
        %v475 = vsel %vm443, %v403, 0
        %v478 = vsel %vm443, %v404, 0
        %v481 = vsel %vm443, %v405, 0
        %v484 = vsel %vm443, %v406, 0
        %v487 = vsel %vm443, %v407, 0
        %v490 = vsel %vm443, %v408, 0
        %v493 = vsel %vm443, %v409, 0
        %v496 = vsel %vm443, %v410, 0
        %v499 = vsel %vm443, %v411, 0
        %v502 = vsel %vm443, %v412, 0
        %v505 = vsel %vm443, %v413, 0
        %v508 = vsel %vm443, %v414, 0
        %v511 = vsel %vm443, %v415, 0
        %v514 = vsel %vm443, %v416, 0
        %v517 = vsel %vm443, %v417, 0
        %v520 = vsel %vm443, %v418, 0
        %v523 = vsel %vm443, %v419, 0
        %v526 = vsel %vm443, %v420, 0
        %v529 = vsel %vm443, %v421, 0
        %v532 = vsel %vm443, %v422, 0
        %v535 = vsel %vm443, %v423, 0
        %v538 = vsel %vm443, %v424, 0
        %540 = vmatprep.subr.bf16.mxu0 0
        %541 = vmatpush1.bf16.msra.mxu0 %v437
        %542 = vmatprep.subr.bf16.mxu0 0
        %543 = vmatpush1.bf16.msra.mxu0 %v438
        %544 = vmatprep.subr.bf16.mxu0 0
        %545 = vmatpush1.bf16.msra.mxu0 %v439
        %546 = vmatprep.subr.bf16.mxu0 0
        %547 = vmatpush1.bf16.msra.mxu0 0
        %548 = vmatprep.subr.bf16.mxu0 0
        %549 = vmatpush1.bf16.msra.mxu0 0
        %550 = vmatprep.subr.bf16.mxu0 0
        %551 = vmatpush1.bf16.msra.mxu0 0
        %552 = vmatprep.subr.bf16.mxu0 0
        %553 = vmatpush1.bf16.msra.mxu0 0
        %554 = vmatprep.subr.bf16.mxu0 0
        %555 = vmatpush1.bf16.msra.mxu0 0
        %556 = vmatprep.subr.bf16.mxu0 0
        %557 = vmatpush1.bf16.msra.mxu0 0
        %558 = vmatprep.subr.bf16.mxu0 0
        %559 = vmatpush1.bf16.msra.mxu0 0
        %560 = vmatprep.subr.bf16.mxu0 0
        %561 = vmatpush1.bf16.msra.mxu0 0
        %562 = vmatprep.subr.bf16.mxu0 0
        %563 = vmatpush1.bf16.msra.mxu0 0
        %564 = vmatprep.subr.bf16.mxu0 0
        %565 = vmatpush1.bf16.msra.mxu0 0
        %566 = vmatprep.subr.bf16.mxu0 0
        %567 = vmatpush1.bf16.msra.mxu0 0
        %568 = vmatprep.subr.bf16.mxu0 0
        %569 = vmatpush1.bf16.msra.mxu0 0
        %570 = vmatprep.subr.bf16.mxu0 0
        %571 = vmatpush1.bf16.msra.mxu0 0
        %572 = vmatprep.mubr.bf16.mxu0 0
        %573 = vmatmul.mubr.bf16.gmra.mrb[0].mxu0 %v445
        %v574 = vpop.f32.mrb[0].mxu0
        %v575 = vadd.f32 %v263, %v574
        %v576 = vpop.f32.mrb[0].mxu0
        %v577 = vpop.f32.mrb[0].mxu0
        %v578 = vadd.f32 %v263, %v577
        %v579 = vpop.f32.mrb[0].mxu0
        %580 = vmatprep.mubr.bf16.mxu0 0
        %581 = vmatmul.mubr.bf16.gmra.mrb[0].mxu0 %v448
        %v582 = vpop.f32.mrb[0].mxu0
        %v583 = vadd.f32 %v263, %v582
        %v584 = vpop.f32.mrb[0].mxu0
        %v585 = vpop.f32.mrb[0].mxu0
        %v586 = vadd.f32 %v263, %v585
        %v587 = vpop.f32.mrb[0].mxu0
        %588 = vmatprep.mubr.bf16.mxu0 0
        %589 = vmatmul.mubr.bf16.gmra.mrb[0].mxu0 %v451
        %v590 = vpop.f32.mrb[0].mxu0
        %v591 = vadd.f32 %v263, %v590
        %v592 = vpop.f32.mrb[0].mxu0
        %v593 = vpop.f32.mrb[0].mxu0
        %v594 = vadd.f32 %v263, %v593
        %v595 = vpop.f32.mrb[0].mxu0
        %596 = vmatprep.mubr.bf16.mxu0 0
        %597 = vmatmul.mubr.bf16.gmra.mrb[0].mxu0 %v454
        %v598 = vpop.f32.mrb[0].mxu0
        %v599 = vadd.f32 %v263, %v598
        %v600 = vpop.f32.mrb[0].mxu0
        %v601 = vpop.f32.mrb[0].mxu0
        %v602 = vadd.f32 %v263, %v601
        %v603 = vpop.f32.mrb[0].mxu0
        %604 = vmatprep.mubr.bf16.mxu0 0
        %605 = vmatmul.mubr.bf16.gmra.mrb[0].mxu0 %v457
        %v606 = vpop.f32.mrb[0].mxu0
        %v607 = vadd.f32 %v263, %v606
        %v608 = vpop.f32.mrb[0].mxu0
        %v609 = vpop.f32.mrb[0].mxu0
        %v610 = vadd.f32 %v263, %v609
        %v611 = vpop.f32.mrb[0].mxu0
        %612 = vmatprep.mubr.bf16.mxu0 0
        %613 = vmatmul.mubr.bf16.gmra.mrb[0].mxu0 %v460
        %v614 = vpop.f32.mrb[0].mxu0
        %v615 = vadd.f32 %v263, %v614
        %v616 = vpop.f32.mrb[0].mxu0
        %v617 = vpop.f32.mrb[0].mxu0
        %v618 = vadd.f32 %v263, %v617
        %v619 = vpop.f32.mrb[0].mxu0
        %620 = vmatprep.mubr.bf16.mxu0 0
        %621 = vmatmul.mubr.bf16.gmra.mrb[0].mxu0 %v463
        %v622 = vpop.f32.mrb[0].mxu0
        %v623 = vadd.f32 %v263, %v622
        %v624 = vpop.f32.mrb[0].mxu0
        %v625 = vpop.f32.mrb[0].mxu0
        %v626 = vadd.f32 %v263, %v625
        %v627 = vpop.f32.mrb[0].mxu0
        %628 = vmatprep.mubr.bf16.mxu0 0
        %629 = vmatmul.mubr.bf16.gmra.mrb[0].mxu0 %v466
        %v630 = vpop.f32.mrb[0].mxu0
        %v631 = vadd.f32 %v263, %v630
        %v632 = vpop.f32.mrb[0].mxu0
        %v633 = vpop.f32.mrb[0].mxu0
        %v634 = vadd.f32 %v263, %v633
        %v635 = vpop.f32.mrb[0].mxu0
        %636 = vmatprep.mubr.bf16.mxu0 0
        %637 = vmatmul.mubr.bf16.gmra.mrb[0].mxu0 %v469
        %v638 = vpop.f32.mrb[0].mxu0
        %v639 = vadd.f32 %v263, %v638
        %v640 = vpop.f32.mrb[0].mxu0
        %v641 = vpop.f32.mrb[0].mxu0
        %v642 = vadd.f32 %v263, %v641
        %v643 = vpop.f32.mrb[0].mxu0
        %644 = vmatprep.mubr.bf16.mxu0 0
        %645 = vmatmul.mubr.bf16.gmra.mrb[0].mxu0 %v472
        %v646 = vpop.f32.mrb[0].mxu0
        %v647 = vadd.f32 %v263, %v646
        %v648 = vpop.f32.mrb[0].mxu0
        %v649 = vpop.f32.mrb[0].mxu0
        %v650 = vadd.f32 %v263, %v649
        %v651 = vpop.f32.mrb[0].mxu0
        %652 = vmatprep.mubr.bf16.mxu0 0
        %653 = vmatmul.mubr.bf16.gmra.mrb[0].mxu0 %v475
        %v654 = vpop.f32.mrb[0].mxu0
        %v655 = vadd.f32 %v263, %v654
        %v656 = vpop.f32.mrb[0].mxu0
        %v657 = vpop.f32.mrb[0].mxu0
        %v658 = vadd.f32 %v263, %v657
        %v659 = vpop.f32.mrb[0].mxu0
        %660 = vmatprep.mubr.bf16.mxu0 0
        %661 = vmatmul.mubr.bf16.gmra.mrb[0].mxu0 %v478
        %v662 = vpop.f32.mrb[0].mxu0
        %v663 = vadd.f32 %v263, %v662
        %v664 = vpop.f32.mrb[0].mxu0
        %v665 = vpop.f32.mrb[0].mxu0
        %v666 = vadd.f32 %v263, %v665
        %v667 = vpop.f32.mrb[0].mxu0
        %668 = vmatprep.mubr.bf16.mxu0 0
        %669 = vmatmul.mubr.bf16.gmra.mrb[0].mxu0 %v481
        %v670 = vpop.f32.mrb[0].mxu0
        %v671 = vadd.f32 %v263, %v670
        %v672 = vpop.f32.mrb[0].mxu0
        %v673 = vpop.f32.mrb[0].mxu0
        %v674 = vadd.f32 %v263, %v673
        %v675 = vpop.f32.mrb[0].mxu0
        %676 = vmatprep.mubr.bf16.mxu0 0
        %677 = vmatmul.mubr.bf16.gmra.mrb[0].mxu0 %v484
        %v678 = vpop.f32.mrb[0].mxu0
        %v679 = vadd.f32 %v263, %v678
        %v680 = vpop.f32.mrb[0].mxu0
        %v681 = vpop.f32.mrb[0].mxu0
        %v682 = vadd.f32 %v263, %v681
        %v683 = vpop.f32.mrb[0].mxu0
        %684 = vmatprep.mubr.bf16.mxu0 0
        %685 = vmatmul.mubr.bf16.gmra.mrb[0].mxu0 %v487
        %v686 = vpop.f32.mrb[0].mxu0
        %v687 = vadd.f32 %v263, %v686
        %v688 = vpop.f32.mrb[0].mxu0
        %v689 = vpop.f32.mrb[0].mxu0
        %v690 = vadd.f32 %v263, %v689
        %v691 = vpop.f32.mrb[0].mxu0
        %692 = vmatprep.mubr.bf16.mxu0 0
        %693 = vmatmul.mubr.bf16.gmra.mrb[0].mxu0 %v490
        %v694 = vpop.f32.mrb[0].mxu0
        %v695 = vadd.f32 %v263, %v694
        %v696 = vpop.f32.mrb[0].mxu0
        %v697 = vpop.f32.mrb[0].mxu0
        %v698 = vadd.f32 %v263, %v697
        %v699 = vpop.f32.mrb[0].mxu0
        %700 = vmatprep.mubr.bf16.mxu0 0
        %701 = vmatmul.mubr.bf16.gmra.mrb[0].mxu0 %v493
        %v702 = vpop.f32.mrb[0].mxu0
        %v703 = vadd.f32 %v263, %v702
        %v704 = vpop.f32.mrb[0].mxu0
        %v705 = vpop.f32.mrb[0].mxu0
        %v706 = vadd.f32 %v263, %v705
        %v707 = vpop.f32.mrb[0].mxu0
        %708 = vmatprep.mubr.bf16.mxu0 0
        %709 = vmatmul.mubr.bf16.gmra.mrb[0].mxu0 %v496
        %v710 = vpop.f32.mrb[0].mxu0
        %v711 = vadd.f32 %v263, %v710
        %v712 = vpop.f32.mrb[0].mxu0
        %v713 = vpop.f32.mrb[0].mxu0
        %v714 = vadd.f32 %v263, %v713
        %v715 = vpop.f32.mrb[0].mxu0
        %716 = vmatprep.mubr.bf16.mxu0 0
        %717 = vmatmul.mubr.bf16.gmra.mrb[0].mxu0 %v499
        %v718 = vpop.f32.mrb[0].mxu0
        %v719 = vadd.f32 %v263, %v718
        %v720 = vpop.f32.mrb[0].mxu0
        %v721 = vpop.f32.mrb[0].mxu0
        %v722 = vadd.f32 %v263, %v721
        %v723 = vpop.f32.mrb[0].mxu0
        %724 = vmatprep.mubr.bf16.mxu0 0
        %725 = vmatmul.mubr.bf16.gmra.mrb[0].mxu0 %v502
        %v726 = vpop.f32.mrb[0].mxu0
        %v727 = vadd.f32 %v263, %v726
        %v728 = vpop.f32.mrb[0].mxu0
        %v729 = vpop.f32.mrb[0].mxu0
        %v730 = vadd.f32 %v263, %v729
        %v731 = vpop.f32.mrb[0].mxu0
        %732 = vmatprep.mubr.bf16.mxu0 0
        %733 = vmatmul.mubr.bf16.gmra.mrb[0].mxu0 %v505
        %v734 = vpop.f32.mrb[0].mxu0
        %v735 = vadd.f32 %v263, %v734
        %v736 = vpop.f32.mrb[0].mxu0
        %v737 = vpop.f32.mrb[0].mxu0
        %v738 = vadd.f32 %v263, %v737
        %v739 = vpop.f32.mrb[0].mxu0
        %740 = vmatprep.mubr.bf16.mxu0 0
        %741 = vmatmul.mubr.bf16.gmra.mrb[0].mxu0 %v508
        %v742 = vpop.f32.mrb[0].mxu0
        %v743 = vadd.f32 %v263, %v742
        %v744 = vpop.f32.mrb[0].mxu0
        %v745 = vpop.f32.mrb[0].mxu0
        %v746 = vadd.f32 %v263, %v745
        %v747 = vpop.f32.mrb[0].mxu0
        %748 = vmatprep.mubr.bf16.mxu0 0
        %749 = vmatmul.mubr.bf16.gmra.mrb[0].mxu0 %v511
        %v750 = vpop.f32.mrb[0].mxu0
        %v751 = vadd.f32 %v263, %v750
        %v752 = vpop.f32.mrb[0].mxu0
        %v753 = vpop.f32.mrb[0].mxu0
        %v754 = vadd.f32 %v263, %v753
        %v755 = vpop.f32.mrb[0].mxu0
        %756 = vmatprep.mubr.bf16.mxu0 0
        %757 = vmatmul.mubr.bf16.gmra.mrb[0].mxu0 %v514
        %v758 = vpop.f32.mrb[0].mxu0
        %v759 = vadd.f32 %v263, %v758
        %v760 = vpop.f32.mrb[0].mxu0
        %v761 = vpop.f32.mrb[0].mxu0
        %v762 = vadd.f32 %v263, %v761
        %v763 = vpop.f32.mrb[0].mxu0
        %764 = vmatprep.mubr.bf16.mxu0 0
        %765 = vmatmul.mubr.bf16.gmra.mrb[0].mxu0 %v517
        %v766 = vpop.f32.mrb[0].mxu0
        %v767 = vadd.f32 %v263, %v766
        %v768 = vpop.f32.mrb[0].mxu0
        %v769 = vpop.f32.mrb[0].mxu0
        %v770 = vadd.f32 %v263, %v769
        %v771 = vpop.f32.mrb[0].mxu0
        %772 = vmatprep.mubr.bf16.mxu0 0
        %773 = vmatmul.mubr.bf16.gmra.mrb[0].mxu0 %v520
        %v774 = vpop.f32.mrb[0].mxu0
        %v775 = vadd.f32 %v263, %v774
        %v776 = vpop.f32.mrb[0].mxu0
        %v777 = vpop.f32.mrb[0].mxu0
        %v778 = vadd.f32 %v263, %v777
        %v779 = vpop.f32.mrb[0].mxu0
        %780 = vmatprep.mubr.bf16.mxu0 0
        %781 = vmatmul.mubr.bf16.gmra.mrb[0].mxu0 %v523
        %v782 = vpop.f32.mrb[0].mxu0
        %v783 = vadd.f32 %v263, %v782
        %v784 = vpop.f32.mrb[0].mxu0
        %v785 = vpop.f32.mrb[0].mxu0
        %v786 = vadd.f32 %v263, %v785
        %v787 = vpop.f32.mrb[0].mxu0
        %788 = vmatprep.mubr.bf16.mxu0 0
        %789 = vmatmul.mubr.bf16.gmra.mrb[0].mxu0 %v526
        %v790 = vpop.f32.mrb[0].mxu0
        %v791 = vadd.f32 %v263, %v790
        %v792 = vpop.f32.mrb[0].mxu0
        %v793 = vpop.f32.mrb[0].mxu0
        %v794 = vadd.f32 %v263, %v793
        %v795 = vpop.f32.mrb[0].mxu0
        %796 = vmatprep.mubr.bf16.mxu0 0
        %797 = vmatmul.mubr.bf16.gmra.mrb[0].mxu0 %v529
        %v798 = vpop.f32.mrb[0].mxu0
        %v799 = vadd.f32 %v263, %v798
        %v800 = vpop.f32.mrb[0].mxu0
        %v801 = vpop.f32.mrb[0].mxu0
        %v802 = vadd.f32 %v263, %v801
        %v803 = vpop.f32.mrb[0].mxu0
        %804 = vmatprep.mubr.bf16.mxu0 0
        %805 = vmatmul.mubr.bf16.gmra.mrb[0].mxu0 %v532
        %v806 = vpop.f32.mrb[0].mxu0
        %v807 = vadd.f32 %v263, %v806
        %v808 = vpop.f32.mrb[0].mxu0
        %v809 = vpop.f32.mrb[0].mxu0
        %v810 = vadd.f32 %v263, %v809
        %v811 = vpop.f32.mrb[0].mxu0
        %812 = vmatprep.mubr.bf16.mxu0 0
        %813 = vmatmul.mubr.bf16.gmra.mrb[0].mxu0 %v535
        %v814 = vpop.f32.mrb[0].mxu0
        %v815 = vadd.f32 %v263, %v814
        %v816 = vpop.f32.mrb[0].mxu0
        %v817 = vpop.f32.mrb[0].mxu0
        %v818 = vadd.f32 %v263, %v817
        %v819 = vpop.f32.mrb[0].mxu0
        %820 = vmatprep.mubr.bf16.mxu0 0
        %821 = vmatmul.mubr.bf16.gmra.mrb[0].mxu0 %v538
        %v822 = vpop.f32.mrb[0].mxu0
        %v823 = vadd.f32 %v263, %v822
        %v824 = vpop.f32.mrb[0].mxu0
        %v825 = vpop.f32.mrb[0].mxu0
        %v826 = vadd.f32 %v263, %v825
        %v827 = vpop.f32.mrb[0].mxu0
        %828 = vdwg.mxu0
        %v829 = vmax.f32 %v575, 0.0
        %v830 = vmax.f32 %v578, 0.0
        %v831 = vmax.f32 %v583, 0.0
        %v832 = vmax.f32 %v586, 0.0
        %v833 = vmax.f32 %v591, 0.0
        %v834 = vmax.f32 %v594, 0.0
        %v835 = vmax.f32 %v599, 0.0
        %v836 = vmax.f32 %v602, 0.0
        %v837 = vmax.f32 %v607, 0.0
        %v838 = vmax.f32 %v610, 0.0
        %v839 = vmax.f32 %v615, 0.0
        %v840 = vmax.f32 %v618, 0.0
        %v841 = vmax.f32 %v623, 0.0
        %v842 = vmax.f32 %v626, 0.0
        %v843 = vmax.f32 %v631, 0.0
        %v844 = vmax.f32 %v634, 0.0
        %v845 = vmax.f32 %v639, 0.0
        %v846 = vmax.f32 %v642, 0.0
        %v847 = vmax.f32 %v647, 0.0
        %v848 = vmax.f32 %v650, 0.0
        %v849 = vmax.f32 %v655, 0.0
        %v850 = vmax.f32 %v658, 0.0
        %v851 = vmax.f32 %v663, 0.0
        %v852 = vmax.f32 %v666, 0.0
        %v853 = vmax.f32 %v671, 0.0
        %v854 = vmax.f32 %v674, 0.0
        %v855 = vmax.f32 %v679, 0.0
        %v856 = vmax.f32 %v682, 0.0
        %v857 = vmax.f32 %v687, 0.0
        %v858 = vmax.f32 %v690, 0.0
        %v859 = vmax.f32 %v695, 0.0
        %v860 = vmax.f32 %v698, 0.0
        %v861 = vmax.f32 %v703, 0.0
        %v862 = vmax.f32 %v706, 0.0
        %v863 = vmax.f32 %v711, 0.0
        %v864 = vmax.f32 %v714, 0.0
        %v865 = vmax.f32 %v719, 0.0
        %v866 = vmax.f32 %v722, 0.0
        %v867 = vmax.f32 %v727, 0.0
        %v868 = vmax.f32 %v730, 0.0
        %v869 = vmax.f32 %v735, 0.0
        %v870 = vmax.f32 %v738, 0.0
        %v871 = vmax.f32 %v743, 0.0
        %v872 = vmax.f32 %v746, 0.0
        %v873 = vmax.f32 %v751, 0.0
        %v874 = vmax.f32 %v754, 0.0
        %v875 = vmax.f32 %v759, 0.0
        %v876 = vmax.f32 %v762, 0.0
        %v877 = vmax.f32 %v767, 0.0
        %v878 = vmax.f32 %v770, 0.0
        %v879 = vmax.f32 %v775, 0.0
        %v880 = vmax.f32 %v778, 0.0
        %v881 = vmax.f32 %v783, 0.0
        %v882 = vmax.f32 %v786, 0.0
        %v883 = vmax.f32 %v791, 0.0
        %v884 = vmax.f32 %v794, 0.0
        %v885 = vmax.f32 %v799, 0.0
        %v886 = vmax.f32 %v802, 0.0
        %v887 = vmax.f32 %v807, 0.0
        %v888 = vmax.f32 %v810, 0.0
        %v889 = vmax.f32 %v815, 0.0
        %v890 = vmax.f32 %v818, 0.0
        %v891 = vmax.f32 %v823, 0.0
        %v892 = vmax.f32 %v826, 0.0
        %vm893 = vcmask 31744
        %894 = vst.msk [vmem:[%s185] sm:$0xff] %vm893, %v829
        %895 = vst.msk [vmem:[%s185 + $0x8] sm:$0xff] %vm893, %v830
        %896 = vst.msk [vmem:[%s185 + $0x10] sm:$0xff] %vm893, %v831
        %897 = vst.msk [vmem:[%s185 + $0x18] sm:$0xff] %vm893, %v832
        %898 = vst.msk [vmem:[%s185 + $0x20] sm:$0xff] %vm893, %v833
        %899 = vst.msk [vmem:[%s185 + $0x28] sm:$0xff] %vm893, %v834
        %900 = vst.msk [vmem:[%s185 + $0x30] sm:$0xff] %vm893, %v835
        %901 = vst.msk [vmem:[%s185 + $0x38] sm:$0xff] %vm893, %v836
        %902 = vst.msk [vmem:[%s185 + $0x40] sm:$0xff] %vm893, %v837
        %903 = vst.msk [vmem:[%s185 + $0x48] sm:$0xff] %vm893, %v838
        %904 = vst.msk [vmem:[%s185 + $0x50] sm:$0xff] %vm893, %v839
        %905 = vst.msk [vmem:[%s185 + $0x58] sm:$0xff] %vm893, %v840
        %906 = vst.msk [vmem:[%s185 + $0x60] sm:$0xff] %vm893, %v841
        %907 = vst.msk [vmem:[%s185 + $0x68] sm:$0xff] %vm893, %v842
        %908 = vst.msk [vmem:[%s185 + $0x70] sm:$0xff] %vm893, %v843
        %909 = vst.msk [vmem:[%s185 + $0x78] sm:$0xff] %vm893, %v844
        %910 = vst.msk [vmem:[%s185 + $0x80] sm:$0xff] %vm893, %v845
        %911 = vst.msk [vmem:[%s185 + $0x88] sm:$0xff] %vm893, %v846
        %912 = vst.msk [vmem:[%s185 + $0x90] sm:$0xff] %vm893, %v847
        %913 = vst.msk [vmem:[%s185 + $0x98] sm:$0xff] %vm893, %v848
        %914 = vst.msk [vmem:[%s185 + $0xa0] sm:$0xff] %vm893, %v849
        %915 = vst.msk [vmem:[%s185 + $0xa8] sm:$0xff] %vm893, %v850
        %916 = vst.msk [vmem:[%s185 + $0xb0] sm:$0xff] %vm893, %v851
        %917 = vst.msk [vmem:[%s185 + $0xb8] sm:$0xff] %vm893, %v852
        %918 = vst.msk [vmem:[%s185 + $0xc0] sm:$0xff] %vm893, %v853
        %919 = vst.msk [vmem:[%s185 + $0xc8] sm:$0xff] %vm893, %v854
        %920 = vst.msk [vmem:[%s185 + $0xd0] sm:$0xff] %vm893, %v855
        %921 = vst.msk [vmem:[%s185 + $0xd8] sm:$0xff] %vm893, %v856
        %922 = vst.msk [vmem:[%s185 + $0xe0] sm:$0xff] %vm893, %v857
        %923 = vst.msk [vmem:[%s185 + $0xe8] sm:$0xff] %vm893, %v858
        %924 = vst.msk [vmem:[%s185 + $0xf0] sm:$0xff] %vm893, %v859
        %925 = vst.msk [vmem:[%s185 + $0xf8] sm:$0xff] %vm893, %v860
        %926 = vst.msk [vmem:[%s185 + $0x100] sm:$0xff] %vm893, %v861
        %927 = vst.msk [vmem:[%s185 + $0x108] sm:$0xff] %vm893, %v862
        %928 = vst.msk [vmem:[%s185 + $0x110] sm:$0xff] %vm893, %v863
        %929 = vst.msk [vmem:[%s185 + $0x118] sm:$0xff] %vm893, %v864
        %930 = vst.msk [vmem:[%s185 + $0x120] sm:$0xff] %vm893, %v865
        %931 = vst.msk [vmem:[%s185 + $0x128] sm:$0xff] %vm893, %v866
        %932 = vst.msk [vmem:[%s185 + $0x130] sm:$0xff] %vm893, %v867
        %933 = vst.msk [vmem:[%s185 + $0x138] sm:$0xff] %vm893, %v868
        %934 = vst.msk [vmem:[%s185 + $0x140] sm:$0xff] %vm893, %v869
        %935 = vst.msk [vmem:[%s185 + $0x148] sm:$0xff] %vm893, %v870
        %936 = vst.msk [vmem:[%s185 + $0x150] sm:$0xff] %vm893, %v871
        %937 = vst.msk [vmem:[%s185 + $0x158] sm:$0xff] %vm893, %v872
        %938 = vst.msk [vmem:[%s185 + $0x160] sm:$0xff] %vm893, %v873
        %939 = vst.msk [vmem:[%s185 + $0x168] sm:$0xff] %vm893, %v874
        %940 = vst.msk [vmem:[%s185 + $0x170] sm:$0xff] %vm893, %v875
        %941 = vst.msk [vmem:[%s185 + $0x178] sm:$0xff] %vm893, %v876
        %942 = vst.msk [vmem:[%s185 + $0x180] sm:$0xff] %vm893, %v877
        %943 = vst.msk [vmem:[%s185 + $0x188] sm:$0xff] %vm893, %v878
        %944 = vst.msk [vmem:[%s185 + $0x190] sm:$0xff] %vm893, %v879
        %945 = vst.msk [vmem:[%s185 + $0x198] sm:$0xff] %vm893, %v880
        %946 = vst.msk [vmem:[%s185 + $0x1a0] sm:$0xff] %vm893, %v881
        %947 = vst.msk [vmem:[%s185 + $0x1a8] sm:$0xff] %vm893, %v882
        %948 = vst.msk [vmem:[%s185 + $0x1b0] sm:$0xff] %vm893, %v883
        %949 = vst.msk [vmem:[%s185 + $0x1b8] sm:$0xff] %vm893, %v884
        %950 = vst.msk [vmem:[%s185 + $0x1c0] sm:$0xff] %vm893, %v885
        %951 = vst.msk [vmem:[%s185 + $0x1c8] sm:$0xff] %vm893, %v886
        %952 = vst.msk [vmem:[%s185 + $0x1d0] sm:$0xff] %vm893, %v887
        %953 = vst.msk [vmem:[%s185 + $0x1d8] sm:$0xff] %vm893, %v888
        %954 = vst.msk [vmem:[%s185 + $0x1e0] sm:$0xff] %vm893, %v889
        %955 = vst.msk [vmem:[%s185 + $0x1e8] sm:$0xff] %vm893, %v890
        %956 = vst.msk [vmem:[%s185 + $0x1f0] sm:$0xff] %vm893, %v891
        %957 = vst.msk [vmem:[%s185 + $0x1f8] sm:$0xff] %vm893, %v892
        %s958 = smul.u32 64, %s15
        %p959 = scmp.lt.s32.totalorder %s958, 255
        %s960 = scalar_select %p959, %s958, 255
        %s961 = smul.addr %s960, 8
        %s962 = scalar_lea.vmem %s3, %s961
        // Predicated region
        $region37: #{autoencoder_forward.25} parent=31 // pred_check
          %p963 = pneg %p101
        $region38: #{autoencoder_forward.25} parent=31 // pred_check_branch
          %965 = sbr.rel (%p963) target = $region40
        $region39: #{autoencoder_forward.25} parent=31 // pred_region
          %s966 = smul.u32 64, %s15
        $region40: #{autoencoder_forward.25} parent=31 // pred_fallthru
          _
      $region32: #{autoencoder_forward.25} parent=5 // pred_fallthru
        _
      %p967 = scmp.le.s32.totalorder 2, %s10
      // Predicated region
      $region41: #{autoencoder_forward.25} parent=5 // pred_check
        %p968 = pneg %p967
      $region42: #{autoencoder_forward.25} parent=5 // pred_check_branch
        %970 = sbr.rel (%p968) target = $region44
      $region43: #{autoencoder_forward.25} parent=5 // pred_region
        %s971 = ssub.s32 %s10, 2
        // Predicated region
        $region45: #{autoencoder_forward.25} parent=43 // pred_check
          %p972 = pneg %p107
        $region46: #{autoencoder_forward.25} parent=43 // pred_check_branch
          %974 = sbr.rel (%p972) target = $region48
        $region47: #{autoencoder_forward.25} parent=43 // pred_region
          %s975 = smul.u32 64, %s16
          %p976 = scmp.lt.s32.totalorder %s975, 255
          %s977 = scalar_select %p976, %s975, 255
          %s978 = smul.addr %s977, 8
          %s979 = scalar_lea.vmem %s3, %s978
        $region48: #{autoencoder_forward.25} parent=43 // pred_fallthru
          _
      $region44: #{autoencoder_forward.25} parent=5 // pred_fallthru
        _
    $region6: #{autoencoder_forward.25} parent=1 // loop_footer
      %s14 = sadd.s32 1, %s10
    $region7: #{autoencoder_forward.25} parent=1 // loop_footer_branch
      %9 = sbr.rel target = $region3
    $region8: #{autoencoder_forward.25} parent=1 // loop_exit
      _
    %980 = vsyncpa [#allocation3], 1
    %s981 = scalar_lea.sflag [#allocation3], 1
    %982 = vsyncpa %s981, 1

// kernel: autoencoder_forward.26
$region0: #{autoencoder_forward.26}
  #allocation0 [shape = 'u32[]', space=smem, size = 0x4, offset = 0x4, fixed_abs, tag = 'smem constant byte address 0x4 - core index']
  #allocation1 [shape = 'u32[144,128]{1,0:T(1,128)}', space=vmem, size = 0x12000, scoped, tag = 'internal scratch']
  %s0 = inlined_call_operand.vmem [shape: bf16[512,64], index: 0, kind: input, shape index: {}]
  %s1 = inlined_call_operand.vmem [shape: bf16[64,8], index: 1, kind: input, shape index: {}]
  %s2 = inlined_call_operand.vmem [shape: f32[1,8], index: 2, kind: input, shape index: {}]
  %s3 = inlined_call_operand.vmem [shape: f32[512,8], index: 3, kind: output, shape index: {}]
  %s4 = sld [smem:[#allocation0]]
  $region22: #{autoencoder_forward.26} parent=0
    _
  %s6 = ssub.s32 1, %s4
  %s7 = scalar_select 0, %s6, %s4
  // Predicated region
  $region2: #{autoencoder_forward.26} parent=0 // pred_check
    _
  $region3: #{autoencoder_forward.26} parent=0 // pred_check_branch
    %9 = sbr.rel (0) target = $region5
  $region4: #{autoencoder_forward.26} parent=0 // pred_region
    _
  $region5: #{autoencoder_forward.26} parent=0 // pred_fallthru
    _
  // Predicated region
  $region6: #{autoencoder_forward.26} parent=0 // pred_check
    _
  $region7: #{autoencoder_forward.26} parent=0 // pred_check_branch
    %11 = sbr.rel (0) target = $region9
  $region8: #{autoencoder_forward.26} parent=0 // pred_region
    _
  $region9: #{autoencoder_forward.26} parent=0 // pred_fallthru
    _
  // Predicated region
  $region10: #{autoencoder_forward.26} parent=0 // pred_check
    _
  $region11: #{autoencoder_forward.26} parent=0 // pred_check_branch
    %13 = sbr.rel (0) target = $region13
  $region12: #{autoencoder_forward.26} parent=0 // pred_region
    _
  $region13: #{autoencoder_forward.26} parent=0 // pred_fallthru
    _
  %v15 = vld [vmem:[%s0] sm:$0xf]
  %v16 = vld [vmem:[%s0 + $0x4] sm:$0xf]
  %v17 = vld [vmem:[%s0 + $0x8] sm:$0xf]
  %v18 = vld [vmem:[%s0 + $0xc] sm:$0xf]
  %v19 = vld [vmem:[%s0 + $0x10] sm:$0xf]
  %v20 = vld [vmem:[%s0 + $0x14] sm:$0xf]
  %v21 = vld [vmem:[%s0 + $0x18] sm:$0xf]
  %v22 = vld [vmem:[%s0 + $0x1c] sm:$0xf]
  %v23 = vld [vmem:[%s0 + $0x20] sm:$0xf]
  %v24 = vld [vmem:[%s0 + $0x24] sm:$0xf]
  %v25 = vld [vmem:[%s0 + $0x28] sm:$0xf]
  %v26 = vld [vmem:[%s0 + $0x2c] sm:$0xf]
  %v27 = vld [vmem:[%s0 + $0x30] sm:$0xf]
  %v28 = vld [vmem:[%s0 + $0x34] sm:$0xf]
  %v29 = vld [vmem:[%s0 + $0x38] sm:$0xf]
  %v30 = vld [vmem:[%s0 + $0x3c] sm:$0xf]
  %v31 = vld [vmem:[%s0 + $0x40] sm:$0xf]
  %v32 = vld [vmem:[%s0 + $0x44] sm:$0xf]
  %v33 = vld [vmem:[%s0 + $0x48] sm:$0xf]
  %v34 = vld [vmem:[%s0 + $0x4c] sm:$0xf]
  %v35 = vld [vmem:[%s0 + $0x50] sm:$0xf]
  %v36 = vld [vmem:[%s0 + $0x54] sm:$0xf]
  %v37 = vld [vmem:[%s0 + $0x58] sm:$0xf]
  %v38 = vld [vmem:[%s0 + $0x5c] sm:$0xf]
  %v39 = vld [vmem:[%s0 + $0x60] sm:$0xf]
  %v40 = vld [vmem:[%s0 + $0x64] sm:$0xf]
  %v41 = vld [vmem:[%s0 + $0x68] sm:$0xf]
  %v42 = vld [vmem:[%s0 + $0x6c] sm:$0xf]
  %v43 = vld [vmem:[%s0 + $0x70] sm:$0xf]
  %v44 = vld [vmem:[%s0 + $0x74] sm:$0xf]
  %v45 = vld [vmem:[%s0 + $0x78] sm:$0xf]
  %v46 = vld [vmem:[%s0 + $0x7c] sm:$0xf]
  %v47 = vld [vmem:[%s0 + $0x80] sm:$0xf]
  %v48 = vld [vmem:[%s0 + $0x84] sm:$0xf]
  %v49 = vld [vmem:[%s0 + $0x88] sm:$0xf]
  %v50 = vld [vmem:[%s0 + $0x8c] sm:$0xf]
  %v51 = vld [vmem:[%s0 + $0x90] sm:$0xf]
  %v52 = vld [vmem:[%s0 + $0x94] sm:$0xf]
  %v53 = vld [vmem:[%s0 + $0x98] sm:$0xf]
  %v54 = vld [vmem:[%s0 + $0x9c] sm:$0xf]
  %v55 = vld [vmem:[%s0 + $0xa0] sm:$0xf]
  %v56 = vld [vmem:[%s0 + $0xa4] sm:$0xf]
  %v57 = vld [vmem:[%s0 + $0xa8] sm:$0xf]
  %v58 = vld [vmem:[%s0 + $0xac] sm:$0xf]
  %v59 = vld [vmem:[%s0 + $0xb0] sm:$0xf]
  %v60 = vld [vmem:[%s0 + $0xb4] sm:$0xf]
  %v61 = vld [vmem:[%s0 + $0xb8] sm:$0xf]
  %v62 = vld [vmem:[%s0 + $0xbc] sm:$0xf]
  %v63 = vld [vmem:[%s0 + $0xc0] sm:$0xf]
  %v64 = vld [vmem:[%s0 + $0xc4] sm:$0xf]
  %v65 = vld [vmem:[%s0 + $0xc8] sm:$0xf]
  %v66 = vld [vmem:[%s0 + $0xcc] sm:$0xf]
  %v67 = vld [vmem:[%s0 + $0xd0] sm:$0xf]
  %v68 = vld [vmem:[%s0 + $0xd4] sm:$0xf]
  %v69 = vld [vmem:[%s0 + $0xd8] sm:$0xf]
  %v70 = vld [vmem:[%s0 + $0xdc] sm:$0xf]
  %v71 = vld [vmem:[%s0 + $0xe0] sm:$0xf]
  %v72 = vld [vmem:[%s0 + $0xe4] sm:$0xf]
  %v73 = vld [vmem:[%s0 + $0xe8] sm:$0xf]
  %v74 = vld [vmem:[%s0 + $0xec] sm:$0xf]
  %v75 = vld [vmem:[%s0 + $0xf0] sm:$0xf]
  %v76 = vld [vmem:[%s0 + $0xf4] sm:$0xf]
  %v77 = vld [vmem:[%s0 + $0xf8] sm:$0xf]
  %v78 = vld [vmem:[%s0 + $0xfc] sm:$0xf]
  %v79 = vld [vmem:[%s1] sm:$0xf]
  %v80 = vld [vmem:[%s1 + $0x4] sm:$0xf]
  %v81 = vld [vmem:[%s1 + $0x8] sm:$0xf]
  %v82 = vld [vmem:[%s1 + $0xc] sm:$0xf]
  %v83 = vld [vmem:[%s1 + $0x10] sm:$0xf]
  %v84 = vld [vmem:[%s1 + $0x14] sm:$0xf]
  %v85 = vld [vmem:[%s1 + $0x18] sm:$0xf]
  %v86 = vld [vmem:[%s1 + $0x1c] sm:$0xf]
  %v87 = vld [vmem:[%s2] sm:$0x1]
  %v89 = vlaneseq
  %v90 = vshrl.u32 %v89, 7
  %v91 = vsub.s32 0, %v90
  %v92 = vrot.slane %v87, %v91
  %v158 = vunpack.c.l.b16 %v15
  %v159 = vunpack.c.l.b16 %v16
  %v160 = vunpack.c.l.b16 %v17
  %v161 = vunpack.c.l.b16 %v18
  %v162 = vunpack.c.l.b16 %v19
  %v163 = vunpack.c.l.b16 %v20
  %v164 = vunpack.c.l.b16 %v21
  %v165 = vunpack.c.l.b16 %v22
  %v166 = vunpack.c.l.b16 %v23
  %v167 = vunpack.c.l.b16 %v24
  %v168 = vunpack.c.l.b16 %v25
  %v169 = vunpack.c.l.b16 %v26
  %v170 = vunpack.c.l.b16 %v27
  %v171 = vunpack.c.l.b16 %v28
  %v172 = vunpack.c.l.b16 %v29
  %v173 = vunpack.c.l.b16 %v30
  %v174 = vunpack.c.l.b16 %v31
  %v175 = vunpack.c.l.b16 %v32
  %v176 = vunpack.c.l.b16 %v33
  %v177 = vunpack.c.l.b16 %v34
  %v178 = vunpack.c.l.b16 %v35
  %v179 = vunpack.c.l.b16 %v36
  %v180 = vunpack.c.l.b16 %v37
  %v181 = vunpack.c.l.b16 %v38
  %v182 = vunpack.c.l.b16 %v39
  %v183 = vunpack.c.l.b16 %v40
  %v184 = vunpack.c.l.b16 %v41
  %v185 = vunpack.c.l.b16 %v42
  %v186 = vunpack.c.l.b16 %v43
  %v187 = vunpack.c.l.b16 %v44
  %v188 = vunpack.c.l.b16 %v45
  %v189 = vunpack.c.l.b16 %v46
  %v190 = vunpack.c.l.b16 %v47
  %v191 = vunpack.c.l.b16 %v48
  %v192 = vunpack.c.l.b16 %v49
  %v193 = vunpack.c.l.b16 %v50
  %v194 = vunpack.c.l.b16 %v51
  %v195 = vunpack.c.l.b16 %v52
  %v196 = vunpack.c.l.b16 %v53
  %v197 = vunpack.c.l.b16 %v54
  %v198 = vunpack.c.l.b16 %v55
  %v199 = vunpack.c.l.b16 %v56
  %v200 = vunpack.c.l.b16 %v57
  %v201 = vunpack.c.l.b16 %v58
  %v202 = vunpack.c.l.b16 %v59
  %v203 = vunpack.c.l.b16 %v60
  %v204 = vunpack.c.l.b16 %v61
  %v205 = vunpack.c.l.b16 %v62
  %v206 = vunpack.c.l.b16 %v63
  %v207 = vunpack.c.l.b16 %v64
  %v208 = vunpack.c.l.b16 %v65
  %v209 = vunpack.c.l.b16 %v66
  %v210 = vunpack.c.l.b16 %v67
  %v211 = vunpack.c.l.b16 %v68
  %v212 = vunpack.c.l.b16 %v69
  %v213 = vunpack.c.l.b16 %v70
  %v214 = vunpack.c.l.b16 %v71
  %v215 = vunpack.c.l.b16 %v72
  %v216 = vunpack.c.l.b16 %v73
  %v217 = vunpack.c.l.b16 %v74
  %v218 = vunpack.c.l.b16 %v75
  %v219 = vunpack.c.l.b16 %v76
  %v220 = vunpack.c.l.b16 %v77
  %v221 = vunpack.c.l.b16 %v78
  %v222 = vpack.c.b16 %v159, %v158
  %v223 = vpack.c.b16 %v161, %v160
  %v224 = vpack.c.b16 %v163, %v162
  %v225 = vpack.c.b16 %v165, %v164
  %v226 = vpack.c.b16 %v167, %v166
  %v227 = vpack.c.b16 %v169, %v168
  %v228 = vpack.c.b16 %v171, %v170
  %v229 = vpack.c.b16 %v173, %v172
  %v230 = vpack.c.b16 %v175, %v174
  %v231 = vpack.c.b16 %v177, %v176
  %v232 = vpack.c.b16 %v179, %v178
  %v233 = vpack.c.b16 %v181, %v180
  %v234 = vpack.c.b16 %v183, %v182
  %v235 = vpack.c.b16 %v185, %v184
  %v236 = vpack.c.b16 %v187, %v186
  %v237 = vpack.c.b16 %v189, %v188
  %v238 = vpack.c.b16 %v191, %v190
  %v239 = vpack.c.b16 %v193, %v192
  %v240 = vpack.c.b16 %v195, %v194
  %v241 = vpack.c.b16 %v197, %v196
  %v242 = vpack.c.b16 %v199, %v198
  %v243 = vpack.c.b16 %v201, %v200
  %v244 = vpack.c.b16 %v203, %v202
  %v245 = vpack.c.b16 %v205, %v204
  %v246 = vpack.c.b16 %v207, %v206
  %v247 = vpack.c.b16 %v209, %v208
  %v248 = vpack.c.b16 %v211, %v210
  %v249 = vpack.c.b16 %v213, %v212
  %v250 = vpack.c.b16 %v215, %v214
  %v251 = vpack.c.b16 %v217, %v216
  %v252 = vpack.c.b16 %v219, %v218
  %v253 = vpack.c.b16 %v221, %v220
  %v262 = vunpack.c.l.b16 %v79
  %v263 = vunpack.c.l.b16 %v80
  %v264 = vunpack.c.l.b16 %v81
  %v265 = vunpack.c.l.b16 %v82
  %v266 = vunpack.c.l.b16 %v83
  %v267 = vunpack.c.l.b16 %v84
  %v268 = vunpack.c.l.b16 %v85
  %v269 = vunpack.c.l.b16 %v86
  %v270 = vpack.c.b16 %v263, %v262
  %v271 = vpack.c.b16 %v265, %v264
  %v272 = vpack.c.b16 %v267, %v266
  %v273 = vpack.c.b16 %v269, %v268
  %vm278 = vcmask 523264
  %v280 = vsel %vm278, %v222, 0
  %v283 = vsel %vm278, %v223, 0
  %v286 = vsel %vm278, %v224, 0
  %v289 = vsel %vm278, %v225, 0
  %v292 = vsel %vm278, %v226, 0
  %v295 = vsel %vm278, %v227, 0
  %v298 = vsel %vm278, %v228, 0
  %v301 = vsel %vm278, %v229, 0
  %v304 = vsel %vm278, %v230, 0
  %v307 = vsel %vm278, %v231, 0
  %v310 = vsel %vm278, %v232, 0
  %v313 = vsel %vm278, %v233, 0
  %v316 = vsel %vm278, %v234, 0
  %v319 = vsel %vm278, %v235, 0
  %v322 = vsel %vm278, %v236, 0
  %v325 = vsel %vm278, %v237, 0
  %v328 = vsel %vm278, %v238, 0
  %v331 = vsel %vm278, %v239, 0
  %v334 = vsel %vm278, %v240, 0
  %v337 = vsel %vm278, %v241, 0
  %v340 = vsel %vm278, %v242, 0
  %v343 = vsel %vm278, %v243, 0
  %v346 = vsel %vm278, %v244, 0
  %v349 = vsel %vm278, %v245, 0
  %v352 = vsel %vm278, %v246, 0
  %v355 = vsel %vm278, %v247, 0
  %v358 = vsel %vm278, %v248, 0
  %v361 = vsel %vm278, %v249, 0
  %v364 = vsel %vm278, %v250, 0
  %v367 = vsel %vm278, %v251, 0
  %v370 = vsel %vm278, %v252, 0
  %v373 = vsel %vm278, %v253, 0
  %375 = vmatprep.subr.bf16.mxu0 0
  %376 = vmatpush1.bf16.msra.mxu0 %v270
  %377 = vmatprep.subr.bf16.mxu0 0
  %378 = vmatpush1.bf16.msra.mxu0 %v271
  %379 = vmatprep.subr.bf16.mxu0 0
  %380 = vmatpush1.bf16.msra.mxu0 %v272
  %381 = vmatprep.subr.bf16.mxu0 0
  %382 = vmatpush1.bf16.msra.mxu0 %v273
  %383 = vmatprep.subr.bf16.mxu0 0
  %384 = vmatpush1.bf16.msra.mxu0 0
  %385 = vmatprep.subr.bf16.mxu0 0
  %386 = vmatpush1.bf16.msra.mxu0 0
  %387 = vmatprep.subr.bf16.mxu0 0
  %388 = vmatpush1.bf16.msra.mxu0 0
  %389 = vmatprep.subr.bf16.mxu0 0
  %390 = vmatpush1.bf16.msra.mxu0 0
  %391 = vmatprep.subr.bf16.mxu0 0
  %392 = vmatpush1.bf16.msra.mxu0 0
  %393 = vmatprep.subr.bf16.mxu0 0
  %394 = vmatpush1.bf16.msra.mxu0 0
  %395 = vmatprep.subr.bf16.mxu0 0
  %396 = vmatpush1.bf16.msra.mxu0 0
  %397 = vmatprep.subr.bf16.mxu0 0
  %398 = vmatpush1.bf16.msra.mxu0 0
  %399 = vmatprep.subr.bf16.mxu0 0
  %400 = vmatpush1.bf16.msra.mxu0 0
  %401 = vmatprep.subr.bf16.mxu0 0
  %402 = vmatpush1.bf16.msra.mxu0 0
  %403 = vmatprep.subr.bf16.mxu0 0
  %404 = vmatpush1.bf16.msra.mxu0 0
  %405 = vmatprep.subr.bf16.mxu0 0
  %406 = vmatpush1.bf16.msra.mxu0 0
  %407 = vmatprep.mubr.bf16.mxu0 0
  %408 = vmatmul.mubr.bf16.gmra.mrb[0].mxu0 %v280
  %v409 = vpop.f32.mrb[0].mxu0
  %v410 = vadd.f32 %v92, %v409
  %v411 = vpop.f32.mrb[0].mxu0
  %v412 = vpop.f32.mrb[0].mxu0
  %v413 = vadd.f32 %v92, %v412
  %v414 = vpop.f32.mrb[0].mxu0
  %415 = vmatprep.mubr.bf16.mxu0 0
  %416 = vmatmul.mubr.bf16.gmra.mrb[0].mxu0 %v283
  %v417 = vpop.f32.mrb[0].mxu0
  %v418 = vadd.f32 %v92, %v417
  %v419 = vpop.f32.mrb[0].mxu0
  %v420 = vpop.f32.mrb[0].mxu0
  %v421 = vadd.f32 %v92, %v420
  %v422 = vpop.f32.mrb[0].mxu0
  %423 = vmatprep.mubr.bf16.mxu0 0
  %424 = vmatmul.mubr.bf16.gmra.mrb[0].mxu0 %v286
  %v425 = vpop.f32.mrb[0].mxu0
  %v426 = vadd.f32 %v92, %v425
  %v427 = vpop.f32.mrb[0].mxu0
  %v428 = vpop.f32.mrb[0].mxu0
  %v429 = vadd.f32 %v92, %v428
  %v430 = vpop.f32.mrb[0].mxu0
  %431 = vmatprep.mubr.bf16.mxu0 0
  %432 = vmatmul.mubr.bf16.gmra.mrb[0].mxu0 %v289
  %v433 = vpop.f32.mrb[0].mxu0
  %v434 = vadd.f32 %v92, %v433
  %v435 = vpop.f32.mrb[0].mxu0
  %v436 = vpop.f32.mrb[0].mxu0
  %v437 = vadd.f32 %v92, %v436
  %v438 = vpop.f32.mrb[0].mxu0
  %439 = vmatprep.mubr.bf16.mxu0 0
  %440 = vmatmul.mubr.bf16.gmra.mrb[0].mxu0 %v292
  %v441 = vpop.f32.mrb[0].mxu0
  %v442 = vadd.f32 %v92, %v441
  %v443 = vpop.f32.mrb[0].mxu0
  %v444 = vpop.f32.mrb[0].mxu0
  %v445 = vadd.f32 %v92, %v444
  %v446 = vpop.f32.mrb[0].mxu0
  %447 = vmatprep.mubr.bf16.mxu0 0
  %448 = vmatmul.mubr.bf16.gmra.mrb[0].mxu0 %v295
  %v449 = vpop.f32.mrb[0].mxu0
  %v450 = vadd.f32 %v92, %v449
  %v451 = vpop.f32.mrb[0].mxu0
  %v452 = vpop.f32.mrb[0].mxu0
  %v453 = vadd.f32 %v92, %v452
  %v454 = vpop.f32.mrb[0].mxu0
  %455 = vmatprep.mubr.bf16.mxu0 0
  %456 = vmatmul.mubr.bf16.gmra.mrb[0].mxu0 %v298
  %v457 = vpop.f32.mrb[0].mxu0
  %v458 = vadd.f32 %v92, %v457
  %v459 = vpop.f32.mrb[0].mxu0
  %v460 = vpop.f32.mrb[0].mxu0
  %v461 = vadd.f32 %v92, %v460
  %v462 = vpop.f32.mrb[0].mxu0
  %463 = vmatprep.mubr.bf16.mxu0 0
  %464 = vmatmul.mubr.bf16.gmra.mrb[0].mxu0 %v301
  %v465 = vpop.f32.mrb[0].mxu0
  %v466 = vadd.f32 %v92, %v465
  %v467 = vpop.f32.mrb[0].mxu0
  %v468 = vpop.f32.mrb[0].mxu0
  %v469 = vadd.f32 %v92, %v468
  %v470 = vpop.f32.mrb[0].mxu0
  %471 = vmatprep.mubr.bf16.mxu0 0
  %472 = vmatmul.mubr.bf16.gmra.mrb[0].mxu0 %v304
  %v473 = vpop.f32.mrb[0].mxu0
  %v474 = vadd.f32 %v92, %v473
  %v475 = vpop.f32.mrb[0].mxu0
  %v476 = vpop.f32.mrb[0].mxu0
  %v477 = vadd.f32 %v92, %v476
  %v478 = vpop.f32.mrb[0].mxu0
  %479 = vmatprep.mubr.bf16.mxu0 0
  %480 = vmatmul.mubr.bf16.gmra.mrb[0].mxu0 %v307
  %v481 = vpop.f32.mrb[0].mxu0
  %v482 = vadd.f32 %v92, %v481
  %v483 = vpop.f32.mrb[0].mxu0
  %v484 = vpop.f32.mrb[0].mxu0
  %v485 = vadd.f32 %v92, %v484
  %v486 = vpop.f32.mrb[0].mxu0
  %487 = vmatprep.mubr.bf16.mxu0 0
  %488 = vmatmul.mubr.bf16.gmra.mrb[0].mxu0 %v310
  %v489 = vpop.f32.mrb[0].mxu0
  %v490 = vadd.f32 %v92, %v489
  %v491 = vpop.f32.mrb[0].mxu0
  %v492 = vpop.f32.mrb[0].mxu0
  %v493 = vadd.f32 %v92, %v492
  %v494 = vpop.f32.mrb[0].mxu0
  %495 = vmatprep.mubr.bf16.mxu0 0
  %496 = vmatmul.mubr.bf16.gmra.mrb[0].mxu0 %v313
  %v497 = vpop.f32.mrb[0].mxu0
  %v498 = vadd.f32 %v92, %v497
  %v499 = vpop.f32.mrb[0].mxu0
  %v500 = vpop.f32.mrb[0].mxu0
  %v501 = vadd.f32 %v92, %v500
  %v502 = vpop.f32.mrb[0].mxu0
  %503 = vmatprep.mubr.bf16.mxu0 0
  %504 = vmatmul.mubr.bf16.gmra.mrb[0].mxu0 %v316
  %v505 = vpop.f32.mrb[0].mxu0
  %v506 = vadd.f32 %v92, %v505
  %v507 = vpop.f32.mrb[0].mxu0
  %v508 = vpop.f32.mrb[0].mxu0
  %v509 = vadd.f32 %v92, %v508
  %v510 = vpop.f32.mrb[0].mxu0
  %511 = vmatprep.mubr.bf16.mxu0 0
  %512 = vmatmul.mubr.bf16.gmra.mrb[0].mxu0 %v319
  %v513 = vpop.f32.mrb[0].mxu0
  %v514 = vadd.f32 %v92, %v513
  %v515 = vpop.f32.mrb[0].mxu0
  %v516 = vpop.f32.mrb[0].mxu0
  %v517 = vadd.f32 %v92, %v516
  %v518 = vpop.f32.mrb[0].mxu0
  %519 = vmatprep.mubr.bf16.mxu0 0
  %520 = vmatmul.mubr.bf16.gmra.mrb[0].mxu0 %v322
  %v521 = vpop.f32.mrb[0].mxu0
  %v522 = vadd.f32 %v92, %v521
  %v523 = vpop.f32.mrb[0].mxu0
  %v524 = vpop.f32.mrb[0].mxu0
  %v525 = vadd.f32 %v92, %v524
  %v526 = vpop.f32.mrb[0].mxu0
  %527 = vmatprep.mubr.bf16.mxu0 0
  %528 = vmatmul.mubr.bf16.gmra.mrb[0].mxu0 %v325
  %v529 = vpop.f32.mrb[0].mxu0
  %v530 = vadd.f32 %v92, %v529
  %v531 = vpop.f32.mrb[0].mxu0
  %v532 = vpop.f32.mrb[0].mxu0
  %v533 = vadd.f32 %v92, %v532
  %v534 = vpop.f32.mrb[0].mxu0
  %535 = vmatprep.mubr.bf16.mxu0 0
  %536 = vmatmul.mubr.bf16.gmra.mrb[0].mxu0 %v328
  %v537 = vpop.f32.mrb[0].mxu0
  %v538 = vadd.f32 %v92, %v537
  %v539 = vpop.f32.mrb[0].mxu0
  %v540 = vpop.f32.mrb[0].mxu0
  %v541 = vadd.f32 %v92, %v540
  %v542 = vpop.f32.mrb[0].mxu0
  %543 = vmatprep.mubr.bf16.mxu0 0
  %544 = vmatmul.mubr.bf16.gmra.mrb[0].mxu0 %v331
  %v545 = vpop.f32.mrb[0].mxu0
  %v546 = vadd.f32 %v92, %v545
  %v547 = vpop.f32.mrb[0].mxu0
  %v548 = vpop.f32.mrb[0].mxu0
  %v549 = vadd.f32 %v92, %v548
  %v550 = vpop.f32.mrb[0].mxu0
  %551 = vmatprep.mubr.bf16.mxu0 0
  %552 = vmatmul.mubr.bf16.gmra.mrb[0].mxu0 %v334
  %v553 = vpop.f32.mrb[0].mxu0
  %v554 = vadd.f32 %v92, %v553
  %v555 = vpop.f32.mrb[0].mxu0
  %v556 = vpop.f32.mrb[0].mxu0
  %v557 = vadd.f32 %v92, %v556
  %v558 = vpop.f32.mrb[0].mxu0
  %559 = vmatprep.mubr.bf16.mxu0 0
  %560 = vmatmul.mubr.bf16.gmra.mrb[0].mxu0 %v337
  %v561 = vpop.f32.mrb[0].mxu0
  %v562 = vadd.f32 %v92, %v561
  %v563 = vpop.f32.mrb[0].mxu0
  %v564 = vpop.f32.mrb[0].mxu0
  %v565 = vadd.f32 %v92, %v564
  %v566 = vpop.f32.mrb[0].mxu0
  %567 = vmatprep.mubr.bf16.mxu0 0
  %568 = vmatmul.mubr.bf16.gmra.mrb[0].mxu0 %v340
  %v569 = vpop.f32.mrb[0].mxu0
  %v570 = vadd.f32 %v92, %v569
  %v571 = vpop.f32.mrb[0].mxu0
  %v572 = vpop.f32.mrb[0].mxu0
  %v573 = vadd.f32 %v92, %v572
  %v574 = vpop.f32.mrb[0].mxu0
  %575 = vmatprep.mubr.bf16.mxu0 0
  %576 = vmatmul.mubr.bf16.gmra.mrb[0].mxu0 %v343
  %v577 = vpop.f32.mrb[0].mxu0
  %v578 = vadd.f32 %v92, %v577
  %v579 = vpop.f32.mrb[0].mxu0
  %v580 = vpop.f32.mrb[0].mxu0
  %v581 = vadd.f32 %v92, %v580
  %v582 = vpop.f32.mrb[0].mxu0
  %583 = vmatprep.mubr.bf16.mxu0 0
  %584 = vmatmul.mubr.bf16.gmra.mrb[0].mxu0 %v346
  %v585 = vpop.f32.mrb[0].mxu0
  %v586 = vadd.f32 %v92, %v585
  %v587 = vpop.f32.mrb[0].mxu0
  %v588 = vpop.f32.mrb[0].mxu0
  %v589 = vadd.f32 %v92, %v588
  %v590 = vpop.f32.mrb[0].mxu0
  %591 = vmatprep.mubr.bf16.mxu0 0
  %592 = vmatmul.mubr.bf16.gmra.mrb[0].mxu0 %v349
  %v593 = vpop.f32.mrb[0].mxu0
  %v594 = vadd.f32 %v92, %v593
  %v595 = vpop.f32.mrb[0].mxu0
  %v596 = vpop.f32.mrb[0].mxu0
  %v597 = vadd.f32 %v92, %v596
  %v598 = vpop.f32.mrb[0].mxu0
  %599 = vmatprep.mubr.bf16.mxu0 0
  %600 = vmatmul.mubr.bf16.gmra.mrb[0].mxu0 %v352
  %v601 = vpop.f32.mrb[0].mxu0
  %v602 = vadd.f32 %v92, %v601
  %v603 = vpop.f32.mrb[0].mxu0
  %v604 = vpop.f32.mrb[0].mxu0
  %v605 = vadd.f32 %v92, %v604
  %v606 = vpop.f32.mrb[0].mxu0
  %607 = vmatprep.mubr.bf16.mxu0 0
  %608 = vmatmul.mubr.bf16.gmra.mrb[0].mxu0 %v355
  %v609 = vpop.f32.mrb[0].mxu0
  %v610 = vadd.f32 %v92, %v609
  %v611 = vpop.f32.mrb[0].mxu0
  %v612 = vpop.f32.mrb[0].mxu0
  %v613 = vadd.f32 %v92, %v612
  %v614 = vpop.f32.mrb[0].mxu0
  %615 = vmatprep.mubr.bf16.mxu0 0
  %616 = vmatmul.mubr.bf16.gmra.mrb[0].mxu0 %v358
  %v617 = vpop.f32.mrb[0].mxu0
  %v618 = vadd.f32 %v92, %v617
  %v619 = vpop.f32.mrb[0].mxu0
  %v620 = vpop.f32.mrb[0].mxu0
  %v621 = vadd.f32 %v92, %v620
  %v622 = vpop.f32.mrb[0].mxu0
  %623 = vmatprep.mubr.bf16.mxu0 0
  %624 = vmatmul.mubr.bf16.gmra.mrb[0].mxu0 %v361
  %v625 = vpop.f32.mrb[0].mxu0
  %v626 = vadd.f32 %v92, %v625
  %v627 = vpop.f32.mrb[0].mxu0
  %v628 = vpop.f32.mrb[0].mxu0
  %v629 = vadd.f32 %v92, %v628
  %v630 = vpop.f32.mrb[0].mxu0
  %631 = vmatprep.mubr.bf16.mxu0 0
  %632 = vmatmul.mubr.bf16.gmra.mrb[0].mxu0 %v364
  %v633 = vpop.f32.mrb[0].mxu0
  %v634 = vadd.f32 %v92, %v633
  %v635 = vpop.f32.mrb[0].mxu0
  %v636 = vpop.f32.mrb[0].mxu0
  %v637 = vadd.f32 %v92, %v636
  %v638 = vpop.f32.mrb[0].mxu0
  %639 = vmatprep.mubr.bf16.mxu0 0
  %640 = vmatmul.mubr.bf16.gmra.mrb[0].mxu0 %v367
  %v641 = vpop.f32.mrb[0].mxu0
  %v642 = vadd.f32 %v92, %v641
  %v643 = vpop.f32.mrb[0].mxu0
  %v644 = vpop.f32.mrb[0].mxu0
  %v645 = vadd.f32 %v92, %v644
  %v646 = vpop.f32.mrb[0].mxu0
  %647 = vmatprep.mubr.bf16.mxu0 0
  %648 = vmatmul.mubr.bf16.gmra.mrb[0].mxu0 %v370
  %v649 = vpop.f32.mrb[0].mxu0
  %v650 = vadd.f32 %v92, %v649
  %v651 = vpop.f32.mrb[0].mxu0
  %v652 = vpop.f32.mrb[0].mxu0
  %v653 = vadd.f32 %v92, %v652
  %v654 = vpop.f32.mrb[0].mxu0
  %655 = vmatprep.mubr.bf16.mxu0 0
  %656 = vmatmul.mubr.bf16.gmra.mrb[0].mxu0 %v373
  %v657 = vpop.f32.mrb[0].mxu0
  %v658 = vadd.f32 %v92, %v657
  %v659 = vpop.f32.mrb[0].mxu0
  %v660 = vpop.f32.mrb[0].mxu0
  %v661 = vadd.f32 %v92, %v660
  %v662 = vpop.f32.mrb[0].mxu0
  %663 = vdwg.mxu0
  %v664 = vmax.f32 %v410, 0.0
  %v665 = vmax.f32 %v413, 0.0
  %v666 = vmax.f32 %v418, 0.0
  %v667 = vmax.f32 %v421, 0.0
  %v668 = vmax.f32 %v426, 0.0
  %v669 = vmax.f32 %v429, 0.0
  %v670 = vmax.f32 %v434, 0.0
  %v671 = vmax.f32 %v437, 0.0
  %v672 = vmax.f32 %v442, 0.0
  %v673 = vmax.f32 %v445, 0.0
  %v674 = vmax.f32 %v450, 0.0
  %v675 = vmax.f32 %v453, 0.0
  %v676 = vmax.f32 %v458, 0.0
  %v677 = vmax.f32 %v461, 0.0
  %v678 = vmax.f32 %v466, 0.0
  %v679 = vmax.f32 %v469, 0.0
  %v680 = vmax.f32 %v474, 0.0
  %v681 = vmax.f32 %v477, 0.0
  %v682 = vmax.f32 %v482, 0.0
  %v683 = vmax.f32 %v485, 0.0
  %v684 = vmax.f32 %v490, 0.0
  %v685 = vmax.f32 %v493, 0.0
  %v686 = vmax.f32 %v498, 0.0
  %v687 = vmax.f32 %v501, 0.0
  %v688 = vmax.f32 %v506, 0.0
  %v689 = vmax.f32 %v509, 0.0
  %v690 = vmax.f32 %v514, 0.0
  %v691 = vmax.f32 %v517, 0.0
  %v692 = vmax.f32 %v522, 0.0
  %v693 = vmax.f32 %v525, 0.0
  %v694 = vmax.f32 %v530, 0.0
  %v695 = vmax.f32 %v533, 0.0
  %v696 = vmax.f32 %v538, 0.0
  %v697 = vmax.f32 %v541, 0.0
  %v698 = vmax.f32 %v546, 0.0
  %v699 = vmax.f32 %v549, 0.0
  %v700 = vmax.f32 %v554, 0.0
  %v701 = vmax.f32 %v557, 0.0
  %v702 = vmax.f32 %v562, 0.0
  %v703 = vmax.f32 %v565, 0.0
  %v704 = vmax.f32 %v570, 0.0
  %v705 = vmax.f32 %v573, 0.0
  %v706 = vmax.f32 %v578, 0.0
  %v707 = vmax.f32 %v581, 0.0
  %v708 = vmax.f32 %v586, 0.0
  %v709 = vmax.f32 %v589, 0.0
  %v710 = vmax.f32 %v594, 0.0
  %v711 = vmax.f32 %v597, 0.0
  %v712 = vmax.f32 %v602, 0.0
  %v713 = vmax.f32 %v605, 0.0
  %v714 = vmax.f32 %v610, 0.0
  %v715 = vmax.f32 %v613, 0.0
  %v716 = vmax.f32 %v618, 0.0
  %v717 = vmax.f32 %v621, 0.0
  %v718 = vmax.f32 %v626, 0.0
  %v719 = vmax.f32 %v629, 0.0
  %v720 = vmax.f32 %v634, 0.0
  %v721 = vmax.f32 %v637, 0.0
  %v722 = vmax.f32 %v642, 0.0
  %v723 = vmax.f32 %v645, 0.0
  %v724 = vmax.f32 %v650, 0.0
  %v725 = vmax.f32 %v653, 0.0
  %v726 = vmax.f32 %v658, 0.0
  %v727 = vmax.f32 %v661, 0.0
  %vm728 = vcmask 64512
  %729 = vst.msk [vmem:[%s3] sm:$0xff] %vm728, %v664
  %730 = vst.msk [vmem:[%s3 + $0x8] sm:$0xff] %vm728, %v665
  %731 = vst.msk [vmem:[%s3 + $0x10] sm:$0xff] %vm728, %v666
  %732 = vst.msk [vmem:[%s3 + $0x18] sm:$0xff] %vm728, %v667
  %733 = vst.msk [vmem:[%s3 + $0x20] sm:$0xff] %vm728, %v668
  %734 = vst.msk [vmem:[%s3 + $0x28] sm:$0xff] %vm728, %v669
  %735 = vst.msk [vmem:[%s3 + $0x30] sm:$0xff] %vm728, %v670
  %736 = vst.msk [vmem:[%s3 + $0x38] sm:$0xff] %vm728, %v671
  %737 = vst.msk [vmem:[%s3 + $0x40] sm:$0xff] %vm728, %v672
  %738 = vst.msk [vmem:[%s3 + $0x48] sm:$0xff] %vm728, %v673
  %739 = vst.msk [vmem:[%s3 + $0x50] sm:$0xff] %vm728, %v674
  %740 = vst.msk [vmem:[%s3 + $0x58] sm:$0xff] %vm728, %v675
  %741 = vst.msk [vmem:[%s3 + $0x60] sm:$0xff] %vm728, %v676
  %742 = vst.msk [vmem:[%s3 + $0x68] sm:$0xff] %vm728, %v677
  %743 = vst.msk [vmem:[%s3 + $0x70] sm:$0xff] %vm728, %v678
  %744 = vst.msk [vmem:[%s3 + $0x78] sm:$0xff] %vm728, %v679
  %745 = vst.msk [vmem:[%s3 + $0x80] sm:$0xff] %vm728, %v680
  %746 = vst.msk [vmem:[%s3 + $0x88] sm:$0xff] %vm728, %v681
  %747 = vst.msk [vmem:[%s3 + $0x90] sm:$0xff] %vm728, %v682
  %748 = vst.msk [vmem:[%s3 + $0x98] sm:$0xff] %vm728, %v683
  %749 = vst.msk [vmem:[%s3 + $0xa0] sm:$0xff] %vm728, %v684
  %750 = vst.msk [vmem:[%s3 + $0xa8] sm:$0xff] %vm728, %v685
  %751 = vst.msk [vmem:[%s3 + $0xb0] sm:$0xff] %vm728, %v686
  %752 = vst.msk [vmem:[%s3 + $0xb8] sm:$0xff] %vm728, %v687
  %753 = vst.msk [vmem:[%s3 + $0xc0] sm:$0xff] %vm728, %v688
  %754 = vst.msk [vmem:[%s3 + $0xc8] sm:$0xff] %vm728, %v689
  %755 = vst.msk [vmem:[%s3 + $0xd0] sm:$0xff] %vm728, %v690
  %756 = vst.msk [vmem:[%s3 + $0xd8] sm:$0xff] %vm728, %v691
  %757 = vst.msk [vmem:[%s3 + $0xe0] sm:$0xff] %vm728, %v692
  %758 = vst.msk [vmem:[%s3 + $0xe8] sm:$0xff] %vm728, %v693
  %759 = vst.msk [vmem:[%s3 + $0xf0] sm:$0xff] %vm728, %v694
  %760 = vst.msk [vmem:[%s3 + $0xf8] sm:$0xff] %vm728, %v695
  %761 = vst.msk [vmem:[%s3 + $0x100] sm:$0xff] %vm728, %v696
  %762 = vst.msk [vmem:[%s3 + $0x108] sm:$0xff] %vm728, %v697
  %763 = vst.msk [vmem:[%s3 + $0x110] sm:$0xff] %vm728, %v698
  %764 = vst.msk [vmem:[%s3 + $0x118] sm:$0xff] %vm728, %v699
  %765 = vst.msk [vmem:[%s3 + $0x120] sm:$0xff] %vm728, %v700
  %766 = vst.msk [vmem:[%s3 + $0x128] sm:$0xff] %vm728, %v701
  %767 = vst.msk [vmem:[%s3 + $0x130] sm:$0xff] %vm728, %v702
  %768 = vst.msk [vmem:[%s3 + $0x138] sm:$0xff] %vm728, %v703
  %769 = vst.msk [vmem:[%s3 + $0x140] sm:$0xff] %vm728, %v704
  %770 = vst.msk [vmem:[%s3 + $0x148] sm:$0xff] %vm728, %v705
  %771 = vst.msk [vmem:[%s3 + $0x150] sm:$0xff] %vm728, %v706
  %772 = vst.msk [vmem:[%s3 + $0x158] sm:$0xff] %vm728, %v707
  %773 = vst.msk [vmem:[%s3 + $0x160] sm:$0xff] %vm728, %v708
  %774 = vst.msk [vmem:[%s3 + $0x168] sm:$0xff] %vm728, %v709
  %775 = vst.msk [vmem:[%s3 + $0x170] sm:$0xff] %vm728, %v710
  %776 = vst.msk [vmem:[%s3 + $0x178] sm:$0xff] %vm728, %v711
  %777 = vst.msk [vmem:[%s3 + $0x180] sm:$0xff] %vm728, %v712
  %778 = vst.msk [vmem:[%s3 + $0x188] sm:$0xff] %vm728, %v713
  %779 = vst.msk [vmem:[%s3 + $0x190] sm:$0xff] %vm728, %v714
  %780 = vst.msk [vmem:[%s3 + $0x198] sm:$0xff] %vm728, %v715
  %781 = vst.msk [vmem:[%s3 + $0x1a0] sm:$0xff] %vm728, %v716
  %782 = vst.msk [vmem:[%s3 + $0x1a8] sm:$0xff] %vm728, %v717
  %783 = vst.msk [vmem:[%s3 + $0x1b0] sm:$0xff] %vm728, %v718
  %784 = vst.msk [vmem:[%s3 + $0x1b8] sm:$0xff] %vm728, %v719
  %785 = vst.msk [vmem:[%s3 + $0x1c0] sm:$0xff] %vm728, %v720
  %786 = vst.msk [vmem:[%s3 + $0x1c8] sm:$0xff] %vm728, %v721
  %787 = vst.msk [vmem:[%s3 + $0x1d0] sm:$0xff] %vm728, %v722
  %788 = vst.msk [vmem:[%s3 + $0x1d8] sm:$0xff] %vm728, %v723
  %789 = vst.msk [vmem:[%s3 + $0x1e0] sm:$0xff] %vm728, %v724
  %790 = vst.msk [vmem:[%s3 + $0x1e8] sm:$0xff] %vm728, %v725
  %791 = vst.msk [vmem:[%s3 + $0x1f0] sm:$0xff] %vm728, %v726
  %792 = vst.msk [vmem:[%s3 + $0x1f8] sm:$0xff] %vm728, %v727
  // Predicated region
  $region14: #{autoencoder_forward.26} parent=0 // pred_check
    _
  $region15: #{autoencoder_forward.26} parent=0 // pred_check_branch
    %794 = sbr.rel (0) target = $region17
  $region16: #{autoencoder_forward.26} parent=0 // pred_region
    _
  $region17: #{autoencoder_forward.26} parent=0 // pred_fallthru
    _
  // Predicated region
  $region18: #{autoencoder_forward.26} parent=0 // pred_check
    _
  $region19: #{autoencoder_forward.26} parent=0 // pred_check_branch
    %796 = sbr.rel (0) target = $region21
  $region20: #{autoencoder_forward.26} parent=0 // pred_region
    _
  $region21: #{autoencoder_forward.26} parent=0 // pred_fallthru
    _

// kernel: autoencoder_forward.27
$region0: #{autoencoder_forward.27}
  #allocation0 [shape = 'u32[]', space=smem, size = 0x4, offset = 0x4, fixed_abs, tag = 'smem constant byte address 0x4 - core index']
  #allocation1 [shape = 'u32[144,128]{1,0:T(1,128)}', space=vmem, size = 0x12000, scoped, tag = 'internal scratch']
  %s0 = inlined_call_operand.vmem [shape: bf16[128,128], index: 0, kind: input, shape index: {}]
  %s1 = inlined_call_operand.vmem [shape: bf16[128,16], index: 1, kind: input, shape index: {}]
  %s2 = inlined_call_operand.vmem [shape: f32[1,16], index: 2, kind: input, shape index: {}]
  %s3 = inlined_call_operand.vmem [shape: f32[128,16], index: 3, kind: output, shape index: {}]
  %s4 = sld [smem:[#allocation0]]
  $region22: #{autoencoder_forward.27} parent=0
    _
  %s6 = ssub.s32 1, %s4
  %s7 = scalar_select 0, %s6, %s4
  // Predicated region
  $region2: #{autoencoder_forward.27} parent=0 // pred_check
    _
  $region3: #{autoencoder_forward.27} parent=0 // pred_check_branch
    %9 = sbr.rel (0) target = $region5
  $region4: #{autoencoder_forward.27} parent=0 // pred_region
    _
  $region5: #{autoencoder_forward.27} parent=0 // pred_fallthru
    _
  // Predicated region
  $region6: #{autoencoder_forward.27} parent=0 // pred_check
    _
  $region7: #{autoencoder_forward.27} parent=0 // pred_check_branch
    %11 = sbr.rel (0) target = $region9
  $region8: #{autoencoder_forward.27} parent=0 // pred_region
    _
  $region9: #{autoencoder_forward.27} parent=0 // pred_fallthru
    _
  // Predicated region
  $region10: #{autoencoder_forward.27} parent=0 // pred_check
    _
  $region11: #{autoencoder_forward.27} parent=0 // pred_check_branch
    %13 = sbr.rel (0) target = $region13
  $region12: #{autoencoder_forward.27} parent=0 // pred_region
    _
  $region13: #{autoencoder_forward.27} parent=0 // pred_fallthru
    _
  %v15 = vld [vmem:[%s0] sm:$0xf]
  %v16 = vld [vmem:[%s0 + $0x4] sm:$0xf]
  %v17 = vld [vmem:[%s0 + $0x8] sm:$0xf]
  %v18 = vld [vmem:[%s0 + $0xc] sm:$0xf]
  %v19 = vld [vmem:[%s0 + $0x10] sm:$0xf]
  %v20 = vld [vmem:[%s0 + $0x14] sm:$0xf]
  %v21 = vld [vmem:[%s0 + $0x18] sm:$0xf]
  %v22 = vld [vmem:[%s0 + $0x1c] sm:$0xf]
  %v23 = vld [vmem:[%s0 + $0x20] sm:$0xf]
  %v24 = vld [vmem:[%s0 + $0x24] sm:$0xf]
  %v25 = vld [vmem:[%s0 + $0x28] sm:$0xf]
  %v26 = vld [vmem:[%s0 + $0x2c] sm:$0xf]
  %v27 = vld [vmem:[%s0 + $0x30] sm:$0xf]
  %v28 = vld [vmem:[%s0 + $0x34] sm:$0xf]
  %v29 = vld [vmem:[%s0 + $0x38] sm:$0xf]
  %v30 = vld [vmem:[%s0 + $0x3c] sm:$0xf]
  %v31 = vld [vmem:[%s1] sm:$0xf]
  %v32 = vld [vmem:[%s1 + $0x4] sm:$0xf]
  %v33 = vld [vmem:[%s1 + $0x8] sm:$0xf]
  %v34 = vld [vmem:[%s1 + $0xc] sm:$0xf]
  %v35 = vld [vmem:[%s1 + $0x10] sm:$0xf]
  %v36 = vld [vmem:[%s1 + $0x14] sm:$0xf]
  %v37 = vld [vmem:[%s1 + $0x18] sm:$0xf]
  %v38 = vld [vmem:[%s1 + $0x1c] sm:$0xf]
  %v39 = vld [vmem:[%s1 + $0x20] sm:$0xf]
  %v40 = vld [vmem:[%s1 + $0x24] sm:$0xf]
  %v41 = vld [vmem:[%s1 + $0x28] sm:$0xf]
  %v42 = vld [vmem:[%s1 + $0x2c] sm:$0xf]
  %v43 = vld [vmem:[%s1 + $0x30] sm:$0xf]
  %v44 = vld [vmem:[%s1 + $0x34] sm:$0xf]
  %v45 = vld [vmem:[%s1 + $0x38] sm:$0xf]
  %v46 = vld [vmem:[%s1 + $0x3c] sm:$0xf]
  %v47 = vld [vmem:[%s2] sm:$0x1]
  %v49 = vlaneseq
  %v50 = vshrl.u32 %v49, 7
  %v51 = vsub.s32 0, %v50
  %v52 = vrot.slane %v47, %v51
  %v70 = vunpack.c.l.b16 %v15
  %v71 = vunpack.c.l.b16 %v16
  %v72 = vunpack.c.l.b16 %v17
  %v73 = vunpack.c.l.b16 %v18
  %v74 = vunpack.c.l.b16 %v19
  %v75 = vunpack.c.l.b16 %v20
  %v76 = vunpack.c.l.b16 %v21
  %v77 = vunpack.c.l.b16 %v22
  %v78 = vunpack.c.l.b16 %v23
  %v79 = vunpack.c.l.b16 %v24
  %v80 = vunpack.c.l.b16 %v25
  %v81 = vunpack.c.l.b16 %v26
  %v82 = vunpack.c.l.b16 %v27
  %v83 = vunpack.c.l.b16 %v28
  %v84 = vunpack.c.l.b16 %v29
  %v85 = vunpack.c.l.b16 %v30
  %v86 = vpack.c.b16 %v71, %v70
  %v87 = vpack.c.b16 %v73, %v72
  %v88 = vpack.c.b16 %v75, %v74
  %v89 = vpack.c.b16 %v77, %v76
  %v90 = vpack.c.b16 %v79, %v78
  %v91 = vpack.c.b16 %v81, %v80
  %v92 = vpack.c.b16 %v83, %v82
  %v93 = vpack.c.b16 %v85, %v84
  %v118 = vunpack.c.l.b16 %v31
  %v119 = vunpack.c.l.b16 %v32
  %v120 = vunpack.c.l.b16 %v33
  %v121 = vunpack.c.l.b16 %v34
  %v122 = vunpack.c.l.b16 %v35
  %v123 = vunpack.c.l.b16 %v36
  %v124 = vunpack.c.l.b16 %v37
  %v125 = vunpack.c.l.b16 %v38
  %v126 = vunpack.c.l.b16 %v39
  %v127 = vunpack.c.l.b16 %v40
  %v128 = vunpack.c.l.b16 %v41
  %v129 = vunpack.c.l.b16 %v42
  %v130 = vunpack.c.l.b16 %v43
  %v131 = vunpack.c.l.b16 %v44
  %v132 = vunpack.c.l.b16 %v45
  %v133 = vunpack.c.l.b16 %v46
  %v134 = vpack.c.b16 %v119, %v118
  %v135 = vpack.c.b16 %v121, %v120
  %v136 = vpack.c.b16 %v123, %v122
  %v137 = vpack.c.b16 %v125, %v124
  %v138 = vpack.c.b16 %v127, %v126
  %v139 = vpack.c.b16 %v129, %v128
  %v140 = vpack.c.b16 %v131, %v130
  %v141 = vpack.c.b16 %v133, %v132
  %150 = vmatprep.subr.bf16.mxu0 0
  %151 = vmatpush1.bf16.msra.mxu0 %v134
  %152 = vmatprep.subr.bf16.mxu0 0
  %153 = vmatpush1.bf16.msra.mxu0 %v135
  %154 = vmatprep.subr.bf16.mxu0 0
  %155 = vmatpush1.bf16.msra.mxu0 %v136
  %156 = vmatprep.subr.bf16.mxu0 0
  %157 = vmatpush1.bf16.msra.mxu0 %v137
  %158 = vmatprep.subr.bf16.mxu0 0
  %159 = vmatpush1.bf16.msra.mxu0 %v138
  %160 = vmatprep.subr.bf16.mxu0 0
  %161 = vmatpush1.bf16.msra.mxu0 %v139
  %162 = vmatprep.subr.bf16.mxu0 0
  %163 = vmatpush1.bf16.msra.mxu0 %v140
  %164 = vmatprep.subr.bf16.mxu0 0
  %165 = vmatpush1.bf16.msra.mxu0 %v141
  %166 = vmatprep.subr.bf16.mxu0 0
  %167 = vmatpush1.bf16.msra.mxu0 0
  %168 = vmatprep.subr.bf16.mxu0 0
  %169 = vmatpush1.bf16.msra.mxu0 0
  %170 = vmatprep.subr.bf16.mxu0 0
  %171 = vmatpush1.bf16.msra.mxu0 0
  %172 = vmatprep.subr.bf16.mxu0 0
  %173 = vmatpush1.bf16.msra.mxu0 0
  %174 = vmatprep.subr.bf16.mxu0 0
  %175 = vmatpush1.bf16.msra.mxu0 0
  %176 = vmatprep.subr.bf16.mxu0 0
  %177 = vmatpush1.bf16.msra.mxu0 0
  %178 = vmatprep.subr.bf16.mxu0 0
  %179 = vmatpush1.bf16.msra.mxu0 0
  %180 = vmatprep.subr.bf16.mxu0 0
  %181 = vmatpush1.bf16.msra.mxu0 0
  %182 = vmatprep.mubr.bf16.mxu0 0
  %183 = vmatmul.mubr.bf16.gmra.mrb[0].mxu0 %v86
  %v184 = vpop.f32.mrb[0].mxu0
  %v185 = vadd.f32 %v52, %v184
  %v186 = vpop.f32.mrb[0].mxu0
  %v187 = vpop.f32.mrb[0].mxu0
  %v188 = vadd.f32 %v52, %v187
  %v189 = vpop.f32.mrb[0].mxu0
  %190 = vmatprep.mubr.bf16.mxu0 0
  %191 = vmatmul.mubr.bf16.gmra.mrb[0].mxu0 %v87
  %v192 = vpop.f32.mrb[0].mxu0
  %v193 = vadd.f32 %v52, %v192
  %v194 = vpop.f32.mrb[0].mxu0
  %v195 = vpop.f32.mrb[0].mxu0
  %v196 = vadd.f32 %v52, %v195
  %v197 = vpop.f32.mrb[0].mxu0
  %198 = vmatprep.mubr.bf16.mxu0 0
  %199 = vmatmul.mubr.bf16.gmra.mrb[0].mxu0 %v88
  %v200 = vpop.f32.mrb[0].mxu0
  %v201 = vadd.f32 %v52, %v200
  %v202 = vpop.f32.mrb[0].mxu0
  %v203 = vpop.f32.mrb[0].mxu0
  %v204 = vadd.f32 %v52, %v203
  %v205 = vpop.f32.mrb[0].mxu0
  %206 = vmatprep.mubr.bf16.mxu0 0
  %207 = vmatmul.mubr.bf16.gmra.mrb[0].mxu0 %v89
  %v208 = vpop.f32.mrb[0].mxu0
  %v209 = vadd.f32 %v52, %v208
  %v210 = vpop.f32.mrb[0].mxu0
  %v211 = vpop.f32.mrb[0].mxu0
  %v212 = vadd.f32 %v52, %v211
  %v213 = vpop.f32.mrb[0].mxu0
  %214 = vmatprep.mubr.bf16.mxu0 0
  %215 = vmatmul.mubr.bf16.gmra.mrb[0].mxu0 %v90
  %v216 = vpop.f32.mrb[0].mxu0
  %v217 = vadd.f32 %v52, %v216
  %v218 = vpop.f32.mrb[0].mxu0
  %v219 = vpop.f32.mrb[0].mxu0
  %v220 = vadd.f32 %v52, %v219
  %v221 = vpop.f32.mrb[0].mxu0
  %222 = vmatprep.mubr.bf16.mxu0 0
  %223 = vmatmul.mubr.bf16.gmra.mrb[0].mxu0 %v91
  %v224 = vpop.f32.mrb[0].mxu0
  %v225 = vadd.f32 %v52, %v224
  %v226 = vpop.f32.mrb[0].mxu0
  %v227 = vpop.f32.mrb[0].mxu0
  %v228 = vadd.f32 %v52, %v227
  %v229 = vpop.f32.mrb[0].mxu0
  %230 = vmatprep.mubr.bf16.mxu0 0
  %231 = vmatmul.mubr.bf16.gmra.mrb[0].mxu0 %v92
  %v232 = vpop.f32.mrb[0].mxu0
  %v233 = vadd.f32 %v52, %v232
  %v234 = vpop.f32.mrb[0].mxu0
  %v235 = vpop.f32.mrb[0].mxu0
  %v236 = vadd.f32 %v52, %v235
  %v237 = vpop.f32.mrb[0].mxu0
  %238 = vmatprep.mubr.bf16.mxu0 0
  %239 = vmatmul.mubr.bf16.gmra.mrb[0].mxu0 %v93
  %v240 = vpop.f32.mrb[0].mxu0
  %v241 = vadd.f32 %v52, %v240
  %v242 = vpop.f32.mrb[0].mxu0
  %v243 = vpop.f32.mrb[0].mxu0
  %v244 = vadd.f32 %v52, %v243
  %v245 = vpop.f32.mrb[0].mxu0
  %246 = vdwg.mxu0
  %v247 = vmax.f32 %v185, 0.0
  %v248 = vmax.f32 %v188, 0.0
  %v249 = vmax.f32 %v193, 0.0
  %v250 = vmax.f32 %v196, 0.0
  %v251 = vmax.f32 %v201, 0.0
  %v252 = vmax.f32 %v204, 0.0
  %v253 = vmax.f32 %v209, 0.0
  %v254 = vmax.f32 %v212, 0.0
  %v255 = vmax.f32 %v217, 0.0
  %v256 = vmax.f32 %v220, 0.0
  %v257 = vmax.f32 %v225, 0.0
  %v258 = vmax.f32 %v228, 0.0
  %v259 = vmax.f32 %v233, 0.0
  %v260 = vmax.f32 %v236, 0.0
  %v261 = vmax.f32 %v241, 0.0
  %v262 = vmax.f32 %v244, 0.0
  %vm263 = vcmask 130048
  %264 = vst.msk [vmem:[%s3] sm:$0xff] %vm263, %v247
  %265 = vst.msk [vmem:[%s3 + $0x8] sm:$0xff] %vm263, %v248
  %266 = vst.msk [vmem:[%s3 + $0x10] sm:$0xff] %vm263, %v249
  %267 = vst.msk [vmem:[%s3 + $0x18] sm:$0xff] %vm263, %v250
  %268 = vst.msk [vmem:[%s3 + $0x20] sm:$0xff] %vm263, %v251
  %269 = vst.msk [vmem:[%s3 + $0x28] sm:$0xff] %vm263, %v252
  %270 = vst.msk [vmem:[%s3 + $0x30] sm:$0xff] %vm263, %v253
  %271 = vst.msk [vmem:[%s3 + $0x38] sm:$0xff] %vm263, %v254
  %272 = vst.msk [vmem:[%s3 + $0x40] sm:$0xff] %vm263, %v255
  %273 = vst.msk [vmem:[%s3 + $0x48] sm:$0xff] %vm263, %v256
  %274 = vst.msk [vmem:[%s3 + $0x50] sm:$0xff] %vm263, %v257
  %275 = vst.msk [vmem:[%s3 + $0x58] sm:$0xff] %vm263, %v258
  %276 = vst.msk [vmem:[%s3 + $0x60] sm:$0xff] %vm263, %v259
  %277 = vst.msk [vmem:[%s3 + $0x68] sm:$0xff] %vm263, %v260
  %278 = vst.msk [vmem:[%s3 + $0x70] sm:$0xff] %vm263, %v261
  %279 = vst.msk [vmem:[%s3 + $0x78] sm:$0xff] %vm263, %v262
  // Predicated region
  $region14: #{autoencoder_forward.27} parent=0 // pred_check
    _
  $region15: #{autoencoder_forward.27} parent=0 // pred_check_branch
    %281 = sbr.rel (0) target = $region17
  $region16: #{autoencoder_forward.27} parent=0 // pred_region
    _
  $region17: #{autoencoder_forward.27} parent=0 // pred_fallthru
    _
  // Predicated region
  $region18: #{autoencoder_forward.27} parent=0 // pred_check
    _
  $region19: #{autoencoder_forward.27} parent=0 // pred_check_branch
    %283 = sbr.rel (0) target = $region21
  $region20: #{autoencoder_forward.27} parent=0 // pred_region
    _
  $region21: #{autoencoder_forward.27} parent=0 // pred_fallthru
    _

// kernel: autoencoder_forward.28
$region0: #{autoencoder_forward.28}
  #allocation0 [shape = 'u32[]', space=smem, size = 0x4, offset = 0x4, fixed_abs, tag = 'smem constant byte address 0x4 - core index']
  #allocation1 [shape = 'u32[144,128]{1,0:T(1,128)}', space=vmem, size = 0x12000, scoped, tag = 'internal scratch']
  %s0 = inlined_call_operand.vmem [shape: bf16[32,256], index: 0, kind: input, shape index: {}]
  %s1 = inlined_call_operand.vmem [shape: bf16[256,32], index: 1, kind: input, shape index: {}]
  %s2 = inlined_call_operand.vmem [shape: f32[1,32], index: 2, kind: input, shape index: {}]
  %s3 = inlined_call_operand.vmem [shape: f32[32,32], index: 3, kind: output, shape index: {}]
  %s4 = sld [smem:[#allocation0]]
  $region22: #{autoencoder_forward.28} parent=0
    _
  %s6 = ssub.s32 1, %s4
  %s7 = scalar_select 0, %s6, %s4
  // Predicated region
  $region2: #{autoencoder_forward.28} parent=0 // pred_check
    _
  $region3: #{autoencoder_forward.28} parent=0 // pred_check_branch
    %9 = sbr.rel (0) target = $region5
  $region4: #{autoencoder_forward.28} parent=0 // pred_region
    _
  $region5: #{autoencoder_forward.28} parent=0 // pred_fallthru
    _
  // Predicated region
  $region6: #{autoencoder_forward.28} parent=0 // pred_check
    _
  $region7: #{autoencoder_forward.28} parent=0 // pred_check_branch
    %11 = sbr.rel (0) target = $region9
  $region8: #{autoencoder_forward.28} parent=0 // pred_region
    _
  $region9: #{autoencoder_forward.28} parent=0 // pred_fallthru
    _
  // Predicated region
  $region10: #{autoencoder_forward.28} parent=0 // pred_check
    _
  $region11: #{autoencoder_forward.28} parent=0 // pred_check_branch
    %13 = sbr.rel (0) target = $region13
  $region12: #{autoencoder_forward.28} parent=0 // pred_region
    _
  $region13: #{autoencoder_forward.28} parent=0 // pred_fallthru
    _
  %v15 = vld [vmem:[%s0] sm:$0xff]
  %v16 = vld [vmem:[%s0 + $0x8] sm:$0xff]
  %v17 = vld [vmem:[%s0 + $0x10] sm:$0xff]
  %v18 = vld [vmem:[%s0 + $0x18] sm:$0xff]
  %v19 = vld [vmem:[%s1] sm:$0xf]
  %v20 = vld [vmem:[%s1 + $0x4] sm:$0xf]
  %v21 = vld [vmem:[%s1 + $0x8] sm:$0xf]
  %v22 = vld [vmem:[%s1 + $0xc] sm:$0xf]
  %v23 = vld [vmem:[%s1 + $0x10] sm:$0xf]
  %v24 = vld [vmem:[%s1 + $0x14] sm:$0xf]
  %v25 = vld [vmem:[%s1 + $0x18] sm:$0xf]
  %v26 = vld [vmem:[%s1 + $0x1c] sm:$0xf]
  %v27 = vld [vmem:[%s1 + $0x20] sm:$0xf]
  %v28 = vld [vmem:[%s1 + $0x24] sm:$0xf]
  %v29 = vld [vmem:[%s1 + $0x28] sm:$0xf]
  %v30 = vld [vmem:[%s1 + $0x2c] sm:$0xf]
  %v31 = vld [vmem:[%s1 + $0x30] sm:$0xf]
  %v32 = vld [vmem:[%s1 + $0x34] sm:$0xf]
  %v33 = vld [vmem:[%s1 + $0x38] sm:$0xf]
  %v34 = vld [vmem:[%s1 + $0x3c] sm:$0xf]
  %v35 = vld [vmem:[%s1 + $0x40] sm:$0xf]
  %v36 = vld [vmem:[%s1 + $0x44] sm:$0xf]
  %v37 = vld [vmem:[%s1 + $0x48] sm:$0xf]
  %v38 = vld [vmem:[%s1 + $0x4c] sm:$0xf]
  %v39 = vld [vmem:[%s1 + $0x50] sm:$0xf]
  %v40 = vld [vmem:[%s1 + $0x54] sm:$0xf]
  %v41 = vld [vmem:[%s1 + $0x58] sm:$0xf]
  %v42 = vld [vmem:[%s1 + $0x5c] sm:$0xf]
  %v43 = vld [vmem:[%s1 + $0x60] sm:$0xf]
  %v44 = vld [vmem:[%s1 + $0x64] sm:$0xf]
  %v45 = vld [vmem:[%s1 + $0x68] sm:$0xf]
  %v46 = vld [vmem:[%s1 + $0x6c] sm:$0xf]
  %v47 = vld [vmem:[%s1 + $0x70] sm:$0xf]
  %v48 = vld [vmem:[%s1 + $0x74] sm:$0xf]
  %v49 = vld [vmem:[%s1 + $0x78] sm:$0xf]
  %v50 = vld [vmem:[%s1 + $0x7c] sm:$0xf]
  %v51 = vld [vmem:[%s2] sm:$0x1]
  %v53 = vlaneseq
  %v54 = vshrl.u32 %v53, 7
  %v55 = vsub.s32 0, %v54
  %v56 = vrot.slane %v51, %v55
  %v62 = vunpack.c.l.b16 %v15
  %v63 = vunpack.c.h.b16 %v15
  %v64 = vunpack.c.l.b16 %v16
  %v65 = vunpack.c.h.b16 %v16
  %v66 = vunpack.c.l.b16 %v17
  %v67 = vunpack.c.h.b16 %v17
  %v68 = vunpack.c.l.b16 %v18
  %v69 = vunpack.c.h.b16 %v18
  %v70 = vpack.c.b16 %v64, %v62
  %v71 = vpack.c.b16 %v65, %v63
  %v72 = vpack.c.b16 %v68, %v66
  %v73 = vpack.c.b16 %v69, %v67
  %v110 = vunpack.c.l.b16 %v19
  %v111 = vunpack.c.l.b16 %v20
  %v112 = vunpack.c.l.b16 %v21
  %v113 = vunpack.c.l.b16 %v22
  %v114 = vunpack.c.l.b16 %v23
  %v115 = vunpack.c.l.b16 %v24
  %v116 = vunpack.c.l.b16 %v25
  %v117 = vunpack.c.l.b16 %v26
  %v118 = vunpack.c.l.b16 %v27
  %v119 = vunpack.c.l.b16 %v28
  %v120 = vunpack.c.l.b16 %v29
  %v121 = vunpack.c.l.b16 %v30
  %v122 = vunpack.c.l.b16 %v31
  %v123 = vunpack.c.l.b16 %v32
  %v124 = vunpack.c.l.b16 %v33
  %v125 = vunpack.c.l.b16 %v34
  %v126 = vunpack.c.l.b16 %v35
  %v127 = vunpack.c.l.b16 %v36
  %v128 = vunpack.c.l.b16 %v37
  %v129 = vunpack.c.l.b16 %v38
  %v130 = vunpack.c.l.b16 %v39
  %v131 = vunpack.c.l.b16 %v40
  %v132 = vunpack.c.l.b16 %v41
  %v133 = vunpack.c.l.b16 %v42
  %v134 = vunpack.c.l.b16 %v43
  %v135 = vunpack.c.l.b16 %v44
  %v136 = vunpack.c.l.b16 %v45
  %v137 = vunpack.c.l.b16 %v46
  %v138 = vunpack.c.l.b16 %v47
  %v139 = vunpack.c.l.b16 %v48
  %v140 = vunpack.c.l.b16 %v49
  %v141 = vunpack.c.l.b16 %v50
  %v142 = vpack.c.b16 %v111, %v110
  %v143 = vpack.c.b16 %v113, %v112
  %v144 = vpack.c.b16 %v115, %v114
  %v145 = vpack.c.b16 %v117, %v116
  %v146 = vpack.c.b16 %v119, %v118
  %v147 = vpack.c.b16 %v121, %v120
  %v148 = vpack.c.b16 %v123, %v122
  %v149 = vpack.c.b16 %v125, %v124
  %v150 = vpack.c.b16 %v127, %v126
  %v151 = vpack.c.b16 %v129, %v128
  %v152 = vpack.c.b16 %v131, %v130
  %v153 = vpack.c.b16 %v133, %v132
  %v154 = vpack.c.b16 %v135, %v134
  %v155 = vpack.c.b16 %v137, %v136
  %v156 = vpack.c.b16 %v139, %v138
  %v157 = vpack.c.b16 %v141, %v140
  %174 = vmatprep.subr.bf16.mxu0 0
  %175 = vmatpush1.bf16.msra.mxu0 %v142
  %176 = vmatprep.subr.bf16.mxu0 0
  %177 = vmatpush1.bf16.msra.mxu0 %v143
  %178 = vmatprep.subr.bf16.mxu0 0
  %179 = vmatpush1.bf16.msra.mxu0 %v144
  %180 = vmatprep.subr.bf16.mxu0 0
  %181 = vmatpush1.bf16.msra.mxu0 %v145
  %182 = vmatprep.subr.bf16.mxu0 0
  %183 = vmatpush1.bf16.msra.mxu0 %v146
  %184 = vmatprep.subr.bf16.mxu0 0
  %185 = vmatpush1.bf16.msra.mxu0 %v147
  %186 = vmatprep.subr.bf16.mxu0 0
  %187 = vmatpush1.bf16.msra.mxu0 %v148
  %188 = vmatprep.subr.bf16.mxu0 0
  %189 = vmatpush1.bf16.msra.mxu0 %v149
  %190 = vmatprep.subr.bf16.mxu0 0
  %191 = vmatpush1.bf16.msra.mxu0 %v150
  %192 = vmatprep.subr.bf16.mxu0 0
  %193 = vmatpush1.bf16.msra.mxu0 %v151
  %194 = vmatprep.subr.bf16.mxu0 0
  %195 = vmatpush1.bf16.msra.mxu0 %v152
  %196 = vmatprep.subr.bf16.mxu0 0
  %197 = vmatpush1.bf16.msra.mxu0 %v153
  %198 = vmatprep.subr.bf16.mxu0 0
  %199 = vmatpush1.bf16.msra.mxu0 %v154
  %200 = vmatprep.subr.bf16.mxu0 0
  %201 = vmatpush1.bf16.msra.mxu0 %v155
  %202 = vmatprep.subr.bf16.mxu0 0
  %203 = vmatpush1.bf16.msra.mxu0 %v156
  %204 = vmatprep.subr.bf16.mxu0 0
  %205 = vmatpush1.bf16.msra.mxu0 %v157
  %206 = vmatprep.mubr.bf16.mxu0 %v71
  %207 = vmatmul.mubr.bf16.gmra.mrb[0].mxu0 %v70
  %v208 = vpop.f32.mrb[0].mxu0
  %v209 = vadd.f32 %v56, %v208
  %v210 = vpop.f32.mrb[0].mxu0
  %v211 = vpop.f32.mrb[0].mxu0
  %v212 = vadd.f32 %v56, %v211
  %v213 = vpop.f32.mrb[0].mxu0
  %214 = vmatprep.mubr.bf16.mxu0 %v73
  %215 = vmatmul.mubr.bf16.gmra.mrb[0].mxu0 %v72
  %v216 = vpop.f32.mrb[0].mxu0
  %v217 = vadd.f32 %v56, %v216
  %v218 = vpop.f32.mrb[0].mxu0
  %v219 = vpop.f32.mrb[0].mxu0
  %v220 = vadd.f32 %v56, %v219
  %v221 = vpop.f32.mrb[0].mxu0
  %222 = vdwg.mxu0
  %v223 = vmax.f32 %v209, 0.0
  %v224 = vmax.f32 %v212, 0.0
  %v225 = vmax.f32 %v217, 0.0
  %v226 = vmax.f32 %v220, 0.0
  %vm227 = vcmask 261120
  %228 = vst.msk [vmem:[%s3] sm:$0xff] %vm227, %v223
  %229 = vst.msk [vmem:[%s3 + $0x8] sm:$0xff] %vm227, %v224
  %230 = vst.msk [vmem:[%s3 + $0x10] sm:$0xff] %vm227, %v225
  %231 = vst.msk [vmem:[%s3 + $0x18] sm:$0xff] %vm227, %v226
  // Predicated region
  $region14: #{autoencoder_forward.28} parent=0 // pred_check
    _
  $region15: #{autoencoder_forward.28} parent=0 // pred_check_branch
    %233 = sbr.rel (0) target = $region17
  $region16: #{autoencoder_forward.28} parent=0 // pred_region
    _
  $region17: #{autoencoder_forward.28} parent=0 // pred_fallthru
    _
  // Predicated region
  $region18: #{autoencoder_forward.28} parent=0 // pred_check
    _
  $region19: #{autoencoder_forward.28} parent=0 // pred_check_branch
    %235 = sbr.rel (0) target = $region21
  $region20: #{autoencoder_forward.28} parent=0 // pred_region
    _
  $region21: #{autoencoder_forward.28} parent=0 // pred_fallthru
    _

// kernel: autoencoder_forward.29
$region0: #{autoencoder_forward.29}
  #allocation0 [shape = 'u32[]', space=smem, size = 0x4, offset = 0x4, fixed_abs, tag = 'smem constant byte address 0x4 - core index']
  #allocation1 [shape = 'u32[144,128]{1,0:T(1,128)}', space=vmem, size = 0x12000, scoped, tag = 'internal scratch']
  %s0 = inlined_call_operand.vmem [shape: bf16[8,512], index: 0, kind: input, shape index: {}]
  %s1 = inlined_call_operand.vmem [shape: bf16[512,64], index: 1, kind: input, shape index: {}]
  %s2 = inlined_call_operand.vmem [shape: f32[1,64], index: 2, kind: input, shape index: {}]
  %s3 = inlined_call_operand.vmem [shape: f32[8,64], index: 3, kind: output, shape index: {}]
  %s4 = sld [smem:[#allocation0]]
  $region22: #{autoencoder_forward.29} parent=0
    _
  %s6 = ssub.s32 1, %s4
  %s7 = scalar_select 0, %s6, %s4
  // Predicated region
  $region2: #{autoencoder_forward.29} parent=0 // pred_check
    _
  $region3: #{autoencoder_forward.29} parent=0 // pred_check_branch
    %9 = sbr.rel (0) target = $region5
  $region4: #{autoencoder_forward.29} parent=0 // pred_region
    _
  $region5: #{autoencoder_forward.29} parent=0 // pred_fallthru
    _
  // Predicated region
  $region6: #{autoencoder_forward.29} parent=0 // pred_check
    _
  $region7: #{autoencoder_forward.29} parent=0 // pred_check_branch
    %11 = sbr.rel (0) target = $region9
  $region8: #{autoencoder_forward.29} parent=0 // pred_region
    _
  $region9: #{autoencoder_forward.29} parent=0 // pred_fallthru
    _
  // Predicated region
  $region10: #{autoencoder_forward.29} parent=0 // pred_check
    _
  $region11: #{autoencoder_forward.29} parent=0 // pred_check_branch
    %13 = sbr.rel (0) target = $region13
  $region12: #{autoencoder_forward.29} parent=0 // pred_region
    _
  $region13: #{autoencoder_forward.29} parent=0 // pred_fallthru
    _
  %v15 = vld [vmem:[%s0] sm:$0xff]
  %v16 = vld [vmem:[%s0 + $0x8] sm:$0xff]
  %v17 = vld [vmem:[%s1] sm:$0xf]
  %v18 = vld [vmem:[%s1 + $0x4] sm:$0xf]
  %v19 = vld [vmem:[%s1 + $0x8] sm:$0xf]
  %v20 = vld [vmem:[%s1 + $0xc] sm:$0xf]
  %v21 = vld [vmem:[%s1 + $0x10] sm:$0xf]
  %v22 = vld [vmem:[%s1 + $0x14] sm:$0xf]
  %v23 = vld [vmem:[%s1 + $0x18] sm:$0xf]
  %v24 = vld [vmem:[%s1 + $0x1c] sm:$0xf]
  %v25 = vld [vmem:[%s1 + $0x20] sm:$0xf]
  %v26 = vld [vmem:[%s1 + $0x24] sm:$0xf]
  %v27 = vld [vmem:[%s1 + $0x28] sm:$0xf]
  %v28 = vld [vmem:[%s1 + $0x2c] sm:$0xf]
  %v29 = vld [vmem:[%s1 + $0x30] sm:$0xf]
  %v30 = vld [vmem:[%s1 + $0x34] sm:$0xf]
  %v31 = vld [vmem:[%s1 + $0x38] sm:$0xf]
  %v32 = vld [vmem:[%s1 + $0x3c] sm:$0xf]
  %v33 = vld [vmem:[%s1 + $0x40] sm:$0xf]
  %v34 = vld [vmem:[%s1 + $0x44] sm:$0xf]
  %v35 = vld [vmem:[%s1 + $0x48] sm:$0xf]
  %v36 = vld [vmem:[%s1 + $0x4c] sm:$0xf]
  %v37 = vld [vmem:[%s1 + $0x50] sm:$0xf]
  %v38 = vld [vmem:[%s1 + $0x54] sm:$0xf]
  %v39 = vld [vmem:[%s1 + $0x58] sm:$0xf]
  %v40 = vld [vmem:[%s1 + $0x5c] sm:$0xf]
  %v41 = vld [vmem:[%s1 + $0x60] sm:$0xf]
  %v42 = vld [vmem:[%s1 + $0x64] sm:$0xf]
  %v43 = vld [vmem:[%s1 + $0x68] sm:$0xf]
  %v44 = vld [vmem:[%s1 + $0x6c] sm:$0xf]
  %v45 = vld [vmem:[%s1 + $0x70] sm:$0xf]
  %v46 = vld [vmem:[%s1 + $0x74] sm:$0xf]
  %v47 = vld [vmem:[%s1 + $0x78] sm:$0xf]
  %v48 = vld [vmem:[%s1 + $0x7c] sm:$0xf]
  %v49 = vld [vmem:[%s1 + $0x80] sm:$0xf]
  %v50 = vld [vmem:[%s1 + $0x84] sm:$0xf]
  %v51 = vld [vmem:[%s1 + $0x88] sm:$0xf]
  %v52 = vld [vmem:[%s1 + $0x8c] sm:$0xf]
  %v53 = vld [vmem:[%s1 + $0x90] sm:$0xf]
  %v54 = vld [vmem:[%s1 + $0x94] sm:$0xf]
  %v55 = vld [vmem:[%s1 + $0x98] sm:$0xf]
  %v56 = vld [vmem:[%s1 + $0x9c] sm:$0xf]
  %v57 = vld [vmem:[%s1 + $0xa0] sm:$0xf]
  %v58 = vld [vmem:[%s1 + $0xa4] sm:$0xf]
  %v59 = vld [vmem:[%s1 + $0xa8] sm:$0xf]
  %v60 = vld [vmem:[%s1 + $0xac] sm:$0xf]
  %v61 = vld [vmem:[%s1 + $0xb0] sm:$0xf]
  %v62 = vld [vmem:[%s1 + $0xb4] sm:$0xf]
  %v63 = vld [vmem:[%s1 + $0xb8] sm:$0xf]
  %v64 = vld [vmem:[%s1 + $0xbc] sm:$0xf]
  %v65 = vld [vmem:[%s1 + $0xc0] sm:$0xf]
  %v66 = vld [vmem:[%s1 + $0xc4] sm:$0xf]
  %v67 = vld [vmem:[%s1 + $0xc8] sm:$0xf]
  %v68 = vld [vmem:[%s1 + $0xcc] sm:$0xf]
  %v69 = vld [vmem:[%s1 + $0xd0] sm:$0xf]
  %v70 = vld [vmem:[%s1 + $0xd4] sm:$0xf]
  %v71 = vld [vmem:[%s1 + $0xd8] sm:$0xf]
  %v72 = vld [vmem:[%s1 + $0xdc] sm:$0xf]
  %v73 = vld [vmem:[%s1 + $0xe0] sm:$0xf]
  %v74 = vld [vmem:[%s1 + $0xe4] sm:$0xf]
  %v75 = vld [vmem:[%s1 + $0xe8] sm:$0xf]
  %v76 = vld [vmem:[%s1 + $0xec] sm:$0xf]
  %v77 = vld [vmem:[%s1 + $0xf0] sm:$0xf]
  %v78 = vld [vmem:[%s1 + $0xf4] sm:$0xf]
  %v79 = vld [vmem:[%s1 + $0xf8] sm:$0xf]
  %v80 = vld [vmem:[%s1 + $0xfc] sm:$0xf]
  %v81 = vld [vmem:[%s2] sm:$0x1]
  %v83 = vlaneseq
  %v84 = vshrl.u32 %v83, 7
  %v85 = vsub.s32 0, %v84
  %v86 = vrot.slane %v81, %v85
  %v90 = vunpack.c.l.b16 %v15
  %v91 = vunpack.c.h.b16 %v15
  %v92 = vunpack.c.l.b16 %v16
  %v93 = vunpack.c.h.b16 %v16
  %v94 = vpack.c.b16 %v90, %v90
  %v95 = vpack.c.b16 %v91, %v91
  %v96 = vpack.c.b16 %v92, %v92
  %v97 = vpack.c.b16 %v93, %v93
  %v166 = vunpack.c.l.b16 %v17
  %v167 = vunpack.c.l.b16 %v18
  %v168 = vunpack.c.l.b16 %v19
  %v169 = vunpack.c.l.b16 %v20
  %v170 = vunpack.c.l.b16 %v21
  %v171 = vunpack.c.l.b16 %v22
  %v172 = vunpack.c.l.b16 %v23
  %v173 = vunpack.c.l.b16 %v24
  %v174 = vunpack.c.l.b16 %v25
  %v175 = vunpack.c.l.b16 %v26
  %v176 = vunpack.c.l.b16 %v27
  %v177 = vunpack.c.l.b16 %v28
  %v178 = vunpack.c.l.b16 %v29
  %v179 = vunpack.c.l.b16 %v30
  %v180 = vunpack.c.l.b16 %v31
  %v181 = vunpack.c.l.b16 %v32
  %v182 = vunpack.c.l.b16 %v33
  %v183 = vunpack.c.l.b16 %v34
  %v184 = vunpack.c.l.b16 %v35
  %v185 = vunpack.c.l.b16 %v36
  %v186 = vunpack.c.l.b16 %v37
  %v187 = vunpack.c.l.b16 %v38
  %v188 = vunpack.c.l.b16 %v39
  %v189 = vunpack.c.l.b16 %v40
  %v190 = vunpack.c.l.b16 %v41
  %v191 = vunpack.c.l.b16 %v42
  %v192 = vunpack.c.l.b16 %v43
  %v193 = vunpack.c.l.b16 %v44
  %v194 = vunpack.c.l.b16 %v45
  %v195 = vunpack.c.l.b16 %v46
  %v196 = vunpack.c.l.b16 %v47
  %v197 = vunpack.c.l.b16 %v48
  %v198 = vunpack.c.l.b16 %v49
  %v199 = vunpack.c.l.b16 %v50
  %v200 = vunpack.c.l.b16 %v51
  %v201 = vunpack.c.l.b16 %v52
  %v202 = vunpack.c.l.b16 %v53
  %v203 = vunpack.c.l.b16 %v54
  %v204 = vunpack.c.l.b16 %v55
  %v205 = vunpack.c.l.b16 %v56
  %v206 = vunpack.c.l.b16 %v57
  %v207 = vunpack.c.l.b16 %v58
  %v208 = vunpack.c.l.b16 %v59
  %v209 = vunpack.c.l.b16 %v60
  %v210 = vunpack.c.l.b16 %v61
  %v211 = vunpack.c.l.b16 %v62
  %v212 = vunpack.c.l.b16 %v63
  %v213 = vunpack.c.l.b16 %v64
  %v214 = vunpack.c.l.b16 %v65
  %v215 = vunpack.c.l.b16 %v66
  %v216 = vunpack.c.l.b16 %v67
  %v217 = vunpack.c.l.b16 %v68
  %v218 = vunpack.c.l.b16 %v69
  %v219 = vunpack.c.l.b16 %v70
  %v220 = vunpack.c.l.b16 %v71
  %v221 = vunpack.c.l.b16 %v72
  %v222 = vunpack.c.l.b16 %v73
  %v223 = vunpack.c.l.b16 %v74
  %v224 = vunpack.c.l.b16 %v75
  %v225 = vunpack.c.l.b16 %v76
  %v226 = vunpack.c.l.b16 %v77
  %v227 = vunpack.c.l.b16 %v78
  %v228 = vunpack.c.l.b16 %v79
  %v229 = vunpack.c.l.b16 %v80
  %v230 = vpack.c.b16 %v167, %v166
  %v231 = vpack.c.b16 %v169, %v168
  %v232 = vpack.c.b16 %v171, %v170
  %v233 = vpack.c.b16 %v173, %v172
  %v234 = vpack.c.b16 %v175, %v174
  %v235 = vpack.c.b16 %v177, %v176
  %v236 = vpack.c.b16 %v179, %v178
  %v237 = vpack.c.b16 %v181, %v180
  %v238 = vpack.c.b16 %v183, %v182
  %v239 = vpack.c.b16 %v185, %v184
  %v240 = vpack.c.b16 %v187, %v186
  %v241 = vpack.c.b16 %v189, %v188
  %v242 = vpack.c.b16 %v191, %v190
  %v243 = vpack.c.b16 %v193, %v192
  %v244 = vpack.c.b16 %v195, %v194
  %v245 = vpack.c.b16 %v197, %v196
  %v246 = vpack.c.b16 %v199, %v198
  %v247 = vpack.c.b16 %v201, %v200
  %v248 = vpack.c.b16 %v203, %v202
  %v249 = vpack.c.b16 %v205, %v204
  %v250 = vpack.c.b16 %v207, %v206
  %v251 = vpack.c.b16 %v209, %v208
  %v252 = vpack.c.b16 %v211, %v210
  %v253 = vpack.c.b16 %v213, %v212
  %v254 = vpack.c.b16 %v215, %v214
  %v255 = vpack.c.b16 %v217, %v216
  %v256 = vpack.c.b16 %v219, %v218
  %v257 = vpack.c.b16 %v221, %v220
  %v258 = vpack.c.b16 %v223, %v222
  %v259 = vpack.c.b16 %v225, %v224
  %v260 = vpack.c.b16 %v227, %v226
  %v261 = vpack.c.b16 %v229, %v228
  %294 = vmatprep.subr.bf16.mxu0 0
  %295 = vmatpush1.bf16.msra.mxu0 %v230
  %296 = vmatprep.subr.bf16.mxu0 0
  %297 = vmatpush1.bf16.msra.mxu0 %v231
  %298 = vmatprep.subr.bf16.mxu0 0
  %299 = vmatpush1.bf16.msra.mxu0 %v232
  %300 = vmatprep.subr.bf16.mxu0 0
  %301 = vmatpush1.bf16.msra.mxu0 %v233
  %302 = vmatprep.subr.bf16.mxu0 0
  %303 = vmatpush1.bf16.msra.mxu0 %v234
  %304 = vmatprep.subr.bf16.mxu0 0
  %305 = vmatpush1.bf16.msra.mxu0 %v235
  %306 = vmatprep.subr.bf16.mxu0 0
  %307 = vmatpush1.bf16.msra.mxu0 %v236
  %308 = vmatprep.subr.bf16.mxu0 0
  %309 = vmatpush1.bf16.msra.mxu0 %v237
  %310 = vmatprep.subr.bf16.mxu0 0
  %311 = vmatpush1.bf16.msra.mxu0 %v238
  %312 = vmatprep.subr.bf16.mxu0 0
  %313 = vmatpush1.bf16.msra.mxu0 %v239
  %314 = vmatprep.subr.bf16.mxu0 0
  %315 = vmatpush1.bf16.msra.mxu0 %v240
  %316 = vmatprep.subr.bf16.mxu0 0
  %317 = vmatpush1.bf16.msra.mxu0 %v241
  %318 = vmatprep.subr.bf16.mxu0 0
  %319 = vmatpush1.bf16.msra.mxu0 %v242
  %320 = vmatprep.subr.bf16.mxu0 0
  %321 = vmatpush1.bf16.msra.mxu0 %v243
  %322 = vmatprep.subr.bf16.mxu0 0
  %323 = vmatpush1.bf16.msra.mxu0 %v244
  %324 = vmatprep.subr.bf16.mxu0 0
  %325 = vmatpush1.bf16.msra.mxu0 %v245
  %326 = vmatprep.mubr.bf16.mxu0 %v95
  %327 = vmatmul.mubr.bf16.gmra.mrb[0].mxu0 %v94
  %v328 = vpop.f32.mrb[0].mxu0
  %v329 = vadd.f32 %v86, %v328
  %v330 = vpop.f32.mrb[0].mxu0
  %v331 = vpop.f32.mrb[0].mxu0
  %v332 = vpop.f32.mrb[0].mxu0
  %333 = vdwg.mxu0
  %334 = vmatprep.subr.bf16.mxu0 0
  %335 = vmatpush1.bf16.msra.mxu0 %v246
  %336 = vmatprep.subr.bf16.mxu0 0
  %337 = vmatpush1.bf16.msra.mxu0 %v247
  %338 = vmatprep.subr.bf16.mxu0 0
  %339 = vmatpush1.bf16.msra.mxu0 %v248
  %340 = vmatprep.subr.bf16.mxu0 0
  %341 = vmatpush1.bf16.msra.mxu0 %v249
  %342 = vmatprep.subr.bf16.mxu0 0
  %343 = vmatpush1.bf16.msra.mxu0 %v250
  %344 = vmatprep.subr.bf16.mxu0 0
  %345 = vmatpush1.bf16.msra.mxu0 %v251
  %346 = vmatprep.subr.bf16.mxu0 0
  %347 = vmatpush1.bf16.msra.mxu0 %v252
  %348 = vmatprep.subr.bf16.mxu0 0
  %349 = vmatpush1.bf16.msra.mxu0 %v253
  %350 = vmatprep.subr.bf16.mxu0 0
  %351 = vmatpush1.bf16.msra.mxu0 %v254
  %352 = vmatprep.subr.bf16.mxu0 0
  %353 = vmatpush1.bf16.msra.mxu0 %v255
  %354 = vmatprep.subr.bf16.mxu0 0
  %355 = vmatpush1.bf16.msra.mxu0 %v256
  %356 = vmatprep.subr.bf16.mxu0 0
  %357 = vmatpush1.bf16.msra.mxu0 %v257
  %358 = vmatprep.subr.bf16.mxu0 0
  %359 = vmatpush1.bf16.msra.mxu0 %v258
  %360 = vmatprep.subr.bf16.mxu0 0
  %361 = vmatpush1.bf16.msra.mxu0 %v259
  %362 = vmatprep.subr.bf16.mxu0 0
  %363 = vmatpush1.bf16.msra.mxu0 %v260
  %364 = vmatprep.subr.bf16.mxu0 0
  %365 = vmatpush1.bf16.msra.mxu0 %v261
  %366 = vmatprep.mubr.bf16.mxu0 %v97
  %367 = vmatmul.mubr.bf16.gmra.mrb[0].mxu0 %v96
  %v368 = vpop.f32.mrb[0].mxu0
  %v369 = vadd.f32 %v329, %v368
  %v370 = vpop.f32.mrb[0].mxu0
  %v371 = vpop.f32.mrb[0].mxu0
  %v372 = vpop.f32.mrb[0].mxu0
  %373 = vdwg.mxu0
  %v374 = vmax.f32 %v369, 0.0
  %vm375 = vcmask 523264
  %376 = vst.msk [vmem:[%s3] sm:$0xff] %vm375, %v374
  // Predicated region
  $region14: #{autoencoder_forward.29} parent=0 // pred_check
    _
  $region15: #{autoencoder_forward.29} parent=0 // pred_check_branch
    %378 = sbr.rel (0) target = $region17
  $region16: #{autoencoder_forward.29} parent=0 // pred_region
    _
  $region17: #{autoencoder_forward.29} parent=0 // pred_fallthru
    _
  // Predicated region
  $region18: #{autoencoder_forward.29} parent=0 // pred_check
    _
  $region19: #{autoencoder_forward.29} parent=0 // pred_check_branch
    %380 = sbr.rel (0) target = $region21
  $region20: #{autoencoder_forward.29} parent=0 // pred_region
    _
  $region21: #{autoencoder_forward.29} parent=0 // pred_fallthru
    _

// kernel: autoencoder_forward.30
$region0: #{autoencoder_forward.30}
  #allocation0 [shape = 'u32[]', space=smem, size = 0x4, offset = 0x4, fixed_abs, tag = 'smem constant byte address 0x4 - core index']
  #allocation1 [shape = 'u32[144,128]{1,0:T(1,128)}', space=vmem, size = 0x12000, scoped, tag = 'internal scratch']
  %s0 = inlined_call_operand.vmem [shape: bf16[8,256], index: 0, kind: input, shape index: {}]
  %s1 = inlined_call_operand.vmem [shape: bf16[256,32], index: 1, kind: input, shape index: {}]
  %s2 = inlined_call_operand.vmem [shape: f32[1,32], index: 2, kind: input, shape index: {}]
  %s3 = inlined_call_operand.vmem [shape: f32[8,32], index: 3, kind: output, shape index: {}]
  %s4 = sld [smem:[#allocation0]]
  $region22: #{autoencoder_forward.30} parent=0
    _
  %s6 = ssub.s32 1, %s4
  %s7 = scalar_select 0, %s6, %s4
  // Predicated region
  $region2: #{autoencoder_forward.30} parent=0 // pred_check
    _
  $region3: #{autoencoder_forward.30} parent=0 // pred_check_branch
    %9 = sbr.rel (0) target = $region5
  $region4: #{autoencoder_forward.30} parent=0 // pred_region
    _
  $region5: #{autoencoder_forward.30} parent=0 // pred_fallthru
    _
  // Predicated region
  $region6: #{autoencoder_forward.30} parent=0 // pred_check
    _
  $region7: #{autoencoder_forward.30} parent=0 // pred_check_branch
    %11 = sbr.rel (0) target = $region9
  $region8: #{autoencoder_forward.30} parent=0 // pred_region
    _
  $region9: #{autoencoder_forward.30} parent=0 // pred_fallthru
    _
  // Predicated region
  $region10: #{autoencoder_forward.30} parent=0 // pred_check
    _
  $region11: #{autoencoder_forward.30} parent=0 // pred_check_branch
    %13 = sbr.rel (0) target = $region13
  $region12: #{autoencoder_forward.30} parent=0 // pred_region
    _
  $region13: #{autoencoder_forward.30} parent=0 // pred_fallthru
    _
  %v15 = vld [vmem:[%s0] sm:$0xff]
  %v16 = vld [vmem:[%s1] sm:$0xf]
  %v17 = vld [vmem:[%s1 + $0x4] sm:$0xf]
  %v18 = vld [vmem:[%s1 + $0x8] sm:$0xf]
  %v19 = vld [vmem:[%s1 + $0xc] sm:$0xf]
  %v20 = vld [vmem:[%s1 + $0x10] sm:$0xf]
  %v21 = vld [vmem:[%s1 + $0x14] sm:$0xf]
  %v22 = vld [vmem:[%s1 + $0x18] sm:$0xf]
  %v23 = vld [vmem:[%s1 + $0x1c] sm:$0xf]
  %v24 = vld [vmem:[%s1 + $0x20] sm:$0xf]
  %v25 = vld [vmem:[%s1 + $0x24] sm:$0xf]
  %v26 = vld [vmem:[%s1 + $0x28] sm:$0xf]
  %v27 = vld [vmem:[%s1 + $0x2c] sm:$0xf]
  %v28 = vld [vmem:[%s1 + $0x30] sm:$0xf]
  %v29 = vld [vmem:[%s1 + $0x34] sm:$0xf]
  %v30 = vld [vmem:[%s1 + $0x38] sm:$0xf]
  %v31 = vld [vmem:[%s1 + $0x3c] sm:$0xf]
  %v32 = vld [vmem:[%s1 + $0x40] sm:$0xf]
  %v33 = vld [vmem:[%s1 + $0x44] sm:$0xf]
  %v34 = vld [vmem:[%s1 + $0x48] sm:$0xf]
  %v35 = vld [vmem:[%s1 + $0x4c] sm:$0xf]
  %v36 = vld [vmem:[%s1 + $0x50] sm:$0xf]
  %v37 = vld [vmem:[%s1 + $0x54] sm:$0xf]
  %v38 = vld [vmem:[%s1 + $0x58] sm:$0xf]
  %v39 = vld [vmem:[%s1 + $0x5c] sm:$0xf]
  %v40 = vld [vmem:[%s1 + $0x60] sm:$0xf]
  %v41 = vld [vmem:[%s1 + $0x64] sm:$0xf]
  %v42 = vld [vmem:[%s1 + $0x68] sm:$0xf]
  %v43 = vld [vmem:[%s1 + $0x6c] sm:$0xf]
  %v44 = vld [vmem:[%s1 + $0x70] sm:$0xf]
  %v45 = vld [vmem:[%s1 + $0x74] sm:$0xf]
  %v46 = vld [vmem:[%s1 + $0x78] sm:$0xf]
  %v47 = vld [vmem:[%s1 + $0x7c] sm:$0xf]
  %v48 = vld [vmem:[%s2] sm:$0x1]
  %v50 = vlaneseq
  %v51 = vshrl.u32 %v50, 7
  %v52 = vsub.s32 0, %v51
  %v53 = vrot.slane %v48, %v52
  %v56 = vunpack.c.l.b16 %v15
  %v57 = vunpack.c.h.b16 %v15
  %v58 = vpack.c.b16 %v56, %v56
  %v59 = vpack.c.b16 %v57, %v57
  %v94 = vunpack.c.l.b16 %v16
  %v95 = vunpack.c.l.b16 %v17
  %v96 = vunpack.c.l.b16 %v18
  %v97 = vunpack.c.l.b16 %v19
  %v98 = vunpack.c.l.b16 %v20
  %v99 = vunpack.c.l.b16 %v21
  %v100 = vunpack.c.l.b16 %v22
  %v101 = vunpack.c.l.b16 %v23
  %v102 = vunpack.c.l.b16 %v24
  %v103 = vunpack.c.l.b16 %v25
  %v104 = vunpack.c.l.b16 %v26
  %v105 = vunpack.c.l.b16 %v27
  %v106 = vunpack.c.l.b16 %v28
  %v107 = vunpack.c.l.b16 %v29
  %v108 = vunpack.c.l.b16 %v30
  %v109 = vunpack.c.l.b16 %v31
  %v110 = vunpack.c.l.b16 %v32
  %v111 = vunpack.c.l.b16 %v33
  %v112 = vunpack.c.l.b16 %v34
  %v113 = vunpack.c.l.b16 %v35
  %v114 = vunpack.c.l.b16 %v36
  %v115 = vunpack.c.l.b16 %v37
  %v116 = vunpack.c.l.b16 %v38
  %v117 = vunpack.c.l.b16 %v39
  %v118 = vunpack.c.l.b16 %v40
  %v119 = vunpack.c.l.b16 %v41
  %v120 = vunpack.c.l.b16 %v42
  %v121 = vunpack.c.l.b16 %v43
  %v122 = vunpack.c.l.b16 %v44
  %v123 = vunpack.c.l.b16 %v45
  %v124 = vunpack.c.l.b16 %v46
  %v125 = vunpack.c.l.b16 %v47
  %v126 = vpack.c.b16 %v95, %v94
  %v127 = vpack.c.b16 %v97, %v96
  %v128 = vpack.c.b16 %v99, %v98
  %v129 = vpack.c.b16 %v101, %v100
  %v130 = vpack.c.b16 %v103, %v102
  %v131 = vpack.c.b16 %v105, %v104
  %v132 = vpack.c.b16 %v107, %v106
  %v133 = vpack.c.b16 %v109, %v108
  %v134 = vpack.c.b16 %v111, %v110
  %v135 = vpack.c.b16 %v113, %v112
  %v136 = vpack.c.b16 %v115, %v114
  %v137 = vpack.c.b16 %v117, %v116
  %v138 = vpack.c.b16 %v119, %v118
  %v139 = vpack.c.b16 %v121, %v120
  %v140 = vpack.c.b16 %v123, %v122
  %v141 = vpack.c.b16 %v125, %v124
  %158 = vmatprep.subr.bf16.mxu0 0
  %159 = vmatpush1.bf16.msra.mxu0 %v126
  %160 = vmatprep.subr.bf16.mxu0 0
  %161 = vmatpush1.bf16.msra.mxu0 %v127
  %162 = vmatprep.subr.bf16.mxu0 0
  %163 = vmatpush1.bf16.msra.mxu0 %v128
  %164 = vmatprep.subr.bf16.mxu0 0
  %165 = vmatpush1.bf16.msra.mxu0 %v129
  %166 = vmatprep.subr.bf16.mxu0 0
  %167 = vmatpush1.bf16.msra.mxu0 %v130
  %168 = vmatprep.subr.bf16.mxu0 0
  %169 = vmatpush1.bf16.msra.mxu0 %v131
  %170 = vmatprep.subr.bf16.mxu0 0
  %171 = vmatpush1.bf16.msra.mxu0 %v132
  %172 = vmatprep.subr.bf16.mxu0 0
  %173 = vmatpush1.bf16.msra.mxu0 %v133
  %174 = vmatprep.subr.bf16.mxu0 0
  %175 = vmatpush1.bf16.msra.mxu0 %v134
  %176 = vmatprep.subr.bf16.mxu0 0
  %177 = vmatpush1.bf16.msra.mxu0 %v135
  %178 = vmatprep.subr.bf16.mxu0 0
  %179 = vmatpush1.bf16.msra.mxu0 %v136
  %180 = vmatprep.subr.bf16.mxu0 0
  %181 = vmatpush1.bf16.msra.mxu0 %v137
  %182 = vmatprep.subr.bf16.mxu0 0
  %183 = vmatpush1.bf16.msra.mxu0 %v138
  %184 = vmatprep.subr.bf16.mxu0 0
  %185 = vmatpush1.bf16.msra.mxu0 %v139
  %186 = vmatprep.subr.bf16.mxu0 0
  %187 = vmatpush1.bf16.msra.mxu0 %v140
  %188 = vmatprep.subr.bf16.mxu0 0
  %189 = vmatpush1.bf16.msra.mxu0 %v141
  %190 = vmatprep.mubr.bf16.mxu0 %v59
  %191 = vmatmul.mubr.bf16.gmra.mrb[0].mxu0 %v58
  %v192 = vpop.f32.mrb[0].mxu0
  %v193 = vadd.f32 %v53, %v192
  %v194 = vpop.f32.mrb[0].mxu0
  %v195 = vpop.f32.mrb[0].mxu0
  %v196 = vpop.f32.mrb[0].mxu0
  %197 = vdwg.mxu0
  %v198 = vmax.f32 %v193, 0.0
  %vm199 = vcmask 261120
  %200 = vst.msk [vmem:[%s3] sm:$0xff] %vm199, %v198
  // Predicated region
  $region14: #{autoencoder_forward.30} parent=0 // pred_check
    _
  $region15: #{autoencoder_forward.30} parent=0 // pred_check_branch
    %202 = sbr.rel (0) target = $region17
  $region16: #{autoencoder_forward.30} parent=0 // pred_region
    _
  $region17: #{autoencoder_forward.30} parent=0 // pred_fallthru
    _
  // Predicated region
  $region18: #{autoencoder_forward.30} parent=0 // pred_check
    _
  $region19: #{autoencoder_forward.30} parent=0 // pred_check_branch
    %204 = sbr.rel (0) target = $region21
  $region20: #{autoencoder_forward.30} parent=0 // pred_region
    _
  $region21: #{autoencoder_forward.30} parent=0 // pred_fallthru
    _

// kernel: autoencoder_forward.34
$region0: #{autoencoder_forward.34}
  #allocation0 [shape = 'u32[]', space=smem, size = 0x4, offset = 0x4, fixed_abs, tag = 'smem constant byte address 0x4 - core index']
  #allocation1 [shape = 'u32[144,128]{1,0:T(1,128)}', space=vmem, size = 0x12000, scoped, tag = 'internal scratch']
  %s0 = inlined_call_operand.vmem [shape: bf16[32,128], index: 0, kind: input, shape index: {}]
  %s1 = inlined_call_operand.vmem [shape: bf16[128,16], index: 1, kind: input, shape index: {}]
  %s2 = inlined_call_operand.vmem [shape: f32[1,16], index: 2, kind: input, shape index: {}]
  %s3 = inlined_call_operand.vmem [shape: f32[32,16], index: 3, kind: output, shape index: {}]
  %s4 = sld [smem:[#allocation0]]
  $region22: #{autoencoder_forward.34} parent=0
    _
  %s6 = ssub.s32 1, %s4
  %s7 = scalar_select 0, %s6, %s4
  // Predicated region
  $region2: #{autoencoder_forward.34} parent=0 // pred_check
    _
  $region3: #{autoencoder_forward.34} parent=0 // pred_check_branch
    %9 = sbr.rel (0) target = $region5
  $region4: #{autoencoder_forward.34} parent=0 // pred_region
    _
  $region5: #{autoencoder_forward.34} parent=0 // pred_fallthru
    _
  // Predicated region
  $region6: #{autoencoder_forward.34} parent=0 // pred_check
    _
  $region7: #{autoencoder_forward.34} parent=0 // pred_check_branch
    %11 = sbr.rel (0) target = $region9
  $region8: #{autoencoder_forward.34} parent=0 // pred_region
    _
  $region9: #{autoencoder_forward.34} parent=0 // pred_fallthru
    _
  // Predicated region
  $region10: #{autoencoder_forward.34} parent=0 // pred_check
    _
  $region11: #{autoencoder_forward.34} parent=0 // pred_check_branch
    %13 = sbr.rel (0) target = $region13
  $region12: #{autoencoder_forward.34} parent=0 // pred_region
    _
  $region13: #{autoencoder_forward.34} parent=0 // pred_fallthru
    _
  %v15 = vld [vmem:[%s0] sm:$0xf]
  %v16 = vld [vmem:[%s0 + $0x4] sm:$0xf]
  %v17 = vld [vmem:[%s0 + $0x8] sm:$0xf]
  %v18 = vld [vmem:[%s0 + $0xc] sm:$0xf]
  %v19 = vld [vmem:[%s1] sm:$0xf]
  %v20 = vld [vmem:[%s1 + $0x4] sm:$0xf]
  %v21 = vld [vmem:[%s1 + $0x8] sm:$0xf]
  %v22 = vld [vmem:[%s1 + $0xc] sm:$0xf]
  %v23 = vld [vmem:[%s1 + $0x10] sm:$0xf]
  %v24 = vld [vmem:[%s1 + $0x14] sm:$0xf]
  %v25 = vld [vmem:[%s1 + $0x18] sm:$0xf]
  %v26 = vld [vmem:[%s1 + $0x1c] sm:$0xf]
  %v27 = vld [vmem:[%s1 + $0x20] sm:$0xf]
  %v28 = vld [vmem:[%s1 + $0x24] sm:$0xf]
  %v29 = vld [vmem:[%s1 + $0x28] sm:$0xf]
  %v30 = vld [vmem:[%s1 + $0x2c] sm:$0xf]
  %v31 = vld [vmem:[%s1 + $0x30] sm:$0xf]
  %v32 = vld [vmem:[%s1 + $0x34] sm:$0xf]
  %v33 = vld [vmem:[%s1 + $0x38] sm:$0xf]
  %v34 = vld [vmem:[%s1 + $0x3c] sm:$0xf]
  %v35 = vld [vmem:[%s2] sm:$0x1]
  %v37 = vlaneseq
  %v38 = vshrl.u32 %v37, 7
  %v39 = vsub.s32 0, %v38
  %v40 = vrot.slane %v35, %v39
  %v46 = vunpack.c.l.b16 %v15
  %v47 = vunpack.c.l.b16 %v16
  %v48 = vunpack.c.l.b16 %v17
  %v49 = vunpack.c.l.b16 %v18
  %v50 = vpack.c.b16 %v47, %v46
  %v51 = vpack.c.b16 %v49, %v48
  %v70 = vunpack.c.l.b16 %v19
  %v71 = vunpack.c.l.b16 %v20
  %v72 = vunpack.c.l.b16 %v21
  %v73 = vunpack.c.l.b16 %v22
  %v74 = vunpack.c.l.b16 %v23
  %v75 = vunpack.c.l.b16 %v24
  %v76 = vunpack.c.l.b16 %v25
  %v77 = vunpack.c.l.b16 %v26
  %v78 = vunpack.c.l.b16 %v27
  %v79 = vunpack.c.l.b16 %v28
  %v80 = vunpack.c.l.b16 %v29
  %v81 = vunpack.c.l.b16 %v30
  %v82 = vunpack.c.l.b16 %v31
  %v83 = vunpack.c.l.b16 %v32
  %v84 = vunpack.c.l.b16 %v33
  %v85 = vunpack.c.l.b16 %v34
  %v86 = vpack.c.b16 %v71, %v70
  %v87 = vpack.c.b16 %v73, %v72
  %v88 = vpack.c.b16 %v75, %v74
  %v89 = vpack.c.b16 %v77, %v76
  %v90 = vpack.c.b16 %v79, %v78
  %v91 = vpack.c.b16 %v81, %v80
  %v92 = vpack.c.b16 %v83, %v82
  %v93 = vpack.c.b16 %v85, %v84
  %102 = vmatprep.subr.bf16.mxu0 0
  %103 = vmatpush1.bf16.msra.mxu0 %v86
  %104 = vmatprep.subr.bf16.mxu0 0
  %105 = vmatpush1.bf16.msra.mxu0 %v87
  %106 = vmatprep.subr.bf16.mxu0 0
  %107 = vmatpush1.bf16.msra.mxu0 %v88
  %108 = vmatprep.subr.bf16.mxu0 0
  %109 = vmatpush1.bf16.msra.mxu0 %v89
  %110 = vmatprep.subr.bf16.mxu0 0
  %111 = vmatpush1.bf16.msra.mxu0 %v90
  %112 = vmatprep.subr.bf16.mxu0 0
  %113 = vmatpush1.bf16.msra.mxu0 %v91
  %114 = vmatprep.subr.bf16.mxu0 0
  %115 = vmatpush1.bf16.msra.mxu0 %v92
  %116 = vmatprep.subr.bf16.mxu0 0
  %117 = vmatpush1.bf16.msra.mxu0 %v93
  %118 = vmatprep.subr.bf16.mxu0 0
  %119 = vmatpush1.bf16.msra.mxu0 0
  %120 = vmatprep.subr.bf16.mxu0 0
  %121 = vmatpush1.bf16.msra.mxu0 0
  %122 = vmatprep.subr.bf16.mxu0 0
  %123 = vmatpush1.bf16.msra.mxu0 0
  %124 = vmatprep.subr.bf16.mxu0 0
  %125 = vmatpush1.bf16.msra.mxu0 0
  %126 = vmatprep.subr.bf16.mxu0 0
  %127 = vmatpush1.bf16.msra.mxu0 0
  %128 = vmatprep.subr.bf16.mxu0 0
  %129 = vmatpush1.bf16.msra.mxu0 0
  %130 = vmatprep.subr.bf16.mxu0 0
  %131 = vmatpush1.bf16.msra.mxu0 0
  %132 = vmatprep.subr.bf16.mxu0 0
  %133 = vmatpush1.bf16.msra.mxu0 0
  %134 = vmatprep.mubr.bf16.mxu0 0
  %135 = vmatmul.mubr.bf16.gmra.mrb[0].mxu0 %v50
  %v136 = vpop.f32.mrb[0].mxu0
  %v137 = vadd.f32 %v40, %v136
  %v138 = vpop.f32.mrb[0].mxu0
  %v139 = vpop.f32.mrb[0].mxu0
  %v140 = vadd.f32 %v40, %v139
  %v141 = vpop.f32.mrb[0].mxu0
  %142 = vmatprep.mubr.bf16.mxu0 0
  %143 = vmatmul.mubr.bf16.gmra.mrb[0].mxu0 %v51
  %v144 = vpop.f32.mrb[0].mxu0
  %v145 = vadd.f32 %v40, %v144
  %v146 = vpop.f32.mrb[0].mxu0
  %v147 = vpop.f32.mrb[0].mxu0
  %v148 = vadd.f32 %v40, %v147
  %v149 = vpop.f32.mrb[0].mxu0
  %150 = vdwg.mxu0
  %v151 = vmax.f32 %v137, 0.0
  %v152 = vmax.f32 %v140, 0.0
  %v153 = vmax.f32 %v145, 0.0
  %v154 = vmax.f32 %v148, 0.0
  %vm155 = vcmask 130048
  %156 = vst.msk [vmem:[%s3] sm:$0xff] %vm155, %v151
  %157 = vst.msk [vmem:[%s3 + $0x8] sm:$0xff] %vm155, %v152
  %158 = vst.msk [vmem:[%s3 + $0x10] sm:$0xff] %vm155, %v153
  %159 = vst.msk [vmem:[%s3 + $0x18] sm:$0xff] %vm155, %v154
  // Predicated region
  $region14: #{autoencoder_forward.34} parent=0 // pred_check
    _
  $region15: #{autoencoder_forward.34} parent=0 // pred_check_branch
    %161 = sbr.rel (0) target = $region17
  $region16: #{autoencoder_forward.34} parent=0 // pred_region
    _
  $region17: #{autoencoder_forward.34} parent=0 // pred_fallthru
    _
  // Predicated region
  $region18: #{autoencoder_forward.34} parent=0 // pred_check
    _
  $region19: #{autoencoder_forward.34} parent=0 // pred_check_branch
    %163 = sbr.rel (0) target = $region21
  $region20: #{autoencoder_forward.34} parent=0 // pred_region
    _
  $region21: #{autoencoder_forward.34} parent=0 // pred_fallthru
    _

// kernel: autoencoder_forward.38
$region0: #{autoencoder_forward.38}
  #allocation0 [shape = 'u32[]', space=smem, size = 0x4, offset = 0x4, fixed_abs, tag = 'smem constant byte address 0x4 - core index']
  #allocation1 [shape = 'u32[144,128]{1,0:T(1,128)}', space=vmem, size = 0x12000, scoped, tag = 'internal scratch']
  %s0 = inlined_call_operand.vmem [shape: bf16[128,64], index: 0, kind: input, shape index: {}]
  %s1 = inlined_call_operand.vmem [shape: bf16[64,8], index: 1, kind: input, shape index: {}]
  %s2 = inlined_call_operand.vmem [shape: f32[1,8], index: 2, kind: input, shape index: {}]
  %s3 = inlined_call_operand.vmem [shape: f32[128,8], index: 3, kind: output, shape index: {}]
  %s4 = sld [smem:[#allocation0]]
  $region22: #{autoencoder_forward.38} parent=0
    _
  %s6 = ssub.s32 1, %s4
  %s7 = scalar_select 0, %s6, %s4
  // Predicated region
  $region2: #{autoencoder_forward.38} parent=0 // pred_check
    _
  $region3: #{autoencoder_forward.38} parent=0 // pred_check_branch
    %9 = sbr.rel (0) target = $region5
  $region4: #{autoencoder_forward.38} parent=0 // pred_region
    _
  $region5: #{autoencoder_forward.38} parent=0 // pred_fallthru
    _
  // Predicated region
  $region6: #{autoencoder_forward.38} parent=0 // pred_check
    _
  $region7: #{autoencoder_forward.38} parent=0 // pred_check_branch
    %11 = sbr.rel (0) target = $region9
  $region8: #{autoencoder_forward.38} parent=0 // pred_region
    _
  $region9: #{autoencoder_forward.38} parent=0 // pred_fallthru
    _
  // Predicated region
  $region10: #{autoencoder_forward.38} parent=0 // pred_check
    _
  $region11: #{autoencoder_forward.38} parent=0 // pred_check_branch
    %13 = sbr.rel (0) target = $region13
  $region12: #{autoencoder_forward.38} parent=0 // pred_region
    _
  $region13: #{autoencoder_forward.38} parent=0 // pred_fallthru
    _
  %v15 = vld [vmem:[%s0] sm:$0xf]
  %v16 = vld [vmem:[%s0 + $0x4] sm:$0xf]
  %v17 = vld [vmem:[%s0 + $0x8] sm:$0xf]
  %v18 = vld [vmem:[%s0 + $0xc] sm:$0xf]
  %v19 = vld [vmem:[%s0 + $0x10] sm:$0xf]
  %v20 = vld [vmem:[%s0 + $0x14] sm:$0xf]
  %v21 = vld [vmem:[%s0 + $0x18] sm:$0xf]
  %v22 = vld [vmem:[%s0 + $0x1c] sm:$0xf]
  %v23 = vld [vmem:[%s0 + $0x20] sm:$0xf]
  %v24 = vld [vmem:[%s0 + $0x24] sm:$0xf]
  %v25 = vld [vmem:[%s0 + $0x28] sm:$0xf]
  %v26 = vld [vmem:[%s0 + $0x2c] sm:$0xf]
  %v27 = vld [vmem:[%s0 + $0x30] sm:$0xf]
  %v28 = vld [vmem:[%s0 + $0x34] sm:$0xf]
  %v29 = vld [vmem:[%s0 + $0x38] sm:$0xf]
  %v30 = vld [vmem:[%s0 + $0x3c] sm:$0xf]
  %v31 = vld [vmem:[%s1] sm:$0xf]
  %v32 = vld [vmem:[%s1 + $0x4] sm:$0xf]
  %v33 = vld [vmem:[%s1 + $0x8] sm:$0xf]
  %v34 = vld [vmem:[%s1 + $0xc] sm:$0xf]
  %v35 = vld [vmem:[%s1 + $0x10] sm:$0xf]
  %v36 = vld [vmem:[%s1 + $0x14] sm:$0xf]
  %v37 = vld [vmem:[%s1 + $0x18] sm:$0xf]
  %v38 = vld [vmem:[%s1 + $0x1c] sm:$0xf]
  %v39 = vld [vmem:[%s2] sm:$0x1]
  %v41 = vlaneseq
  %v42 = vshrl.u32 %v41, 7
  %v43 = vsub.s32 0, %v42
  %v44 = vrot.slane %v39, %v43
  %v62 = vunpack.c.l.b16 %v15
  %v63 = vunpack.c.l.b16 %v16
  %v64 = vunpack.c.l.b16 %v17
  %v65 = vunpack.c.l.b16 %v18
  %v66 = vunpack.c.l.b16 %v19
  %v67 = vunpack.c.l.b16 %v20
  %v68 = vunpack.c.l.b16 %v21
  %v69 = vunpack.c.l.b16 %v22
  %v70 = vunpack.c.l.b16 %v23
  %v71 = vunpack.c.l.b16 %v24
  %v72 = vunpack.c.l.b16 %v25
  %v73 = vunpack.c.l.b16 %v26
  %v74 = vunpack.c.l.b16 %v27
  %v75 = vunpack.c.l.b16 %v28
  %v76 = vunpack.c.l.b16 %v29
  %v77 = vunpack.c.l.b16 %v30
  %v78 = vpack.c.b16 %v63, %v62
  %v79 = vpack.c.b16 %v65, %v64
  %v80 = vpack.c.b16 %v67, %v66
  %v81 = vpack.c.b16 %v69, %v68
  %v82 = vpack.c.b16 %v71, %v70
  %v83 = vpack.c.b16 %v73, %v72
  %v84 = vpack.c.b16 %v75, %v74
  %v85 = vpack.c.b16 %v77, %v76
  %v94 = vunpack.c.l.b16 %v31
  %v95 = vunpack.c.l.b16 %v32
  %v96 = vunpack.c.l.b16 %v33
  %v97 = vunpack.c.l.b16 %v34
  %v98 = vunpack.c.l.b16 %v35
  %v99 = vunpack.c.l.b16 %v36
  %v100 = vunpack.c.l.b16 %v37
  %v101 = vunpack.c.l.b16 %v38
  %v102 = vpack.c.b16 %v95, %v94
  %v103 = vpack.c.b16 %v97, %v96
  %v104 = vpack.c.b16 %v99, %v98
  %v105 = vpack.c.b16 %v101, %v100
  %vm110 = vcmask 523264
  %v112 = vsel %vm110, %v78, 0
  %v115 = vsel %vm110, %v79, 0
  %v118 = vsel %vm110, %v80, 0
  %v121 = vsel %vm110, %v81, 0
  %v124 = vsel %vm110, %v82, 0
  %v127 = vsel %vm110, %v83, 0
  %v130 = vsel %vm110, %v84, 0
  %v133 = vsel %vm110, %v85, 0
  %135 = vmatprep.subr.bf16.mxu0 0
  %136 = vmatpush1.bf16.msra.mxu0 %v102
  %137 = vmatprep.subr.bf16.mxu0 0
  %138 = vmatpush1.bf16.msra.mxu0 %v103
  %139 = vmatprep.subr.bf16.mxu0 0
  %140 = vmatpush1.bf16.msra.mxu0 %v104
  %141 = vmatprep.subr.bf16.mxu0 0
  %142 = vmatpush1.bf16.msra.mxu0 %v105
  %143 = vmatprep.subr.bf16.mxu0 0
  %144 = vmatpush1.bf16.msra.mxu0 0
  %145 = vmatprep.subr.bf16.mxu0 0
  %146 = vmatpush1.bf16.msra.mxu0 0
  %147 = vmatprep.subr.bf16.mxu0 0
  %148 = vmatpush1.bf16.msra.mxu0 0
  %149 = vmatprep.subr.bf16.mxu0 0
  %150 = vmatpush1.bf16.msra.mxu0 0
  %151 = vmatprep.subr.bf16.mxu0 0
  %152 = vmatpush1.bf16.msra.mxu0 0
  %153 = vmatprep.subr.bf16.mxu0 0
  %154 = vmatpush1.bf16.msra.mxu0 0
  %155 = vmatprep.subr.bf16.mxu0 0
  %156 = vmatpush1.bf16.msra.mxu0 0
  %157 = vmatprep.subr.bf16.mxu0 0
  %158 = vmatpush1.bf16.msra.mxu0 0
  %159 = vmatprep.subr.bf16.mxu0 0
  %160 = vmatpush1.bf16.msra.mxu0 0
  %161 = vmatprep.subr.bf16.mxu0 0
  %162 = vmatpush1.bf16.msra.mxu0 0
  %163 = vmatprep.subr.bf16.mxu0 0
  %164 = vmatpush1.bf16.msra.mxu0 0
  %165 = vmatprep.subr.bf16.mxu0 0
  %166 = vmatpush1.bf16.msra.mxu0 0
  %167 = vmatprep.mubr.bf16.mxu0 0
  %168 = vmatmul.mubr.bf16.gmra.mrb[0].mxu0 %v112
  %v169 = vpop.f32.mrb[0].mxu0
  %v170 = vadd.f32 %v44, %v169
  %v171 = vpop.f32.mrb[0].mxu0
  %v172 = vpop.f32.mrb[0].mxu0
  %v173 = vadd.f32 %v44, %v172
  %v174 = vpop.f32.mrb[0].mxu0
  %175 = vmatprep.mubr.bf16.mxu0 0
  %176 = vmatmul.mubr.bf16.gmra.mrb[0].mxu0 %v115
  %v177 = vpop.f32.mrb[0].mxu0
  %v178 = vadd.f32 %v44, %v177
  %v179 = vpop.f32.mrb[0].mxu0
  %v180 = vpop.f32.mrb[0].mxu0
  %v181 = vadd.f32 %v44, %v180
  %v182 = vpop.f32.mrb[0].mxu0
  %183 = vmatprep.mubr.bf16.mxu0 0
  %184 = vmatmul.mubr.bf16.gmra.mrb[0].mxu0 %v118
  %v185 = vpop.f32.mrb[0].mxu0
  %v186 = vadd.f32 %v44, %v185
  %v187 = vpop.f32.mrb[0].mxu0
  %v188 = vpop.f32.mrb[0].mxu0
  %v189 = vadd.f32 %v44, %v188
  %v190 = vpop.f32.mrb[0].mxu0
  %191 = vmatprep.mubr.bf16.mxu0 0
  %192 = vmatmul.mubr.bf16.gmra.mrb[0].mxu0 %v121
  %v193 = vpop.f32.mrb[0].mxu0
  %v194 = vadd.f32 %v44, %v193
  %v195 = vpop.f32.mrb[0].mxu0
  %v196 = vpop.f32.mrb[0].mxu0
  %v197 = vadd.f32 %v44, %v196
  %v198 = vpop.f32.mrb[0].mxu0
  %199 = vmatprep.mubr.bf16.mxu0 0
  %200 = vmatmul.mubr.bf16.gmra.mrb[0].mxu0 %v124
  %v201 = vpop.f32.mrb[0].mxu0
  %v202 = vadd.f32 %v44, %v201
  %v203 = vpop.f32.mrb[0].mxu0
  %v204 = vpop.f32.mrb[0].mxu0
  %v205 = vadd.f32 %v44, %v204
  %v206 = vpop.f32.mrb[0].mxu0
  %207 = vmatprep.mubr.bf16.mxu0 0
  %208 = vmatmul.mubr.bf16.gmra.mrb[0].mxu0 %v127
  %v209 = vpop.f32.mrb[0].mxu0
  %v210 = vadd.f32 %v44, %v209
  %v211 = vpop.f32.mrb[0].mxu0
  %v212 = vpop.f32.mrb[0].mxu0
  %v213 = vadd.f32 %v44, %v212
  %v214 = vpop.f32.mrb[0].mxu0
  %215 = vmatprep.mubr.bf16.mxu0 0
  %216 = vmatmul.mubr.bf16.gmra.mrb[0].mxu0 %v130
  %v217 = vpop.f32.mrb[0].mxu0
  %v218 = vadd.f32 %v44, %v217
  %v219 = vpop.f32.mrb[0].mxu0
  %v220 = vpop.f32.mrb[0].mxu0
  %v221 = vadd.f32 %v44, %v220
  %v222 = vpop.f32.mrb[0].mxu0
  %223 = vmatprep.mubr.bf16.mxu0 0
  %224 = vmatmul.mubr.bf16.gmra.mrb[0].mxu0 %v133
  %v225 = vpop.f32.mrb[0].mxu0
  %v226 = vadd.f32 %v44, %v225
  %v227 = vpop.f32.mrb[0].mxu0
  %v228 = vpop.f32.mrb[0].mxu0
  %v229 = vadd.f32 %v44, %v228
  %v230 = vpop.f32.mrb[0].mxu0
  %231 = vdwg.mxu0
  %v232 = vmax.f32 %v170, 0.0
  %v233 = vmax.f32 %v173, 0.0
  %v234 = vmax.f32 %v178, 0.0
  %v235 = vmax.f32 %v181, 0.0
  %v236 = vmax.f32 %v186, 0.0
  %v237 = vmax.f32 %v189, 0.0
  %v238 = vmax.f32 %v194, 0.0
  %v239 = vmax.f32 %v197, 0.0
  %v240 = vmax.f32 %v202, 0.0
  %v241 = vmax.f32 %v205, 0.0
  %v242 = vmax.f32 %v210, 0.0
  %v243 = vmax.f32 %v213, 0.0
  %v244 = vmax.f32 %v218, 0.0
  %v245 = vmax.f32 %v221, 0.0
  %v246 = vmax.f32 %v226, 0.0
  %v247 = vmax.f32 %v229, 0.0
  %vm248 = vcmask 64512
  %249 = vst.msk [vmem:[%s3] sm:$0xff] %vm248, %v232
  %250 = vst.msk [vmem:[%s3 + $0x8] sm:$0xff] %vm248, %v233
  %251 = vst.msk [vmem:[%s3 + $0x10] sm:$0xff] %vm248, %v234
  %252 = vst.msk [vmem:[%s3 + $0x18] sm:$0xff] %vm248, %v235
  %253 = vst.msk [vmem:[%s3 + $0x20] sm:$0xff] %vm248, %v236
  %254 = vst.msk [vmem:[%s3 + $0x28] sm:$0xff] %vm248, %v237
  %255 = vst.msk [vmem:[%s3 + $0x30] sm:$0xff] %vm248, %v238
  %256 = vst.msk [vmem:[%s3 + $0x38] sm:$0xff] %vm248, %v239
  %257 = vst.msk [vmem:[%s3 + $0x40] sm:$0xff] %vm248, %v240
  %258 = vst.msk [vmem:[%s3 + $0x48] sm:$0xff] %vm248, %v241
  %259 = vst.msk [vmem:[%s3 + $0x50] sm:$0xff] %vm248, %v242
  %260 = vst.msk [vmem:[%s3 + $0x58] sm:$0xff] %vm248, %v243
  %261 = vst.msk [vmem:[%s3 + $0x60] sm:$0xff] %vm248, %v244
  %262 = vst.msk [vmem:[%s3 + $0x68] sm:$0xff] %vm248, %v245
  %263 = vst.msk [vmem:[%s3 + $0x70] sm:$0xff] %vm248, %v246
  %264 = vst.msk [vmem:[%s3 + $0x78] sm:$0xff] %vm248, %v247
  // Predicated region
  $region14: #{autoencoder_forward.38} parent=0 // pred_check
    _
  $region15: #{autoencoder_forward.38} parent=0 // pred_check_branch
    %266 = sbr.rel (0) target = $region17
  $region16: #{autoencoder_forward.38} parent=0 // pred_region
    _
  $region17: #{autoencoder_forward.38} parent=0 // pred_fallthru
    _
  // Predicated region
  $region18: #{autoencoder_forward.38} parent=0 // pred_check
    _
  $region19: #{autoencoder_forward.38} parent=0 // pred_check_branch
    %268 = sbr.rel (0) target = $region21
  $region20: #{autoencoder_forward.38} parent=0 // pred_region
    _
  $region21: #{autoencoder_forward.38} parent=0 // pred_fallthru
    _

// kernel: autoencoder_forward.42
$region0: #{autoencoder_forward.42}
  #allocation0 [shape = 'u32[]', space=smem, size = 0x4, offset = 0x4, fixed_abs, tag = 'smem constant byte address 0x4 - core index']
  #allocation1 [shape = 'u32[144,128]{1,0:T(1,128)}', space=vmem, size = 0x12000, scoped, tag = 'internal scratch']
  %s0 = inlined_call_operand.vmem [shape: bf16[512,32], index: 0, kind: input, shape index: {}]
  %s1 = inlined_call_operand.vmem [shape: bf16[32,4], index: 1, kind: input, shape index: {}]
  %s2 = inlined_call_operand.vmem [shape: f32[1,4], index: 2, kind: input, shape index: {}]
  %s3 = inlined_call_operand.vmem [shape: f32[512,4], index: 3, kind: output, shape index: {}]
  %s4 = sld [smem:[#allocation0]]
  $region22: #{autoencoder_forward.42} parent=0
    _
  %s6 = ssub.s32 1, %s4
  %s7 = scalar_select 0, %s6, %s4
  // Predicated region
  $region2: #{autoencoder_forward.42} parent=0 // pred_check
    _
  $region3: #{autoencoder_forward.42} parent=0 // pred_check_branch
    %9 = sbr.rel (0) target = $region5
  $region4: #{autoencoder_forward.42} parent=0 // pred_region
    _
  $region5: #{autoencoder_forward.42} parent=0 // pred_fallthru
    _
  // Predicated region
  $region6: #{autoencoder_forward.42} parent=0 // pred_check
    _
  $region7: #{autoencoder_forward.42} parent=0 // pred_check_branch
    %11 = sbr.rel (0) target = $region9
  $region8: #{autoencoder_forward.42} parent=0 // pred_region
    _
  $region9: #{autoencoder_forward.42} parent=0 // pred_fallthru
    _
  // Predicated region
  $region10: #{autoencoder_forward.42} parent=0 // pred_check
    _
  $region11: #{autoencoder_forward.42} parent=0 // pred_check_branch
    %13 = sbr.rel (0) target = $region13
  $region12: #{autoencoder_forward.42} parent=0 // pred_region
    _
  $region13: #{autoencoder_forward.42} parent=0 // pred_fallthru
    _
  %v15 = vld [vmem:[%s0] sm:$0xf]
  %v16 = vld [vmem:[%s0 + $0x4] sm:$0xf]
  %v17 = vld [vmem:[%s0 + $0x8] sm:$0xf]
  %v18 = vld [vmem:[%s0 + $0xc] sm:$0xf]
  %v19 = vld [vmem:[%s0 + $0x10] sm:$0xf]
  %v20 = vld [vmem:[%s0 + $0x14] sm:$0xf]
  %v21 = vld [vmem:[%s0 + $0x18] sm:$0xf]
  %v22 = vld [vmem:[%s0 + $0x1c] sm:$0xf]
  %v23 = vld [vmem:[%s0 + $0x20] sm:$0xf]
  %v24 = vld [vmem:[%s0 + $0x24] sm:$0xf]
  %v25 = vld [vmem:[%s0 + $0x28] sm:$0xf]
  %v26 = vld [vmem:[%s0 + $0x2c] sm:$0xf]
  %v27 = vld [vmem:[%s0 + $0x30] sm:$0xf]
  %v28 = vld [vmem:[%s0 + $0x34] sm:$0xf]
  %v29 = vld [vmem:[%s0 + $0x38] sm:$0xf]
  %v30 = vld [vmem:[%s0 + $0x3c] sm:$0xf]
  %v31 = vld [vmem:[%s0 + $0x40] sm:$0xf]
  %v32 = vld [vmem:[%s0 + $0x44] sm:$0xf]
  %v33 = vld [vmem:[%s0 + $0x48] sm:$0xf]
  %v34 = vld [vmem:[%s0 + $0x4c] sm:$0xf]
  %v35 = vld [vmem:[%s0 + $0x50] sm:$0xf]
  %v36 = vld [vmem:[%s0 + $0x54] sm:$0xf]
  %v37 = vld [vmem:[%s0 + $0x58] sm:$0xf]
  %v38 = vld [vmem:[%s0 + $0x5c] sm:$0xf]
  %v39 = vld [vmem:[%s0 + $0x60] sm:$0xf]
  %v40 = vld [vmem:[%s0 + $0x64] sm:$0xf]
  %v41 = vld [vmem:[%s0 + $0x68] sm:$0xf]
  %v42 = vld [vmem:[%s0 + $0x6c] sm:$0xf]
  %v43 = vld [vmem:[%s0 + $0x70] sm:$0xf]
  %v44 = vld [vmem:[%s0 + $0x74] sm:$0xf]
  %v45 = vld [vmem:[%s0 + $0x78] sm:$0xf]
  %v46 = vld [vmem:[%s0 + $0x7c] sm:$0xf]
  %v47 = vld [vmem:[%s0 + $0x80] sm:$0xf]
  %v48 = vld [vmem:[%s0 + $0x84] sm:$0xf]
  %v49 = vld [vmem:[%s0 + $0x88] sm:$0xf]
  %v50 = vld [vmem:[%s0 + $0x8c] sm:$0xf]
  %v51 = vld [vmem:[%s0 + $0x90] sm:$0xf]
  %v52 = vld [vmem:[%s0 + $0x94] sm:$0xf]
  %v53 = vld [vmem:[%s0 + $0x98] sm:$0xf]
  %v54 = vld [vmem:[%s0 + $0x9c] sm:$0xf]
  %v55 = vld [vmem:[%s0 + $0xa0] sm:$0xf]
  %v56 = vld [vmem:[%s0 + $0xa4] sm:$0xf]
  %v57 = vld [vmem:[%s0 + $0xa8] sm:$0xf]
  %v58 = vld [vmem:[%s0 + $0xac] sm:$0xf]
  %v59 = vld [vmem:[%s0 + $0xb0] sm:$0xf]
  %v60 = vld [vmem:[%s0 + $0xb4] sm:$0xf]
  %v61 = vld [vmem:[%s0 + $0xb8] sm:$0xf]
  %v62 = vld [vmem:[%s0 + $0xbc] sm:$0xf]
  %v63 = vld [vmem:[%s0 + $0xc0] sm:$0xf]
  %v64 = vld [vmem:[%s0 + $0xc4] sm:$0xf]
  %v65 = vld [vmem:[%s0 + $0xc8] sm:$0xf]
  %v66 = vld [vmem:[%s0 + $0xcc] sm:$0xf]
  %v67 = vld [vmem:[%s0 + $0xd0] sm:$0xf]
  %v68 = vld [vmem:[%s0 + $0xd4] sm:$0xf]
  %v69 = vld [vmem:[%s0 + $0xd8] sm:$0xf]
  %v70 = vld [vmem:[%s0 + $0xdc] sm:$0xf]
  %v71 = vld [vmem:[%s0 + $0xe0] sm:$0xf]
  %v72 = vld [vmem:[%s0 + $0xe4] sm:$0xf]
  %v73 = vld [vmem:[%s0 + $0xe8] sm:$0xf]
  %v74 = vld [vmem:[%s0 + $0xec] sm:$0xf]
  %v75 = vld [vmem:[%s0 + $0xf0] sm:$0xf]
  %v76 = vld [vmem:[%s0 + $0xf4] sm:$0xf]
  %v77 = vld [vmem:[%s0 + $0xf8] sm:$0xf]
  %v78 = vld [vmem:[%s0 + $0xfc] sm:$0xf]
  %v79 = vld [vmem:[%s1] sm:$0xf]
  %v80 = vld [vmem:[%s1 + $0x4] sm:$0xf]
  %v81 = vld [vmem:[%s1 + $0x8] sm:$0xf]
  %v82 = vld [vmem:[%s1 + $0xc] sm:$0xf]
  %v83 = vld [vmem:[%s2] sm:$0x1]
  %v85 = vlaneseq
  %v86 = vshrl.u32 %v85, 7
  %v87 = vsub.s32 0, %v86
  %v88 = vrot.slane %v83, %v87
  %v154 = vunpack.c.l.b16 %v15
  %v155 = vunpack.c.l.b16 %v16
  %v156 = vunpack.c.l.b16 %v17
  %v157 = vunpack.c.l.b16 %v18
  %v158 = vunpack.c.l.b16 %v19
  %v159 = vunpack.c.l.b16 %v20
  %v160 = vunpack.c.l.b16 %v21
  %v161 = vunpack.c.l.b16 %v22
  %v162 = vunpack.c.l.b16 %v23
  %v163 = vunpack.c.l.b16 %v24
  %v164 = vunpack.c.l.b16 %v25
  %v165 = vunpack.c.l.b16 %v26
  %v166 = vunpack.c.l.b16 %v27
  %v167 = vunpack.c.l.b16 %v28
  %v168 = vunpack.c.l.b16 %v29
  %v169 = vunpack.c.l.b16 %v30
  %v170 = vunpack.c.l.b16 %v31
  %v171 = vunpack.c.l.b16 %v32
  %v172 = vunpack.c.l.b16 %v33
  %v173 = vunpack.c.l.b16 %v34
  %v174 = vunpack.c.l.b16 %v35
  %v175 = vunpack.c.l.b16 %v36
  %v176 = vunpack.c.l.b16 %v37
  %v177 = vunpack.c.l.b16 %v38
  %v178 = vunpack.c.l.b16 %v39
  %v179 = vunpack.c.l.b16 %v40
  %v180 = vunpack.c.l.b16 %v41
  %v181 = vunpack.c.l.b16 %v42
  %v182 = vunpack.c.l.b16 %v43
  %v183 = vunpack.c.l.b16 %v44
  %v184 = vunpack.c.l.b16 %v45
  %v185 = vunpack.c.l.b16 %v46
  %v186 = vunpack.c.l.b16 %v47
  %v187 = vunpack.c.l.b16 %v48
  %v188 = vunpack.c.l.b16 %v49
  %v189 = vunpack.c.l.b16 %v50
  %v190 = vunpack.c.l.b16 %v51
  %v191 = vunpack.c.l.b16 %v52
  %v192 = vunpack.c.l.b16 %v53
  %v193 = vunpack.c.l.b16 %v54
  %v194 = vunpack.c.l.b16 %v55
  %v195 = vunpack.c.l.b16 %v56
  %v196 = vunpack.c.l.b16 %v57
  %v197 = vunpack.c.l.b16 %v58
  %v198 = vunpack.c.l.b16 %v59
  %v199 = vunpack.c.l.b16 %v60
  %v200 = vunpack.c.l.b16 %v61
  %v201 = vunpack.c.l.b16 %v62
  %v202 = vunpack.c.l.b16 %v63
  %v203 = vunpack.c.l.b16 %v64
  %v204 = vunpack.c.l.b16 %v65
  %v205 = vunpack.c.l.b16 %v66
  %v206 = vunpack.c.l.b16 %v67
  %v207 = vunpack.c.l.b16 %v68
  %v208 = vunpack.c.l.b16 %v69
  %v209 = vunpack.c.l.b16 %v70
  %v210 = vunpack.c.l.b16 %v71
  %v211 = vunpack.c.l.b16 %v72
  %v212 = vunpack.c.l.b16 %v73
  %v213 = vunpack.c.l.b16 %v74
  %v214 = vunpack.c.l.b16 %v75
  %v215 = vunpack.c.l.b16 %v76
  %v216 = vunpack.c.l.b16 %v77
  %v217 = vunpack.c.l.b16 %v78
  %v218 = vpack.c.b16 %v155, %v154
  %v219 = vpack.c.b16 %v157, %v156
  %v220 = vpack.c.b16 %v159, %v158
  %v221 = vpack.c.b16 %v161, %v160
  %v222 = vpack.c.b16 %v163, %v162
  %v223 = vpack.c.b16 %v165, %v164
  %v224 = vpack.c.b16 %v167, %v166
  %v225 = vpack.c.b16 %v169, %v168
  %v226 = vpack.c.b16 %v171, %v170
  %v227 = vpack.c.b16 %v173, %v172
  %v228 = vpack.c.b16 %v175, %v174
  %v229 = vpack.c.b16 %v177, %v176
  %v230 = vpack.c.b16 %v179, %v178
  %v231 = vpack.c.b16 %v181, %v180
  %v232 = vpack.c.b16 %v183, %v182
  %v233 = vpack.c.b16 %v185, %v184
  %v234 = vpack.c.b16 %v187, %v186
  %v235 = vpack.c.b16 %v189, %v188
  %v236 = vpack.c.b16 %v191, %v190
  %v237 = vpack.c.b16 %v193, %v192
  %v238 = vpack.c.b16 %v195, %v194
  %v239 = vpack.c.b16 %v197, %v196
  %v240 = vpack.c.b16 %v199, %v198
  %v241 = vpack.c.b16 %v201, %v200
  %v242 = vpack.c.b16 %v203, %v202
  %v243 = vpack.c.b16 %v205, %v204
  %v244 = vpack.c.b16 %v207, %v206
  %v245 = vpack.c.b16 %v209, %v208
  %v246 = vpack.c.b16 %v211, %v210
  %v247 = vpack.c.b16 %v213, %v212
  %v248 = vpack.c.b16 %v215, %v214
  %v249 = vpack.c.b16 %v217, %v216
  %v254 = vunpack.c.l.b16 %v79
  %v255 = vunpack.c.l.b16 %v80
  %v256 = vunpack.c.l.b16 %v81
  %v257 = vunpack.c.l.b16 %v82
  %v258 = vpack.c.b16 %v255, %v254
  %v259 = vpack.c.b16 %v257, %v256
  %vm262 = vcmask 261120
  %v264 = vsel %vm262, %v218, 0
  %v267 = vsel %vm262, %v219, 0
  %v270 = vsel %vm262, %v220, 0
  %v273 = vsel %vm262, %v221, 0
  %v276 = vsel %vm262, %v222, 0
  %v279 = vsel %vm262, %v223, 0
  %v282 = vsel %vm262, %v224, 0
  %v285 = vsel %vm262, %v225, 0
  %v288 = vsel %vm262, %v226, 0
  %v291 = vsel %vm262, %v227, 0
  %v294 = vsel %vm262, %v228, 0
  %v297 = vsel %vm262, %v229, 0
  %v300 = vsel %vm262, %v230, 0
  %v303 = vsel %vm262, %v231, 0
  %v306 = vsel %vm262, %v232, 0
  %v309 = vsel %vm262, %v233, 0
  %v312 = vsel %vm262, %v234, 0
  %v315 = vsel %vm262, %v235, 0
  %v318 = vsel %vm262, %v236, 0
  %v321 = vsel %vm262, %v237, 0
  %v324 = vsel %vm262, %v238, 0
  %v327 = vsel %vm262, %v239, 0
  %v330 = vsel %vm262, %v240, 0
  %v333 = vsel %vm262, %v241, 0
  %v336 = vsel %vm262, %v242, 0
  %v339 = vsel %vm262, %v243, 0
  %v342 = vsel %vm262, %v244, 0
  %v345 = vsel %vm262, %v245, 0
  %v348 = vsel %vm262, %v246, 0
  %v351 = vsel %vm262, %v247, 0
  %v354 = vsel %vm262, %v248, 0
  %v357 = vsel %vm262, %v249, 0
  %359 = vmatprep.subr.bf16.mxu0 0
  %360 = vmatpush1.bf16.msra.mxu0 %v258
  %361 = vmatprep.subr.bf16.mxu0 0
  %362 = vmatpush1.bf16.msra.mxu0 %v259
  %363 = vmatprep.subr.bf16.mxu0 0
  %364 = vmatpush1.bf16.msra.mxu0 0
  %365 = vmatprep.subr.bf16.mxu0 0
  %366 = vmatpush1.bf16.msra.mxu0 0
  %367 = vmatprep.subr.bf16.mxu0 0
  %368 = vmatpush1.bf16.msra.mxu0 0
  %369 = vmatprep.subr.bf16.mxu0 0
  %370 = vmatpush1.bf16.msra.mxu0 0
  %371 = vmatprep.subr.bf16.mxu0 0
  %372 = vmatpush1.bf16.msra.mxu0 0
  %373 = vmatprep.subr.bf16.mxu0 0
  %374 = vmatpush1.bf16.msra.mxu0 0
  %375 = vmatprep.subr.bf16.mxu0 0
  %376 = vmatpush1.bf16.msra.mxu0 0
  %377 = vmatprep.subr.bf16.mxu0 0
  %378 = vmatpush1.bf16.msra.mxu0 0
  %379 = vmatprep.subr.bf16.mxu0 0
  %380 = vmatpush1.bf16.msra.mxu0 0
  %381 = vmatprep.subr.bf16.mxu0 0
  %382 = vmatpush1.bf16.msra.mxu0 0
  %383 = vmatprep.subr.bf16.mxu0 0
  %384 = vmatpush1.bf16.msra.mxu0 0
  %385 = vmatprep.subr.bf16.mxu0 0
  %386 = vmatpush1.bf16.msra.mxu0 0
  %387 = vmatprep.subr.bf16.mxu0 0
  %388 = vmatpush1.bf16.msra.mxu0 0
  %389 = vmatprep.subr.bf16.mxu0 0
  %390 = vmatpush1.bf16.msra.mxu0 0
  %391 = vmatprep.mubr.bf16.mxu0 0
  %392 = vmatmul.mubr.bf16.gmra.mrb[0].mxu0 %v264
  %v393 = vpop.f32.mrb[0].mxu0
  %v394 = vadd.f32 %v88, %v393
  %v395 = vpop.f32.mrb[0].mxu0
  %v396 = vpop.f32.mrb[0].mxu0
  %v397 = vadd.f32 %v88, %v396
  %v398 = vpop.f32.mrb[0].mxu0
  %399 = vmatprep.mubr.bf16.mxu0 0
  %400 = vmatmul.mubr.bf16.gmra.mrb[0].mxu0 %v267
  %v401 = vpop.f32.mrb[0].mxu0
  %v402 = vadd.f32 %v88, %v401
  %v403 = vpop.f32.mrb[0].mxu0
  %v404 = vpop.f32.mrb[0].mxu0
  %v405 = vadd.f32 %v88, %v404
  %v406 = vpop.f32.mrb[0].mxu0
  %407 = vmatprep.mubr.bf16.mxu0 0
  %408 = vmatmul.mubr.bf16.gmra.mrb[0].mxu0 %v270
  %v409 = vpop.f32.mrb[0].mxu0
  %v410 = vadd.f32 %v88, %v409
  %v411 = vpop.f32.mrb[0].mxu0
  %v412 = vpop.f32.mrb[0].mxu0
  %v413 = vadd.f32 %v88, %v412
  %v414 = vpop.f32.mrb[0].mxu0
  %415 = vmatprep.mubr.bf16.mxu0 0
  %416 = vmatmul.mubr.bf16.gmra.mrb[0].mxu0 %v273
  %v417 = vpop.f32.mrb[0].mxu0
  %v418 = vadd.f32 %v88, %v417
  %v419 = vpop.f32.mrb[0].mxu0
  %v420 = vpop.f32.mrb[0].mxu0
  %v421 = vadd.f32 %v88, %v420
  %v422 = vpop.f32.mrb[0].mxu0
  %423 = vmatprep.mubr.bf16.mxu0 0
  %424 = vmatmul.mubr.bf16.gmra.mrb[0].mxu0 %v276
  %v425 = vpop.f32.mrb[0].mxu0
  %v426 = vadd.f32 %v88, %v425
  %v427 = vpop.f32.mrb[0].mxu0
  %v428 = vpop.f32.mrb[0].mxu0
  %v429 = vadd.f32 %v88, %v428
  %v430 = vpop.f32.mrb[0].mxu0
  %431 = vmatprep.mubr.bf16.mxu0 0
  %432 = vmatmul.mubr.bf16.gmra.mrb[0].mxu0 %v279
  %v433 = vpop.f32.mrb[0].mxu0
  %v434 = vadd.f32 %v88, %v433
  %v435 = vpop.f32.mrb[0].mxu0
  %v436 = vpop.f32.mrb[0].mxu0
  %v437 = vadd.f32 %v88, %v436
  %v438 = vpop.f32.mrb[0].mxu0
  %439 = vmatprep.mubr.bf16.mxu0 0
  %440 = vmatmul.mubr.bf16.gmra.mrb[0].mxu0 %v282
  %v441 = vpop.f32.mrb[0].mxu0
  %v442 = vadd.f32 %v88, %v441
  %v443 = vpop.f32.mrb[0].mxu0
  %v444 = vpop.f32.mrb[0].mxu0
  %v445 = vadd.f32 %v88, %v444
  %v446 = vpop.f32.mrb[0].mxu0
  %447 = vmatprep.mubr.bf16.mxu0 0
  %448 = vmatmul.mubr.bf16.gmra.mrb[0].mxu0 %v285
  %v449 = vpop.f32.mrb[0].mxu0
  %v450 = vadd.f32 %v88, %v449
  %v451 = vpop.f32.mrb[0].mxu0
  %v452 = vpop.f32.mrb[0].mxu0
  %v453 = vadd.f32 %v88, %v452
  %v454 = vpop.f32.mrb[0].mxu0
  %455 = vmatprep.mubr.bf16.mxu0 0
  %456 = vmatmul.mubr.bf16.gmra.mrb[0].mxu0 %v288
  %v457 = vpop.f32.mrb[0].mxu0
  %v458 = vadd.f32 %v88, %v457
  %v459 = vpop.f32.mrb[0].mxu0
  %v460 = vpop.f32.mrb[0].mxu0
  %v461 = vadd.f32 %v88, %v460
  %v462 = vpop.f32.mrb[0].mxu0
  %463 = vmatprep.mubr.bf16.mxu0 0
  %464 = vmatmul.mubr.bf16.gmra.mrb[0].mxu0 %v291
  %v465 = vpop.f32.mrb[0].mxu0
  %v466 = vadd.f32 %v88, %v465
  %v467 = vpop.f32.mrb[0].mxu0
  %v468 = vpop.f32.mrb[0].mxu0
  %v469 = vadd.f32 %v88, %v468
  %v470 = vpop.f32.mrb[0].mxu0
  %471 = vmatprep.mubr.bf16.mxu0 0
  %472 = vmatmul.mubr.bf16.gmra.mrb[0].mxu0 %v294
  %v473 = vpop.f32.mrb[0].mxu0
  %v474 = vadd.f32 %v88, %v473
  %v475 = vpop.f32.mrb[0].mxu0
  %v476 = vpop.f32.mrb[0].mxu0
  %v477 = vadd.f32 %v88, %v476
  %v478 = vpop.f32.mrb[0].mxu0
  %479 = vmatprep.mubr.bf16.mxu0 0
  %480 = vmatmul.mubr.bf16.gmra.mrb[0].mxu0 %v297
  %v481 = vpop.f32.mrb[0].mxu0
  %v482 = vadd.f32 %v88, %v481
  %v483 = vpop.f32.mrb[0].mxu0
  %v484 = vpop.f32.mrb[0].mxu0
  %v485 = vadd.f32 %v88, %v484
  %v486 = vpop.f32.mrb[0].mxu0
  %487 = vmatprep.mubr.bf16.mxu0 0
  %488 = vmatmul.mubr.bf16.gmra.mrb[0].mxu0 %v300
  %v489 = vpop.f32.mrb[0].mxu0
  %v490 = vadd.f32 %v88, %v489
  %v491 = vpop.f32.mrb[0].mxu0
  %v492 = vpop.f32.mrb[0].mxu0
  %v493 = vadd.f32 %v88, %v492
  %v494 = vpop.f32.mrb[0].mxu0
  %495 = vmatprep.mubr.bf16.mxu0 0
  %496 = vmatmul.mubr.bf16.gmra.mrb[0].mxu0 %v303
  %v497 = vpop.f32.mrb[0].mxu0
  %v498 = vadd.f32 %v88, %v497
  %v499 = vpop.f32.mrb[0].mxu0
  %v500 = vpop.f32.mrb[0].mxu0
  %v501 = vadd.f32 %v88, %v500
  %v502 = vpop.f32.mrb[0].mxu0
  %503 = vmatprep.mubr.bf16.mxu0 0
  %504 = vmatmul.mubr.bf16.gmra.mrb[0].mxu0 %v306
  %v505 = vpop.f32.mrb[0].mxu0
  %v506 = vadd.f32 %v88, %v505
  %v507 = vpop.f32.mrb[0].mxu0
  %v508 = vpop.f32.mrb[0].mxu0
  %v509 = vadd.f32 %v88, %v508
  %v510 = vpop.f32.mrb[0].mxu0
  %511 = vmatprep.mubr.bf16.mxu0 0
  %512 = vmatmul.mubr.bf16.gmra.mrb[0].mxu0 %v309
  %v513 = vpop.f32.mrb[0].mxu0
  %v514 = vadd.f32 %v88, %v513
  %v515 = vpop.f32.mrb[0].mxu0
  %v516 = vpop.f32.mrb[0].mxu0
  %v517 = vadd.f32 %v88, %v516
  %v518 = vpop.f32.mrb[0].mxu0
  %519 = vmatprep.mubr.bf16.mxu0 0
  %520 = vmatmul.mubr.bf16.gmra.mrb[0].mxu0 %v312
  %v521 = vpop.f32.mrb[0].mxu0
  %v522 = vadd.f32 %v88, %v521
  %v523 = vpop.f32.mrb[0].mxu0
  %v524 = vpop.f32.mrb[0].mxu0
  %v525 = vadd.f32 %v88, %v524
  %v526 = vpop.f32.mrb[0].mxu0
  %527 = vmatprep.mubr.bf16.mxu0 0
  %528 = vmatmul.mubr.bf16.gmra.mrb[0].mxu0 %v315
  %v529 = vpop.f32.mrb[0].mxu0
  %v530 = vadd.f32 %v88, %v529
  %v531 = vpop.f32.mrb[0].mxu0
  %v532 = vpop.f32.mrb[0].mxu0
  %v533 = vadd.f32 %v88, %v532
  %v534 = vpop.f32.mrb[0].mxu0
  %535 = vmatprep.mubr.bf16.mxu0 0
  %536 = vmatmul.mubr.bf16.gmra.mrb[0].mxu0 %v318
  %v537 = vpop.f32.mrb[0].mxu0
  %v538 = vadd.f32 %v88, %v537
  %v539 = vpop.f32.mrb[0].mxu0
  %v540 = vpop.f32.mrb[0].mxu0
  %v541 = vadd.f32 %v88, %v540
  %v542 = vpop.f32.mrb[0].mxu0
  %543 = vmatprep.mubr.bf16.mxu0 0
  %544 = vmatmul.mubr.bf16.gmra.mrb[0].mxu0 %v321
  %v545 = vpop.f32.mrb[0].mxu0
  %v546 = vadd.f32 %v88, %v545
  %v547 = vpop.f32.mrb[0].mxu0
  %v548 = vpop.f32.mrb[0].mxu0
  %v549 = vadd.f32 %v88, %v548
  %v550 = vpop.f32.mrb[0].mxu0
  %551 = vmatprep.mubr.bf16.mxu0 0
  %552 = vmatmul.mubr.bf16.gmra.mrb[0].mxu0 %v324
  %v553 = vpop.f32.mrb[0].mxu0
  %v554 = vadd.f32 %v88, %v553
  %v555 = vpop.f32.mrb[0].mxu0
  %v556 = vpop.f32.mrb[0].mxu0
  %v557 = vadd.f32 %v88, %v556
  %v558 = vpop.f32.mrb[0].mxu0
  %559 = vmatprep.mubr.bf16.mxu0 0
  %560 = vmatmul.mubr.bf16.gmra.mrb[0].mxu0 %v327
  %v561 = vpop.f32.mrb[0].mxu0
  %v562 = vadd.f32 %v88, %v561
  %v563 = vpop.f32.mrb[0].mxu0
  %v564 = vpop.f32.mrb[0].mxu0
  %v565 = vadd.f32 %v88, %v564
  %v566 = vpop.f32.mrb[0].mxu0
  %567 = vmatprep.mubr.bf16.mxu0 0
  %568 = vmatmul.mubr.bf16.gmra.mrb[0].mxu0 %v330
  %v569 = vpop.f32.mrb[0].mxu0
  %v570 = vadd.f32 %v88, %v569
  %v571 = vpop.f32.mrb[0].mxu0
  %v572 = vpop.f32.mrb[0].mxu0
  %v573 = vadd.f32 %v88, %v572
  %v574 = vpop.f32.mrb[0].mxu0
  %575 = vmatprep.mubr.bf16.mxu0 0
  %576 = vmatmul.mubr.bf16.gmra.mrb[0].mxu0 %v333
  %v577 = vpop.f32.mrb[0].mxu0
  %v578 = vadd.f32 %v88, %v577
  %v579 = vpop.f32.mrb[0].mxu0
  %v580 = vpop.f32.mrb[0].mxu0
  %v581 = vadd.f32 %v88, %v580
  %v582 = vpop.f32.mrb[0].mxu0
  %583 = vmatprep.mubr.bf16.mxu0 0
  %584 = vmatmul.mubr.bf16.gmra.mrb[0].mxu0 %v336
  %v585 = vpop.f32.mrb[0].mxu0
  %v586 = vadd.f32 %v88, %v585
  %v587 = vpop.f32.mrb[0].mxu0
  %v588 = vpop.f32.mrb[0].mxu0
  %v589 = vadd.f32 %v88, %v588
  %v590 = vpop.f32.mrb[0].mxu0
  %591 = vmatprep.mubr.bf16.mxu0 0
  %592 = vmatmul.mubr.bf16.gmra.mrb[0].mxu0 %v339
  %v593 = vpop.f32.mrb[0].mxu0
  %v594 = vadd.f32 %v88, %v593
  %v595 = vpop.f32.mrb[0].mxu0
  %v596 = vpop.f32.mrb[0].mxu0
  %v597 = vadd.f32 %v88, %v596
  %v598 = vpop.f32.mrb[0].mxu0
  %599 = vmatprep.mubr.bf16.mxu0 0
  %600 = vmatmul.mubr.bf16.gmra.mrb[0].mxu0 %v342
  %v601 = vpop.f32.mrb[0].mxu0
  %v602 = vadd.f32 %v88, %v601
  %v603 = vpop.f32.mrb[0].mxu0
  %v604 = vpop.f32.mrb[0].mxu0
  %v605 = vadd.f32 %v88, %v604
  %v606 = vpop.f32.mrb[0].mxu0
  %607 = vmatprep.mubr.bf16.mxu0 0
  %608 = vmatmul.mubr.bf16.gmra.mrb[0].mxu0 %v345
  %v609 = vpop.f32.mrb[0].mxu0
  %v610 = vadd.f32 %v88, %v609
  %v611 = vpop.f32.mrb[0].mxu0
  %v612 = vpop.f32.mrb[0].mxu0
  %v613 = vadd.f32 %v88, %v612
  %v614 = vpop.f32.mrb[0].mxu0
  %615 = vmatprep.mubr.bf16.mxu0 0
  %616 = vmatmul.mubr.bf16.gmra.mrb[0].mxu0 %v348
  %v617 = vpop.f32.mrb[0].mxu0
  %v618 = vadd.f32 %v88, %v617
  %v619 = vpop.f32.mrb[0].mxu0
  %v620 = vpop.f32.mrb[0].mxu0
  %v621 = vadd.f32 %v88, %v620
  %v622 = vpop.f32.mrb[0].mxu0
  %623 = vmatprep.mubr.bf16.mxu0 0
  %624 = vmatmul.mubr.bf16.gmra.mrb[0].mxu0 %v351
  %v625 = vpop.f32.mrb[0].mxu0
  %v626 = vadd.f32 %v88, %v625
  %v627 = vpop.f32.mrb[0].mxu0
  %v628 = vpop.f32.mrb[0].mxu0
  %v629 = vadd.f32 %v88, %v628
  %v630 = vpop.f32.mrb[0].mxu0
  %631 = vmatprep.mubr.bf16.mxu0 0
  %632 = vmatmul.mubr.bf16.gmra.mrb[0].mxu0 %v354
  %v633 = vpop.f32.mrb[0].mxu0
  %v634 = vadd.f32 %v88, %v633
  %v635 = vpop.f32.mrb[0].mxu0
  %v636 = vpop.f32.mrb[0].mxu0
  %v637 = vadd.f32 %v88, %v636
  %v638 = vpop.f32.mrb[0].mxu0
  %639 = vmatprep.mubr.bf16.mxu0 0
  %640 = vmatmul.mubr.bf16.gmra.mrb[0].mxu0 %v357
  %v641 = vpop.f32.mrb[0].mxu0
  %v642 = vadd.f32 %v88, %v641
  %v643 = vpop.f32.mrb[0].mxu0
  %v644 = vpop.f32.mrb[0].mxu0
  %v645 = vadd.f32 %v88, %v644
  %v646 = vpop.f32.mrb[0].mxu0
  %647 = vdwg.mxu0
  %v648 = vmax.f32 %v394, 0.0
  %v649 = vmax.f32 %v397, 0.0
  %v650 = vmax.f32 %v402, 0.0
  %v651 = vmax.f32 %v405, 0.0
  %v652 = vmax.f32 %v410, 0.0
  %v653 = vmax.f32 %v413, 0.0
  %v654 = vmax.f32 %v418, 0.0
  %v655 = vmax.f32 %v421, 0.0
  %v656 = vmax.f32 %v426, 0.0
  %v657 = vmax.f32 %v429, 0.0
  %v658 = vmax.f32 %v434, 0.0
  %v659 = vmax.f32 %v437, 0.0
  %v660 = vmax.f32 %v442, 0.0
  %v661 = vmax.f32 %v445, 0.0
  %v662 = vmax.f32 %v450, 0.0
  %v663 = vmax.f32 %v453, 0.0
  %v664 = vmax.f32 %v458, 0.0
  %v665 = vmax.f32 %v461, 0.0
  %v666 = vmax.f32 %v466, 0.0
  %v667 = vmax.f32 %v469, 0.0
  %v668 = vmax.f32 %v474, 0.0
  %v669 = vmax.f32 %v477, 0.0
  %v670 = vmax.f32 %v482, 0.0
  %v671 = vmax.f32 %v485, 0.0
  %v672 = vmax.f32 %v490, 0.0
  %v673 = vmax.f32 %v493, 0.0
  %v674 = vmax.f32 %v498, 0.0
  %v675 = vmax.f32 %v501, 0.0
  %v676 = vmax.f32 %v506, 0.0
  %v677 = vmax.f32 %v509, 0.0
  %v678 = vmax.f32 %v514, 0.0
  %v679 = vmax.f32 %v517, 0.0
  %v680 = vmax.f32 %v522, 0.0
  %v681 = vmax.f32 %v525, 0.0
  %v682 = vmax.f32 %v530, 0.0
  %v683 = vmax.f32 %v533, 0.0
  %v684 = vmax.f32 %v538, 0.0
  %v685 = vmax.f32 %v541, 0.0
  %v686 = vmax.f32 %v546, 0.0
  %v687 = vmax.f32 %v549, 0.0
  %v688 = vmax.f32 %v554, 0.0
  %v689 = vmax.f32 %v557, 0.0
  %v690 = vmax.f32 %v562, 0.0
  %v691 = vmax.f32 %v565, 0.0
  %v692 = vmax.f32 %v570, 0.0
  %v693 = vmax.f32 %v573, 0.0
  %v694 = vmax.f32 %v578, 0.0
  %v695 = vmax.f32 %v581, 0.0
  %v696 = vmax.f32 %v586, 0.0
  %v697 = vmax.f32 %v589, 0.0
  %v698 = vmax.f32 %v594, 0.0
  %v699 = vmax.f32 %v597, 0.0
  %v700 = vmax.f32 %v602, 0.0
  %v701 = vmax.f32 %v605, 0.0
  %v702 = vmax.f32 %v610, 0.0
  %v703 = vmax.f32 %v613, 0.0
  %v704 = vmax.f32 %v618, 0.0
  %v705 = vmax.f32 %v621, 0.0
  %v706 = vmax.f32 %v626, 0.0
  %v707 = vmax.f32 %v629, 0.0
  %v708 = vmax.f32 %v634, 0.0
  %v709 = vmax.f32 %v637, 0.0
  %v710 = vmax.f32 %v642, 0.0
  %v711 = vmax.f32 %v645, 0.0
  %vm712 = vcmask 31744
  %713 = vst.msk [vmem:[%s3] sm:$0xff] %vm712, %v648
  %714 = vst.msk [vmem:[%s3 + $0x8] sm:$0xff] %vm712, %v649
  %715 = vst.msk [vmem:[%s3 + $0x10] sm:$0xff] %vm712, %v650
  %716 = vst.msk [vmem:[%s3 + $0x18] sm:$0xff] %vm712, %v651
  %717 = vst.msk [vmem:[%s3 + $0x20] sm:$0xff] %vm712, %v652
  %718 = vst.msk [vmem:[%s3 + $0x28] sm:$0xff] %vm712, %v653
  %719 = vst.msk [vmem:[%s3 + $0x30] sm:$0xff] %vm712, %v654
  %720 = vst.msk [vmem:[%s3 + $0x38] sm:$0xff] %vm712, %v655
  %721 = vst.msk [vmem:[%s3 + $0x40] sm:$0xff] %vm712, %v656
  %722 = vst.msk [vmem:[%s3 + $0x48] sm:$0xff] %vm712, %v657
  %723 = vst.msk [vmem:[%s3 + $0x50] sm:$0xff] %vm712, %v658
  %724 = vst.msk [vmem:[%s3 + $0x58] sm:$0xff] %vm712, %v659
  %725 = vst.msk [vmem:[%s3 + $0x60] sm:$0xff] %vm712, %v660
  %726 = vst.msk [vmem:[%s3 + $0x68] sm:$0xff] %vm712, %v661
  %727 = vst.msk [vmem:[%s3 + $0x70] sm:$0xff] %vm712, %v662
  %728 = vst.msk [vmem:[%s3 + $0x78] sm:$0xff] %vm712, %v663
  %729 = vst.msk [vmem:[%s3 + $0x80] sm:$0xff] %vm712, %v664
  %730 = vst.msk [vmem:[%s3 + $0x88] sm:$0xff] %vm712, %v665
  %731 = vst.msk [vmem:[%s3 + $0x90] sm:$0xff] %vm712, %v666
  %732 = vst.msk [vmem:[%s3 + $0x98] sm:$0xff] %vm712, %v667
  %733 = vst.msk [vmem:[%s3 + $0xa0] sm:$0xff] %vm712, %v668
  %734 = vst.msk [vmem:[%s3 + $0xa8] sm:$0xff] %vm712, %v669
  %735 = vst.msk [vmem:[%s3 + $0xb0] sm:$0xff] %vm712, %v670
  %736 = vst.msk [vmem:[%s3 + $0xb8] sm:$0xff] %vm712, %v671
  %737 = vst.msk [vmem:[%s3 + $0xc0] sm:$0xff] %vm712, %v672
  %738 = vst.msk [vmem:[%s3 + $0xc8] sm:$0xff] %vm712, %v673
  %739 = vst.msk [vmem:[%s3 + $0xd0] sm:$0xff] %vm712, %v674
  %740 = vst.msk [vmem:[%s3 + $0xd8] sm:$0xff] %vm712, %v675
  %741 = vst.msk [vmem:[%s3 + $0xe0] sm:$0xff] %vm712, %v676
  %742 = vst.msk [vmem:[%s3 + $0xe8] sm:$0xff] %vm712, %v677
  %743 = vst.msk [vmem:[%s3 + $0xf0] sm:$0xff] %vm712, %v678
  %744 = vst.msk [vmem:[%s3 + $0xf8] sm:$0xff] %vm712, %v679
  %745 = vst.msk [vmem:[%s3 + $0x100] sm:$0xff] %vm712, %v680
  %746 = vst.msk [vmem:[%s3 + $0x108] sm:$0xff] %vm712, %v681
  %747 = vst.msk [vmem:[%s3 + $0x110] sm:$0xff] %vm712, %v682
  %748 = vst.msk [vmem:[%s3 + $0x118] sm:$0xff] %vm712, %v683
  %749 = vst.msk [vmem:[%s3 + $0x120] sm:$0xff] %vm712, %v684
  %750 = vst.msk [vmem:[%s3 + $0x128] sm:$0xff] %vm712, %v685
  %751 = vst.msk [vmem:[%s3 + $0x130] sm:$0xff] %vm712, %v686
  %752 = vst.msk [vmem:[%s3 + $0x138] sm:$0xff] %vm712, %v687
  %753 = vst.msk [vmem:[%s3 + $0x140] sm:$0xff] %vm712, %v688
  %754 = vst.msk [vmem:[%s3 + $0x148] sm:$0xff] %vm712, %v689
  %755 = vst.msk [vmem:[%s3 + $0x150] sm:$0xff] %vm712, %v690
  %756 = vst.msk [vmem:[%s3 + $0x158] sm:$0xff] %vm712, %v691
  %757 = vst.msk [vmem:[%s3 + $0x160] sm:$0xff] %vm712, %v692
  %758 = vst.msk [vmem:[%s3 + $0x168] sm:$0xff] %vm712, %v693
  %759 = vst.msk [vmem:[%s3 + $0x170] sm:$0xff] %vm712, %v694
  %760 = vst.msk [vmem:[%s3 + $0x178] sm:$0xff] %vm712, %v695
  %761 = vst.msk [vmem:[%s3 + $0x180] sm:$0xff] %vm712, %v696
  %762 = vst.msk [vmem:[%s3 + $0x188] sm:$0xff] %vm712, %v697
  %763 = vst.msk [vmem:[%s3 + $0x190] sm:$0xff] %vm712, %v698
  %764 = vst.msk [vmem:[%s3 + $0x198] sm:$0xff] %vm712, %v699
  %765 = vst.msk [vmem:[%s3 + $0x1a0] sm:$0xff] %vm712, %v700
  %766 = vst.msk [vmem:[%s3 + $0x1a8] sm:$0xff] %vm712, %v701
  %767 = vst.msk [vmem:[%s3 + $0x1b0] sm:$0xff] %vm712, %v702
  %768 = vst.msk [vmem:[%s3 + $0x1b8] sm:$0xff] %vm712, %v703
  %769 = vst.msk [vmem:[%s3 + $0x1c0] sm:$0xff] %vm712, %v704
  %770 = vst.msk [vmem:[%s3 + $0x1c8] sm:$0xff] %vm712, %v705
  %771 = vst.msk [vmem:[%s3 + $0x1d0] sm:$0xff] %vm712, %v706
  %772 = vst.msk [vmem:[%s3 + $0x1d8] sm:$0xff] %vm712, %v707
  %773 = vst.msk [vmem:[%s3 + $0x1e0] sm:$0xff] %vm712, %v708
  %774 = vst.msk [vmem:[%s3 + $0x1e8] sm:$0xff] %vm712, %v709
  %775 = vst.msk [vmem:[%s3 + $0x1f0] sm:$0xff] %vm712, %v710
  %776 = vst.msk [vmem:[%s3 + $0x1f8] sm:$0xff] %vm712, %v711
  // Predicated region
  $region14: #{autoencoder_forward.42} parent=0 // pred_check
    _
  $region15: #{autoencoder_forward.42} parent=0 // pred_check_branch
    %778 = sbr.rel (0) target = $region17
  $region16: #{autoencoder_forward.42} parent=0 // pred_region
    _
  $region17: #{autoencoder_forward.42} parent=0 // pred_fallthru
    _
  // Predicated region
  $region18: #{autoencoder_forward.42} parent=0 // pred_check
    _
  $region19: #{autoencoder_forward.42} parent=0 // pred_check_branch
    %780 = sbr.rel (0) target = $region21
  $region20: #{autoencoder_forward.42} parent=0 // pred_region
    _
  $region21: #{autoencoder_forward.42} parent=0 // pred_fallthru
    _

// kernel: autoencoder_forward.46
$region0: #{autoencoder_forward.46}
  #allocation0 [shape = 'u32[]', space=smem, size = 0x4, offset = 0x4, fixed_abs, tag = 'smem constant byte address 0x4 - core index']
  #allocation1 [shape = 'u32[144,128]{1,0:T(1,128)}', space=vmem, size = 0x12000, scoped, tag = 'internal scratch']
  %s0 = inlined_call_operand.vmem [shape: bf16[2048,16], index: 0, kind: input, shape index: {}]
  %s1 = inlined_call_operand.vmem [shape: bf16[16,3], index: 1, kind: input, shape index: {}]
  %s2 = inlined_call_operand.vmem [shape: f32[1,3], index: 2, kind: input, shape index: {}]
  %s3 = inlined_call_operand.vmem [shape: f32[2048,3], index: 3, kind: output, shape index: {}]
  %s4 = sld [smem:[#allocation0]]
  $region45: #{autoencoder_forward.46} parent=0
    _
  %s6 = ssub.s32 1, %s4
  %s7 = scalar_select 0, %s6, %s4
  loop: start=0, step=1, limit=6
  $region2: #{autoencoder_forward.46} parent=0 // loop_pre_header
    _
  $region3: #{autoencoder_forward.46} parent=0 // loop_header
    %s9 = sphi 0, %s13
    %p10 = scmp.ge.s32.totalorder %s9, 6
    %s19 = sphi 0, %s21
    %s22 = sphi 0, %s19
    %s23 = sphi 0, %s22
    %s39 = sphi 0, %s23
    %s43 = sphi 0, %s43
    %s45 = sphi 0, %s43
    %s46 = sphi 0, %s45
    %s60 = sphi 0, %s46
    %s64 = sphi 0, %s64
    %s66 = sphi 0, %s64
    %s67 = sphi 0, %s66
    %s81 = sphi 0, %s67
    %s87 = sphi 0, %s89
    %s90 = sphi 0, %s87
    %s91 = sphi 0, %s90
    %s107 = sphi 0, %s91
  $region4: #{autoencoder_forward.46} parent=0 // loop_header_branch
    %12 = sbr.rel (%p10) target = $region8
  $region5: #{autoencoder_forward.46} parent=0 // loop_body
    %s14 = ssub.s32 %s9, 1
    %s15 = ssub.s32 %s9, 2
    %s16 = sadd.s32 %s9, 1
    %s17 = ssub.s32 %s9, %s16
    %p18 = scmp.eq.s32.totalorder %s17, 0
    %s20 = sadd.s32 %s19, 1
    %s21 = scalar_select %p18, %s19, %s20
    %p24 = pneg %p18
    %p25 = scmp.eq.s32.totalorder %s9, 3
    %p26 = por %p24, %p25
    %p27 = scmp.ne.s32.totalorder %s19, %s22
    %p28 = scmp.eq.s32.totalorder %s9, 0
    %p29 = por %p27, %p28
    %p30 = scmp.ne.s32.totalorder %s19, %s22
    %p31 = scmp.eq.s32.totalorder %s14, 3
    %p32 = por %p30, %p31
    %p33 = scmp.ne.s32.totalorder %s22, %s23
    %p34 = scmp.eq.s32.totalorder %s14, 0
    %p35 = por %p33, %p34
    %p36 = scmp.ne.s32.totalorder %s22, %s23
    %p37 = scmp.eq.s32.totalorder %s15, 3
    %p38 = por %p36, %p37
    %p40 = scmp.ne.s32.totalorder %s23, %s39
    %p41 = scmp.eq.s32.totalorder %s15, 0
    %p42 = por %p40, %p41
    %s44 = sadd.s32 %s43, 1
    %p47 = scmp.eq.s32.totalorder %s9, 3
    %p48 = scmp.ne.s32.totalorder %s43, %s45
    %p49 = scmp.eq.s32.totalorder %s9, 0
    %p50 = por %p48, %p49
    %p51 = scmp.ne.s32.totalorder %s43, %s45
    %p52 = scmp.eq.s32.totalorder %s14, 3
    %p53 = por %p51, %p52
    %p54 = scmp.ne.s32.totalorder %s45, %s46
    %p55 = scmp.eq.s32.totalorder %s14, 0
    %p56 = por %p54, %p55
    %p57 = scmp.ne.s32.totalorder %s45, %s46
    %p58 = scmp.eq.s32.totalorder %s15, 3
    %p59 = por %p57, %p58
    %p61 = scmp.ne.s32.totalorder %s46, %s60
    %p62 = scmp.eq.s32.totalorder %s15, 0
    %p63 = por %p61, %p62
    %s65 = sadd.s32 %s64, 1
    %p68 = scmp.eq.s32.totalorder %s9, 3
    %p69 = scmp.ne.s32.totalorder %s64, %s66
    %p70 = scmp.eq.s32.totalorder %s9, 0
    %p71 = por %p69, %p70
    %p72 = scmp.ne.s32.totalorder %s64, %s66
    %p73 = scmp.eq.s32.totalorder %s14, 3
    %p74 = por %p72, %p73
    %p75 = scmp.ne.s32.totalorder %s66, %s67
    %p76 = scmp.eq.s32.totalorder %s14, 0
    %p77 = por %p75, %p76
    %p78 = scmp.ne.s32.totalorder %s66, %s67
    %p79 = scmp.eq.s32.totalorder %s15, 3
    %p80 = por %p78, %p79
    %p82 = scmp.ne.s32.totalorder %s67, %s81
    %p83 = scmp.eq.s32.totalorder %s15, 0
    %p84 = por %p82, %p83
    %s85 = ssub.s32 %s9, %s16
    %p86 = scmp.eq.s32.totalorder %s85, 0
    %s88 = sadd.s32 %s87, 1
    %s89 = scalar_select %p86, %s87, %s88
    %p92 = pneg %p86
    %p93 = scmp.eq.s32.totalorder %s9, 3
    %p94 = por %p92, %p93
    %p95 = scmp.ne.s32.totalorder %s87, %s90
    %p96 = scmp.eq.s32.totalorder %s9, 0
    %p97 = por %p95, %p96
    %p98 = scmp.ne.s32.totalorder %s87, %s90
    %p99 = scmp.eq.s32.totalorder %s14, 3
    %p100 = por %p98, %p99
    %p101 = scmp.ne.s32.totalorder %s90, %s91
    %p102 = scmp.eq.s32.totalorder %s14, 0
    %p103 = por %p101, %p102
    %p104 = scmp.ne.s32.totalorder %s90, %s91
    %p105 = scmp.eq.s32.totalorder %s15, 3
    %p106 = por %p104, %p105
    %p108 = scmp.ne.s32.totalorder %s91, %s107
    %p109 = scmp.eq.s32.totalorder %s15, 0
    %p110 = por %p108, %p109
    %p111 = scmp.le.s32.totalorder 1, %s9
    %p112 = scmp.lt.s32.totalorder %s9, 5
    %p113 = pnand %p111, %p112
    %p114 = pneg %p113
    // Predicated region
    $region9: #{autoencoder_forward.46} parent=5 // pred_check
      _
    $region10: #{autoencoder_forward.46} parent=5 // pred_check_branch
      %116 = sbr.rel (%p113) target = $region12
    $region11: #{autoencoder_forward.46} parent=5 // pred_region
      %s117 = ssub.s32 %s9, 1
      // Predicated region
      $region13: #{autoencoder_forward.46} parent=11 // pred_check
        %p118 = pneg %p56
      $region14: #{autoencoder_forward.46} parent=11 // pred_check_branch
        %120 = sbr.rel (%p118) target = $region16
      $region15: #{autoencoder_forward.46} parent=11 // pred_region
        _
      $region16: #{autoencoder_forward.46} parent=11 // pred_fallthru
        _
      // Predicated region
      $region17: #{autoencoder_forward.46} parent=11 // pred_check
        %p121 = pneg %p77
      $region18: #{autoencoder_forward.46} parent=11 // pred_check_branch
        %123 = sbr.rel (%p121) target = $region20
      $region19: #{autoencoder_forward.46} parent=11 // pred_region
        _
      $region20: #{autoencoder_forward.46} parent=11 // pred_fallthru
        _
    $region12: #{autoencoder_forward.46} parent=5 // pred_fallthru
      _
    %p124 = scmp.lt.s32.totalorder %s9, 4
    // Predicated region
    $region21: #{autoencoder_forward.46} parent=5 // pred_check
      %p125 = pneg %p124
    $region22: #{autoencoder_forward.46} parent=5 // pred_check_branch
      %127 = sbr.rel (%p125) target = $region24
    $region23: #{autoencoder_forward.46} parent=5 // pred_region
      // Predicated region
      $region25: #{autoencoder_forward.46} parent=23 // pred_check
        %p128 = pneg %p29
      $region26: #{autoencoder_forward.46} parent=23 // pred_check_branch
        %130 = sbr.rel (%p128) target = $region28
      $region27: #{autoencoder_forward.46} parent=23 // pred_region
        %s131 = smul.u32 64, %s9
        %p132 = scmp.lt.s32.totalorder %s131, 255
        %s133 = scalar_select %p132, %s131, 255
        %s134 = smul.addr %s133, 4
        %s135 = scalar_lea.vmem %s0, %s134
        %s136 = smul.u32 64, %s9
      $region28: #{autoencoder_forward.46} parent=23 // pred_fallthru
        _
    $region24: #{autoencoder_forward.46} parent=5 // pred_fallthru
      _
    %p137 = scmp.le.s32.totalorder 1, %s9
    %p138 = scmp.lt.s32.totalorder %s9, 5
    %p139 = pnand %p137, %p138
    %p140 = pneg %p139
    // Predicated region
    $region29: #{autoencoder_forward.46} parent=5 // pred_check
      _
    $region30: #{autoencoder_forward.46} parent=5 // pred_check_branch
      %142 = sbr.rel (%p139) target = $region32
    $region31: #{autoencoder_forward.46} parent=5 // pred_region
      %s143 = ssub.s32 %s9, 1
      %s144 = smul.u32 64, %s14
      %p145 = scmp.lt.s32.totalorder %s144, 255
      %s146 = scalar_select %p145, %s144, 255
      %s147 = smul.addr %s146, 4
      %s148 = scalar_lea.vmem %s0, %s147
      %p149 = pneg %p35
      %p150 = pneg %p32
      %p151 = pneg %p56
      %p152 = pneg %p53
      %p153 = pneg %p77
      %p154 = pneg %p74
      %p155 = pneg %p103
      %p156 = pneg %p100
      %s157 = smul.u32 64, %s14
      %p158 = scmp.lt.s32.totalorder %s157, 255
      %s159 = scalar_select %p158, %s157, 255
      %s160 = smul.addr %s159, 8
      %s161 = scalar_lea.vmem %s3, %s160
      %s162 = smul.u32 64, %s14
      %p163 = scmp.lt.s32.totalorder %s162, 255
      %s164 = scalar_select %p163, %s162, 255
      %s165 = smul.addr %s164, 4
      %s166 = scalar_lea.vmem %s0, %s165
      %s167 = smul.u32 64, %s14
      %s168 = smul.u32 64, %s14
      %p169 = scmp.lt.s32.totalorder %s168, 255
      %s170 = scalar_select %p169, %s168, 255
      %s171 = smul.addr %s170, 8
      %s172 = scalar_lea.vmem %s3, %s171
      %s173 = smul.u32 64, %s14
      %v175 = vld [vmem:[%s166] sm:$0xf]
      %v176 = vld [vmem:[%s166 + $0x4] sm:$0xf]
      %v177 = vld [vmem:[%s166 + $0x8] sm:$0xf]
      %v178 = vld [vmem:[%s166 + $0xc] sm:$0xf]
      %v179 = vld [vmem:[%s166 + $0x10] sm:$0xf]
      %v180 = vld [vmem:[%s166 + $0x14] sm:$0xf]
      %v181 = vld [vmem:[%s166 + $0x18] sm:$0xf]
      %v182 = vld [vmem:[%s166 + $0x1c] sm:$0xf]
      %v183 = vld [vmem:[%s166 + $0x20] sm:$0xf]
      %v184 = vld [vmem:[%s166 + $0x24] sm:$0xf]
      %v185 = vld [vmem:[%s166 + $0x28] sm:$0xf]
      %v186 = vld [vmem:[%s166 + $0x2c] sm:$0xf]
      %v187 = vld [vmem:[%s166 + $0x30] sm:$0xf]
      %v188 = vld [vmem:[%s166 + $0x34] sm:$0xf]
      %v189 = vld [vmem:[%s166 + $0x38] sm:$0xf]
      %v190 = vld [vmem:[%s166 + $0x3c] sm:$0xf]
      %v191 = vld [vmem:[%s166 + $0x40] sm:$0xf]
      %v192 = vld [vmem:[%s166 + $0x44] sm:$0xf]
      %v193 = vld [vmem:[%s166 + $0x48] sm:$0xf]
      %v194 = vld [vmem:[%s166 + $0x4c] sm:$0xf]
      %v195 = vld [vmem:[%s166 + $0x50] sm:$0xf]
      %v196 = vld [vmem:[%s166 + $0x54] sm:$0xf]
      %v197 = vld [vmem:[%s166 + $0x58] sm:$0xf]
      %v198 = vld [vmem:[%s166 + $0x5c] sm:$0xf]
      %v199 = vld [vmem:[%s166 + $0x60] sm:$0xf]
      %v200 = vld [vmem:[%s166 + $0x64] sm:$0xf]
      %v201 = vld [vmem:[%s166 + $0x68] sm:$0xf]
      %v202 = vld [vmem:[%s166 + $0x6c] sm:$0xf]
      %v203 = vld [vmem:[%s166 + $0x70] sm:$0xf]
      %v204 = vld [vmem:[%s166 + $0x74] sm:$0xf]
      %v205 = vld [vmem:[%s166 + $0x78] sm:$0xf]
      %v206 = vld [vmem:[%s166 + $0x7c] sm:$0xf]
      %v207 = vld [vmem:[%s166 + $0x80] sm:$0xf]
      %v208 = vld [vmem:[%s166 + $0x84] sm:$0xf]
      %v209 = vld [vmem:[%s166 + $0x88] sm:$0xf]
      %v210 = vld [vmem:[%s166 + $0x8c] sm:$0xf]
      %v211 = vld [vmem:[%s166 + $0x90] sm:$0xf]
      %v212 = vld [vmem:[%s166 + $0x94] sm:$0xf]
      %v213 = vld [vmem:[%s166 + $0x98] sm:$0xf]
      %v214 = vld [vmem:[%s166 + $0x9c] sm:$0xf]
      %v215 = vld [vmem:[%s166 + $0xa0] sm:$0xf]
      %v216 = vld [vmem:[%s166 + $0xa4] sm:$0xf]
      %v217 = vld [vmem:[%s166 + $0xa8] sm:$0xf]
      %v218 = vld [vmem:[%s166 + $0xac] sm:$0xf]
      %v219 = vld [vmem:[%s166 + $0xb0] sm:$0xf]
      %v220 = vld [vmem:[%s166 + $0xb4] sm:$0xf]
      %v221 = vld [vmem:[%s166 + $0xb8] sm:$0xf]
      %v222 = vld [vmem:[%s166 + $0xbc] sm:$0xf]
      %v223 = vld [vmem:[%s166 + $0xc0] sm:$0xf]
      %v224 = vld [vmem:[%s166 + $0xc4] sm:$0xf]
      %v225 = vld [vmem:[%s166 + $0xc8] sm:$0xf]
      %v226 = vld [vmem:[%s166 + $0xcc] sm:$0xf]
      %v227 = vld [vmem:[%s166 + $0xd0] sm:$0xf]
      %v228 = vld [vmem:[%s166 + $0xd4] sm:$0xf]
      %v229 = vld [vmem:[%s166 + $0xd8] sm:$0xf]
      %v230 = vld [vmem:[%s166 + $0xdc] sm:$0xf]
      %v231 = vld [vmem:[%s166 + $0xe0] sm:$0xf]
      %v232 = vld [vmem:[%s166 + $0xe4] sm:$0xf]
      %v233 = vld [vmem:[%s166 + $0xe8] sm:$0xf]
      %v234 = vld [vmem:[%s166 + $0xec] sm:$0xf]
      %v235 = vld [vmem:[%s166 + $0xf0] sm:$0xf]
      %v236 = vld [vmem:[%s166 + $0xf4] sm:$0xf]
      %v237 = vld [vmem:[%s166 + $0xf8] sm:$0xf]
      %v238 = vld [vmem:[%s166 + $0xfc] sm:$0xf]
      %v239 = vld [vmem:[%s1] sm:$0xf]
      %v240 = vld [vmem:[%s1 + $0x4] sm:$0xf]
      %v241 = vld [vmem:[%s2] sm:$0x1]
      %v243 = vlaneseq
      %v244 = vshrl.u32 %v243, 7
      %v245 = vsub.s32 0, %v244
      %v246 = vrot.slane %v241, %v245
      %v312 = vunpack.c.l.b16 %v175
      %v313 = vunpack.c.l.b16 %v176
      %v314 = vunpack.c.l.b16 %v177
      %v315 = vunpack.c.l.b16 %v178
      %v316 = vunpack.c.l.b16 %v179
      %v317 = vunpack.c.l.b16 %v180
      %v318 = vunpack.c.l.b16 %v181
      %v319 = vunpack.c.l.b16 %v182
      %v320 = vunpack.c.l.b16 %v183
      %v321 = vunpack.c.l.b16 %v184
      %v322 = vunpack.c.l.b16 %v185
      %v323 = vunpack.c.l.b16 %v186
      %v324 = vunpack.c.l.b16 %v187
      %v325 = vunpack.c.l.b16 %v188
      %v326 = vunpack.c.l.b16 %v189
      %v327 = vunpack.c.l.b16 %v190
      %v328 = vunpack.c.l.b16 %v191
      %v329 = vunpack.c.l.b16 %v192
      %v330 = vunpack.c.l.b16 %v193
      %v331 = vunpack.c.l.b16 %v194
      %v332 = vunpack.c.l.b16 %v195
      %v333 = vunpack.c.l.b16 %v196
      %v334 = vunpack.c.l.b16 %v197
      %v335 = vunpack.c.l.b16 %v198
      %v336 = vunpack.c.l.b16 %v199
      %v337 = vunpack.c.l.b16 %v200
      %v338 = vunpack.c.l.b16 %v201
      %v339 = vunpack.c.l.b16 %v202
      %v340 = vunpack.c.l.b16 %v203
      %v341 = vunpack.c.l.b16 %v204
      %v342 = vunpack.c.l.b16 %v205
      %v343 = vunpack.c.l.b16 %v206
      %v344 = vunpack.c.l.b16 %v207
      %v345 = vunpack.c.l.b16 %v208
      %v346 = vunpack.c.l.b16 %v209
      %v347 = vunpack.c.l.b16 %v210
      %v348 = vunpack.c.l.b16 %v211
      %v349 = vunpack.c.l.b16 %v212
      %v350 = vunpack.c.l.b16 %v213
      %v351 = vunpack.c.l.b16 %v214
      %v352 = vunpack.c.l.b16 %v215
      %v353 = vunpack.c.l.b16 %v216
      %v354 = vunpack.c.l.b16 %v217
      %v355 = vunpack.c.l.b16 %v218
      %v356 = vunpack.c.l.b16 %v219
      %v357 = vunpack.c.l.b16 %v220
      %v358 = vunpack.c.l.b16 %v221
      %v359 = vunpack.c.l.b16 %v222
      %v360 = vunpack.c.l.b16 %v223
      %v361 = vunpack.c.l.b16 %v224
      %v362 = vunpack.c.l.b16 %v225
      %v363 = vunpack.c.l.b16 %v226
      %v364 = vunpack.c.l.b16 %v227
      %v365 = vunpack.c.l.b16 %v228
      %v366 = vunpack.c.l.b16 %v229
      %v367 = vunpack.c.l.b16 %v230
      %v368 = vunpack.c.l.b16 %v231
      %v369 = vunpack.c.l.b16 %v232
      %v370 = vunpack.c.l.b16 %v233
      %v371 = vunpack.c.l.b16 %v234
      %v372 = vunpack.c.l.b16 %v235
      %v373 = vunpack.c.l.b16 %v236
      %v374 = vunpack.c.l.b16 %v237
      %v375 = vunpack.c.l.b16 %v238
      %v376 = vpack.c.b16 %v313, %v312
      %v377 = vpack.c.b16 %v315, %v314
      %v378 = vpack.c.b16 %v317, %v316
      %v379 = vpack.c.b16 %v319, %v318
      %v380 = vpack.c.b16 %v321, %v320
      %v381 = vpack.c.b16 %v323, %v322
      %v382 = vpack.c.b16 %v325, %v324
      %v383 = vpack.c.b16 %v327, %v326
      %v384 = vpack.c.b16 %v329, %v328
      %v385 = vpack.c.b16 %v331, %v330
      %v386 = vpack.c.b16 %v333, %v332
      %v387 = vpack.c.b16 %v335, %v334
      %v388 = vpack.c.b16 %v337, %v336
      %v389 = vpack.c.b16 %v339, %v338
      %v390 = vpack.c.b16 %v341, %v340
      %v391 = vpack.c.b16 %v343, %v342
      %v392 = vpack.c.b16 %v345, %v344
      %v393 = vpack.c.b16 %v347, %v346
      %v394 = vpack.c.b16 %v349, %v348
      %v395 = vpack.c.b16 %v351, %v350
      %v396 = vpack.c.b16 %v353, %v352
      %v397 = vpack.c.b16 %v355, %v354
      %v398 = vpack.c.b16 %v357, %v356
      %v399 = vpack.c.b16 %v359, %v358
      %v400 = vpack.c.b16 %v361, %v360
      %v401 = vpack.c.b16 %v363, %v362
      %v402 = vpack.c.b16 %v365, %v364
      %v403 = vpack.c.b16 %v367, %v366
      %v404 = vpack.c.b16 %v369, %v368
      %v405 = vpack.c.b16 %v371, %v370
      %v406 = vpack.c.b16 %v373, %v372
      %v407 = vpack.c.b16 %v375, %v374
      %v410 = vunpack.c.l.b16 %v239
      %v411 = vunpack.c.l.b16 %v240
      %v412 = vpack.c.b16 %v411, %v410
      %vm414 = vcmask 130048
      %v416 = vsel %vm414, %v376, 0
      %v419 = vsel %vm414, %v377, 0
      %v422 = vsel %vm414, %v378, 0
      %v425 = vsel %vm414, %v379, 0
      %v428 = vsel %vm414, %v380, 0
      %v431 = vsel %vm414, %v381, 0
      %v434 = vsel %vm414, %v382, 0
      %v437 = vsel %vm414, %v383, 0
      %v440 = vsel %vm414, %v384, 0
      %v443 = vsel %vm414, %v385, 0
      %v446 = vsel %vm414, %v386, 0
      %v449 = vsel %vm414, %v387, 0
      %v452 = vsel %vm414, %v388, 0
      %v455 = vsel %vm414, %v389, 0
      %v458 = vsel %vm414, %v390, 0
      %v461 = vsel %vm414, %v391, 0
      %v464 = vsel %vm414, %v392, 0
      %v467 = vsel %vm414, %v393, 0
      %v470 = vsel %vm414, %v394, 0
      %v473 = vsel %vm414, %v395, 0
      %v476 = vsel %vm414, %v396, 0
      %v479 = vsel %vm414, %v397, 0
      %v482 = vsel %vm414, %v398, 0
      %v485 = vsel %vm414, %v399, 0
      %v488 = vsel %vm414, %v400, 0
      %v491 = vsel %vm414, %v401, 0
      %v494 = vsel %vm414, %v402, 0
      %v497 = vsel %vm414, %v403, 0
      %v500 = vsel %vm414, %v404, 0
      %v503 = vsel %vm414, %v405, 0
      %v506 = vsel %vm414, %v406, 0
      %v509 = vsel %vm414, %v407, 0
      %511 = vmatprep.subr.bf16.mxu0 0
      %512 = vmatpush1.bf16.msra.mxu0 %v412
      %513 = vmatprep.subr.bf16.mxu0 0
      %514 = vmatpush1.bf16.msra.mxu0 0
      %515 = vmatprep.subr.bf16.mxu0 0
      %516 = vmatpush1.bf16.msra.mxu0 0
      %517 = vmatprep.subr.bf16.mxu0 0
      %518 = vmatpush1.bf16.msra.mxu0 0
      %519 = vmatprep.subr.bf16.mxu0 0
      %520 = vmatpush1.bf16.msra.mxu0 0
      %521 = vmatprep.subr.bf16.mxu0 0
      %522 = vmatpush1.bf16.msra.mxu0 0
      %523 = vmatprep.subr.bf16.mxu0 0
      %524 = vmatpush1.bf16.msra.mxu0 0
      %525 = vmatprep.subr.bf16.mxu0 0
      %526 = vmatpush1.bf16.msra.mxu0 0
      %527 = vmatprep.subr.bf16.mxu0 0
      %528 = vmatpush1.bf16.msra.mxu0 0
      %529 = vmatprep.subr.bf16.mxu0 0
      %530 = vmatpush1.bf16.msra.mxu0 0
      %531 = vmatprep.subr.bf16.mxu0 0
      %532 = vmatpush1.bf16.msra.mxu0 0
      %533 = vmatprep.subr.bf16.mxu0 0
      %534 = vmatpush1.bf16.msra.mxu0 0
      %535 = vmatprep.subr.bf16.mxu0 0
      %536 = vmatpush1.bf16.msra.mxu0 0
      %537 = vmatprep.subr.bf16.mxu0 0
      %538 = vmatpush1.bf16.msra.mxu0 0
      %539 = vmatprep.subr.bf16.mxu0 0
      %540 = vmatpush1.bf16.msra.mxu0 0
      %541 = vmatprep.subr.bf16.mxu0 0
      %542 = vmatpush1.bf16.msra.mxu0 0
      %543 = vmatprep.mubr.bf16.mxu0 0
      %544 = vmatmul.mubr.bf16.gmra.mrb[0].mxu0 %v416
      %v545 = vpop.f32.mrb[0].mxu0
      %v546 = vadd.f32 %v246, %v545
      %v547 = vpop.f32.mrb[0].mxu0
      %v548 = vpop.f32.mrb[0].mxu0
      %v549 = vadd.f32 %v246, %v548
      %v550 = vpop.f32.mrb[0].mxu0
      %551 = vmatprep.mubr.bf16.mxu0 0
      %552 = vmatmul.mubr.bf16.gmra.mrb[0].mxu0 %v419
      %v553 = vpop.f32.mrb[0].mxu0
      %v554 = vadd.f32 %v246, %v553
      %v555 = vpop.f32.mrb[0].mxu0
      %v556 = vpop.f32.mrb[0].mxu0
      %v557 = vadd.f32 %v246, %v556
      %v558 = vpop.f32.mrb[0].mxu0
      %559 = vmatprep.mubr.bf16.mxu0 0
      %560 = vmatmul.mubr.bf16.gmra.mrb[0].mxu0 %v422
      %v561 = vpop.f32.mrb[0].mxu0
      %v562 = vadd.f32 %v246, %v561
      %v563 = vpop.f32.mrb[0].mxu0
      %v564 = vpop.f32.mrb[0].mxu0
      %v565 = vadd.f32 %v246, %v564
      %v566 = vpop.f32.mrb[0].mxu0
      %567 = vmatprep.mubr.bf16.mxu0 0
      %568 = vmatmul.mubr.bf16.gmra.mrb[0].mxu0 %v425
      %v569 = vpop.f32.mrb[0].mxu0
      %v570 = vadd.f32 %v246, %v569
      %v571 = vpop.f32.mrb[0].mxu0
      %v572 = vpop.f32.mrb[0].mxu0
      %v573 = vadd.f32 %v246, %v572
      %v574 = vpop.f32.mrb[0].mxu0
      %575 = vmatprep.mubr.bf16.mxu0 0
      %576 = vmatmul.mubr.bf16.gmra.mrb[0].mxu0 %v428
      %v577 = vpop.f32.mrb[0].mxu0
      %v578 = vadd.f32 %v246, %v577
      %v579 = vpop.f32.mrb[0].mxu0
      %v580 = vpop.f32.mrb[0].mxu0
      %v581 = vadd.f32 %v246, %v580
      %v582 = vpop.f32.mrb[0].mxu0
      %583 = vmatprep.mubr.bf16.mxu0 0
      %584 = vmatmul.mubr.bf16.gmra.mrb[0].mxu0 %v431
      %v585 = vpop.f32.mrb[0].mxu0
      %v586 = vadd.f32 %v246, %v585
      %v587 = vpop.f32.mrb[0].mxu0
      %v588 = vpop.f32.mrb[0].mxu0
      %v589 = vadd.f32 %v246, %v588
      %v590 = vpop.f32.mrb[0].mxu0
      %591 = vmatprep.mubr.bf16.mxu0 0
      %592 = vmatmul.mubr.bf16.gmra.mrb[0].mxu0 %v434
      %v593 = vpop.f32.mrb[0].mxu0
      %v594 = vadd.f32 %v246, %v593
      %v595 = vpop.f32.mrb[0].mxu0
      %v596 = vpop.f32.mrb[0].mxu0
      %v597 = vadd.f32 %v246, %v596
      %v598 = vpop.f32.mrb[0].mxu0
      %599 = vmatprep.mubr.bf16.mxu0 0
      %600 = vmatmul.mubr.bf16.gmra.mrb[0].mxu0 %v437
      %v601 = vpop.f32.mrb[0].mxu0
      %v602 = vadd.f32 %v246, %v601
      %v603 = vpop.f32.mrb[0].mxu0
      %v604 = vpop.f32.mrb[0].mxu0
      %v605 = vadd.f32 %v246, %v604
      %v606 = vpop.f32.mrb[0].mxu0
      %607 = vmatprep.mubr.bf16.mxu0 0
      %608 = vmatmul.mubr.bf16.gmra.mrb[0].mxu0 %v440
      %v609 = vpop.f32.mrb[0].mxu0
      %v610 = vadd.f32 %v246, %v609
      %v611 = vpop.f32.mrb[0].mxu0
      %v612 = vpop.f32.mrb[0].mxu0
      %v613 = vadd.f32 %v246, %v612
      %v614 = vpop.f32.mrb[0].mxu0
      %615 = vmatprep.mubr.bf16.mxu0 0
      %616 = vmatmul.mubr.bf16.gmra.mrb[0].mxu0 %v443
      %v617 = vpop.f32.mrb[0].mxu0
      %v618 = vadd.f32 %v246, %v617
      %v619 = vpop.f32.mrb[0].mxu0
      %v620 = vpop.f32.mrb[0].mxu0
      %v621 = vadd.f32 %v246, %v620
      %v622 = vpop.f32.mrb[0].mxu0
      %623 = vmatprep.mubr.bf16.mxu0 0
      %624 = vmatmul.mubr.bf16.gmra.mrb[0].mxu0 %v446
      %v625 = vpop.f32.mrb[0].mxu0
      %v626 = vadd.f32 %v246, %v625
      %v627 = vpop.f32.mrb[0].mxu0
      %v628 = vpop.f32.mrb[0].mxu0
      %v629 = vadd.f32 %v246, %v628
      %v630 = vpop.f32.mrb[0].mxu0
      %631 = vmatprep.mubr.bf16.mxu0 0
      %632 = vmatmul.mubr.bf16.gmra.mrb[0].mxu0 %v449
      %v633 = vpop.f32.mrb[0].mxu0
      %v634 = vadd.f32 %v246, %v633
      %v635 = vpop.f32.mrb[0].mxu0
      %v636 = vpop.f32.mrb[0].mxu0
      %v637 = vadd.f32 %v246, %v636
      %v638 = vpop.f32.mrb[0].mxu0
      %639 = vmatprep.mubr.bf16.mxu0 0
      %640 = vmatmul.mubr.bf16.gmra.mrb[0].mxu0 %v452
      %v641 = vpop.f32.mrb[0].mxu0
      %v642 = vadd.f32 %v246, %v641
      %v643 = vpop.f32.mrb[0].mxu0
      %v644 = vpop.f32.mrb[0].mxu0
      %v645 = vadd.f32 %v246, %v644
      %v646 = vpop.f32.mrb[0].mxu0
      %647 = vmatprep.mubr.bf16.mxu0 0
      %648 = vmatmul.mubr.bf16.gmra.mrb[0].mxu0 %v455
      %v649 = vpop.f32.mrb[0].mxu0
      %v650 = vadd.f32 %v246, %v649
      %v651 = vpop.f32.mrb[0].mxu0
      %v652 = vpop.f32.mrb[0].mxu0
      %v653 = vadd.f32 %v246, %v652
      %v654 = vpop.f32.mrb[0].mxu0
      %655 = vmatprep.mubr.bf16.mxu0 0
      %656 = vmatmul.mubr.bf16.gmra.mrb[0].mxu0 %v458
      %v657 = vpop.f32.mrb[0].mxu0
      %v658 = vadd.f32 %v246, %v657
      %v659 = vpop.f32.mrb[0].mxu0
      %v660 = vpop.f32.mrb[0].mxu0
      %v661 = vadd.f32 %v246, %v660
      %v662 = vpop.f32.mrb[0].mxu0
      %663 = vmatprep.mubr.bf16.mxu0 0
      %664 = vmatmul.mubr.bf16.gmra.mrb[0].mxu0 %v461
      %v665 = vpop.f32.mrb[0].mxu0
      %v666 = vadd.f32 %v246, %v665
      %v667 = vpop.f32.mrb[0].mxu0
      %v668 = vpop.f32.mrb[0].mxu0
      %v669 = vadd.f32 %v246, %v668
      %v670 = vpop.f32.mrb[0].mxu0
      %671 = vmatprep.mubr.bf16.mxu0 0
      %672 = vmatmul.mubr.bf16.gmra.mrb[0].mxu0 %v464
      %v673 = vpop.f32.mrb[0].mxu0
      %v674 = vadd.f32 %v246, %v673
      %v675 = vpop.f32.mrb[0].mxu0
      %v676 = vpop.f32.mrb[0].mxu0
      %v677 = vadd.f32 %v246, %v676
      %v678 = vpop.f32.mrb[0].mxu0
      %679 = vmatprep.mubr.bf16.mxu0 0
      %680 = vmatmul.mubr.bf16.gmra.mrb[0].mxu0 %v467
      %v681 = vpop.f32.mrb[0].mxu0
      %v682 = vadd.f32 %v246, %v681
      %v683 = vpop.f32.mrb[0].mxu0
      %v684 = vpop.f32.mrb[0].mxu0
      %v685 = vadd.f32 %v246, %v684
      %v686 = vpop.f32.mrb[0].mxu0
      %687 = vmatprep.mubr.bf16.mxu0 0
      %688 = vmatmul.mubr.bf16.gmra.mrb[0].mxu0 %v470
      %v689 = vpop.f32.mrb[0].mxu0
      %v690 = vadd.f32 %v246, %v689
      %v691 = vpop.f32.mrb[0].mxu0
      %v692 = vpop.f32.mrb[0].mxu0
      %v693 = vadd.f32 %v246, %v692
      %v694 = vpop.f32.mrb[0].mxu0
      %695 = vmatprep.mubr.bf16.mxu0 0
      %696 = vmatmul.mubr.bf16.gmra.mrb[0].mxu0 %v473
      %v697 = vpop.f32.mrb[0].mxu0
      %v698 = vadd.f32 %v246, %v697
      %v699 = vpop.f32.mrb[0].mxu0
      %v700 = vpop.f32.mrb[0].mxu0
      %v701 = vadd.f32 %v246, %v700
      %v702 = vpop.f32.mrb[0].mxu0
      %703 = vmatprep.mubr.bf16.mxu0 0
      %704 = vmatmul.mubr.bf16.gmra.mrb[0].mxu0 %v476
      %v705 = vpop.f32.mrb[0].mxu0
      %v706 = vadd.f32 %v246, %v705
      %v707 = vpop.f32.mrb[0].mxu0
      %v708 = vpop.f32.mrb[0].mxu0
      %v709 = vadd.f32 %v246, %v708
      %v710 = vpop.f32.mrb[0].mxu0
      %711 = vmatprep.mubr.bf16.mxu0 0
      %712 = vmatmul.mubr.bf16.gmra.mrb[0].mxu0 %v479
      %v713 = vpop.f32.mrb[0].mxu0
      %v714 = vadd.f32 %v246, %v713
      %v715 = vpop.f32.mrb[0].mxu0
      %v716 = vpop.f32.mrb[0].mxu0
      %v717 = vadd.f32 %v246, %v716
      %v718 = vpop.f32.mrb[0].mxu0
      %719 = vmatprep.mubr.bf16.mxu0 0
      %720 = vmatmul.mubr.bf16.gmra.mrb[0].mxu0 %v482
      %v721 = vpop.f32.mrb[0].mxu0
      %v722 = vadd.f32 %v246, %v721
      %v723 = vpop.f32.mrb[0].mxu0
      %v724 = vpop.f32.mrb[0].mxu0
      %v725 = vadd.f32 %v246, %v724
      %v726 = vpop.f32.mrb[0].mxu0
      %727 = vmatprep.mubr.bf16.mxu0 0
      %728 = vmatmul.mubr.bf16.gmra.mrb[0].mxu0 %v485
      %v729 = vpop.f32.mrb[0].mxu0
      %v730 = vadd.f32 %v246, %v729
      %v731 = vpop.f32.mrb[0].mxu0
      %v732 = vpop.f32.mrb[0].mxu0
      %v733 = vadd.f32 %v246, %v732
      %v734 = vpop.f32.mrb[0].mxu0
      %735 = vmatprep.mubr.bf16.mxu0 0
      %736 = vmatmul.mubr.bf16.gmra.mrb[0].mxu0 %v488
      %v737 = vpop.f32.mrb[0].mxu0
      %v738 = vadd.f32 %v246, %v737
      %v739 = vpop.f32.mrb[0].mxu0
      %v740 = vpop.f32.mrb[0].mxu0
      %v741 = vadd.f32 %v246, %v740
      %v742 = vpop.f32.mrb[0].mxu0
      %743 = vmatprep.mubr.bf16.mxu0 0
      %744 = vmatmul.mubr.bf16.gmra.mrb[0].mxu0 %v491
      %v745 = vpop.f32.mrb[0].mxu0
      %v746 = vadd.f32 %v246, %v745
      %v747 = vpop.f32.mrb[0].mxu0
      %v748 = vpop.f32.mrb[0].mxu0
      %v749 = vadd.f32 %v246, %v748
      %v750 = vpop.f32.mrb[0].mxu0
      %751 = vmatprep.mubr.bf16.mxu0 0
      %752 = vmatmul.mubr.bf16.gmra.mrb[0].mxu0 %v494
      %v753 = vpop.f32.mrb[0].mxu0
      %v754 = vadd.f32 %v246, %v753
      %v755 = vpop.f32.mrb[0].mxu0
      %v756 = vpop.f32.mrb[0].mxu0
      %v757 = vadd.f32 %v246, %v756
      %v758 = vpop.f32.mrb[0].mxu0
      %759 = vmatprep.mubr.bf16.mxu0 0
      %760 = vmatmul.mubr.bf16.gmra.mrb[0].mxu0 %v497
      %v761 = vpop.f32.mrb[0].mxu0
      %v762 = vadd.f32 %v246, %v761
      %v763 = vpop.f32.mrb[0].mxu0
      %v764 = vpop.f32.mrb[0].mxu0
      %v765 = vadd.f32 %v246, %v764
      %v766 = vpop.f32.mrb[0].mxu0
      %767 = vmatprep.mubr.bf16.mxu0 0
      %768 = vmatmul.mubr.bf16.gmra.mrb[0].mxu0 %v500
      %v769 = vpop.f32.mrb[0].mxu0
      %v770 = vadd.f32 %v246, %v769
      %v771 = vpop.f32.mrb[0].mxu0
      %v772 = vpop.f32.mrb[0].mxu0
      %v773 = vadd.f32 %v246, %v772
      %v774 = vpop.f32.mrb[0].mxu0
      %775 = vmatprep.mubr.bf16.mxu0 0
      %776 = vmatmul.mubr.bf16.gmra.mrb[0].mxu0 %v503
      %v777 = vpop.f32.mrb[0].mxu0
      %v778 = vadd.f32 %v246, %v777
      %v779 = vpop.f32.mrb[0].mxu0
      %v780 = vpop.f32.mrb[0].mxu0
      %v781 = vadd.f32 %v246, %v780
      %v782 = vpop.f32.mrb[0].mxu0
      %783 = vmatprep.mubr.bf16.mxu0 0
      %784 = vmatmul.mubr.bf16.gmra.mrb[0].mxu0 %v506
      %v785 = vpop.f32.mrb[0].mxu0
      %v786 = vadd.f32 %v246, %v785
      %v787 = vpop.f32.mrb[0].mxu0
      %v788 = vpop.f32.mrb[0].mxu0
      %v789 = vadd.f32 %v246, %v788
      %v790 = vpop.f32.mrb[0].mxu0
      %791 = vmatprep.mubr.bf16.mxu0 0
      %792 = vmatmul.mubr.bf16.gmra.mrb[0].mxu0 %v509
      %v793 = vpop.f32.mrb[0].mxu0
      %v794 = vadd.f32 %v246, %v793
      %v795 = vpop.f32.mrb[0].mxu0
      %v796 = vpop.f32.mrb[0].mxu0
      %v797 = vadd.f32 %v246, %v796
      %v798 = vpop.f32.mrb[0].mxu0
      %799 = vdwg.mxu0
      %v800 = vsub.f32 0.0, %v546
      %v801 = vsub.f32 0.0, %v549
      %v802 = vsub.f32 0.0, %v554
      %v803 = vsub.f32 0.0, %v557
      %v804 = vsub.f32 0.0, %v562
      %v805 = vsub.f32 0.0, %v565
      %v806 = vsub.f32 0.0, %v570
      %v807 = vsub.f32 0.0, %v573
      %v808 = vsub.f32 0.0, %v578
      %v809 = vsub.f32 0.0, %v581
      %v810 = vsub.f32 0.0, %v586
      %v811 = vsub.f32 0.0, %v589
      %v812 = vsub.f32 0.0, %v594
      %v813 = vsub.f32 0.0, %v597
      %v814 = vsub.f32 0.0, %v602
      %v815 = vsub.f32 0.0, %v605
      %v816 = vsub.f32 0.0, %v610
      %v817 = vsub.f32 0.0, %v613
      %v818 = vsub.f32 0.0, %v618
      %v819 = vsub.f32 0.0, %v621
      %v820 = vsub.f32 0.0, %v626
      %v821 = vsub.f32 0.0, %v629
      %v822 = vsub.f32 0.0, %v634
      %v823 = vsub.f32 0.0, %v637
      %v824 = vsub.f32 0.0, %v642
      %v825 = vsub.f32 0.0, %v645
      %v826 = vsub.f32 0.0, %v650
      %v827 = vsub.f32 0.0, %v653
      %v828 = vsub.f32 0.0, %v658
      %v829 = vsub.f32 0.0, %v661
      %v830 = vsub.f32 0.0, %v666
      %v831 = vsub.f32 0.0, %v669
      %v832 = vsub.f32 0.0, %v674
      %v833 = vsub.f32 0.0, %v677
      %v834 = vsub.f32 0.0, %v682
      %v835 = vsub.f32 0.0, %v685
      %v836 = vsub.f32 0.0, %v690
      %v837 = vsub.f32 0.0, %v693
      %v838 = vsub.f32 0.0, %v698
      %v839 = vsub.f32 0.0, %v701
      %v840 = vsub.f32 0.0, %v706
      %v841 = vsub.f32 0.0, %v709
      %v842 = vsub.f32 0.0, %v714
      %v843 = vsub.f32 0.0, %v717
      %v844 = vsub.f32 0.0, %v722
      %v845 = vsub.f32 0.0, %v725
      %v846 = vsub.f32 0.0, %v730
      %v847 = vsub.f32 0.0, %v733
      %v848 = vsub.f32 0.0, %v738
      %v849 = vsub.f32 0.0, %v741
      %v850 = vsub.f32 0.0, %v746
      %v851 = vsub.f32 0.0, %v749
      %v852 = vsub.f32 0.0, %v754
      %v853 = vsub.f32 0.0, %v757
      %v854 = vsub.f32 0.0, %v762
      %v855 = vsub.f32 0.0, %v765
      %v856 = vsub.f32 0.0, %v770
      %v857 = vsub.f32 0.0, %v773
      %v858 = vsub.f32 0.0, %v778
      %v859 = vsub.f32 0.0, %v781
      %v860 = vsub.f32 0.0, %v786
      %v861 = vsub.f32 0.0, %v789
      %v862 = vsub.f32 0.0, %v794
      %v863 = vsub.f32 0.0, %v797
      %v864 = vmul.f32 %v800, 1.442695
      %v865 = vpow.pop %v864
      %v866 = vmul.f32 %v801, 1.442695
      %v867 = vpow.pop %v866
      %v868 = vmul.f32 %v802, 1.442695
      %v869 = vpow.pop %v868
      %v870 = vmul.f32 %v803, 1.442695
      %v871 = vpow.pop %v870
      %v872 = vmul.f32 %v804, 1.442695
      %v873 = vpow.pop %v872
      %v874 = vmul.f32 %v805, 1.442695
      %v875 = vpow.pop %v874
      %v876 = vmul.f32 %v806, 1.442695
      %v877 = vpow.pop %v876
      %v878 = vmul.f32 %v807, 1.442695
      %v879 = vpow.pop %v878
      %v880 = vmul.f32 %v808, 1.442695
      %v881 = vpow.pop %v880
      %v882 = vmul.f32 %v809, 1.442695
      %v883 = vpow.pop %v882
      %v884 = vmul.f32 %v810, 1.442695
      %v885 = vpow.pop %v884
      %v886 = vmul.f32 %v811, 1.442695
      %v887 = vpow.pop %v886
      %v888 = vmul.f32 %v812, 1.442695
      %v889 = vpow.pop %v888
      %v890 = vmul.f32 %v813, 1.442695
      %v891 = vpow.pop %v890
      %v892 = vmul.f32 %v814, 1.442695
      %v893 = vpow.pop %v892
      %v894 = vmul.f32 %v815, 1.442695
      %v895 = vpow.pop %v894
      %v896 = vmul.f32 %v816, 1.442695
      %v897 = vpow.pop %v896
      %v898 = vmul.f32 %v817, 1.442695
      %v899 = vpow.pop %v898
      %v900 = vmul.f32 %v818, 1.442695
      %v901 = vpow.pop %v900
      %v902 = vmul.f32 %v819, 1.442695
      %v903 = vpow.pop %v902
      %v904 = vmul.f32 %v820, 1.442695
      %v905 = vpow.pop %v904
      %v906 = vmul.f32 %v821, 1.442695
      %v907 = vpow.pop %v906
      %v908 = vmul.f32 %v822, 1.442695
      %v909 = vpow.pop %v908
      %v910 = vmul.f32 %v823, 1.442695
      %v911 = vpow.pop %v910
      %v912 = vmul.f32 %v824, 1.442695
      %v913 = vpow.pop %v912
      %v914 = vmul.f32 %v825, 1.442695
      %v915 = vpow.pop %v914
      %v916 = vmul.f32 %v826, 1.442695
      %v917 = vpow.pop %v916
      %v918 = vmul.f32 %v827, 1.442695
      %v919 = vpow.pop %v918
      %v920 = vmul.f32 %v828, 1.442695
      %v921 = vpow.pop %v920
      %v922 = vmul.f32 %v829, 1.442695
      %v923 = vpow.pop %v922
      %v924 = vmul.f32 %v830, 1.442695
      %v925 = vpow.pop %v924
      %v926 = vmul.f32 %v831, 1.442695
      %v927 = vpow.pop %v926
      %v928 = vmul.f32 %v832, 1.442695
      %v929 = vpow.pop %v928
      %v930 = vmul.f32 %v833, 1.442695
      %v931 = vpow.pop %v930
      %v932 = vmul.f32 %v834, 1.442695
      %v933 = vpow.pop %v932
      %v934 = vmul.f32 %v835, 1.442695
      %v935 = vpow.pop %v934
      %v936 = vmul.f32 %v836, 1.442695
      %v937 = vpow.pop %v936
      %v938 = vmul.f32 %v837, 1.442695
      %v939 = vpow.pop %v938
      %v940 = vmul.f32 %v838, 1.442695
      %v941 = vpow.pop %v940
      %v942 = vmul.f32 %v839, 1.442695
      %v943 = vpow.pop %v942
      %v944 = vmul.f32 %v840, 1.442695
      %v945 = vpow.pop %v944
      %v946 = vmul.f32 %v841, 1.442695
      %v947 = vpow.pop %v946
      %v948 = vmul.f32 %v842, 1.442695
      %v949 = vpow.pop %v948
      %v950 = vmul.f32 %v843, 1.442695
      %v951 = vpow.pop %v950
      %v952 = vmul.f32 %v844, 1.442695
      %v953 = vpow.pop %v952
      %v954 = vmul.f32 %v845, 1.442695
      %v955 = vpow.pop %v954
      %v956 = vmul.f32 %v846, 1.442695
      %v957 = vpow.pop %v956
      %v958 = vmul.f32 %v847, 1.442695
      %v959 = vpow.pop %v958
      %v960 = vmul.f32 %v848, 1.442695
      %v961 = vpow.pop %v960
      %v962 = vmul.f32 %v849, 1.442695
      %v963 = vpow.pop %v962
      %v964 = vmul.f32 %v850, 1.442695
      %v965 = vpow.pop %v964
      %v966 = vmul.f32 %v851, 1.442695
      %v967 = vpow.pop %v966
      %v968 = vmul.f32 %v852, 1.442695
      %v969 = vpow.pop %v968
      %v970 = vmul.f32 %v853, 1.442695
      %v971 = vpow.pop %v970
      %v972 = vmul.f32 %v854, 1.442695
      %v973 = vpow.pop %v972
      %v974 = vmul.f32 %v855, 1.442695
      %v975 = vpow.pop %v974
      %v976 = vmul.f32 %v856, 1.442695
      %v977 = vpow.pop %v976
      %v978 = vmul.f32 %v857, 1.442695
      %v979 = vpow.pop %v978
      %v980 = vmul.f32 %v858, 1.442695
      %v981 = vpow.pop %v980
      %v982 = vmul.f32 %v859, 1.442695
      %v983 = vpow.pop %v982
      %v984 = vmul.f32 %v860, 1.442695
      %v985 = vpow.pop %v984
      %v986 = vmul.f32 %v861, 1.442695
      %v987 = vpow.pop %v986
      %v988 = vmul.f32 %v862, 1.442695
      %v989 = vpow.pop %v988
      %v990 = vmul.f32 %v863, 1.442695
      %v991 = vpow.pop %v990
      %v992 = vadd.f32 %v865, 1.0
      %v993 = vadd.f32 %v867, 1.0
      %v994 = vadd.f32 %v869, 1.0
      %v995 = vadd.f32 %v871, 1.0
      %v996 = vadd.f32 %v873, 1.0
      %v997 = vadd.f32 %v875, 1.0
      %v998 = vadd.f32 %v877, 1.0
      %v999 = vadd.f32 %v879, 1.0
      %v1000 = vadd.f32 %v881, 1.0
      %v1001 = vadd.f32 %v883, 1.0
      %v1002 = vadd.f32 %v885, 1.0
      %v1003 = vadd.f32 %v887, 1.0
      %v1004 = vadd.f32 %v889, 1.0
      %v1005 = vadd.f32 %v891, 1.0
      %v1006 = vadd.f32 %v893, 1.0
      %v1007 = vadd.f32 %v895, 1.0
      %v1008 = vadd.f32 %v897, 1.0
      %v1009 = vadd.f32 %v899, 1.0
      %v1010 = vadd.f32 %v901, 1.0
      %v1011 = vadd.f32 %v903, 1.0
      %v1012 = vadd.f32 %v905, 1.0
      %v1013 = vadd.f32 %v907, 1.0
      %v1014 = vadd.f32 %v909, 1.0
      %v1015 = vadd.f32 %v911, 1.0
      %v1016 = vadd.f32 %v913, 1.0
      %v1017 = vadd.f32 %v915, 1.0
      %v1018 = vadd.f32 %v917, 1.0
      %v1019 = vadd.f32 %v919, 1.0
      %v1020 = vadd.f32 %v921, 1.0
      %v1021 = vadd.f32 %v923, 1.0
      %v1022 = vadd.f32 %v925, 1.0
      %v1023 = vadd.f32 %v927, 1.0
      %v1024 = vadd.f32 %v929, 1.0
      %v1025 = vadd.f32 %v931, 1.0
      %v1026 = vadd.f32 %v933, 1.0
      %v1027 = vadd.f32 %v935, 1.0
      %v1028 = vadd.f32 %v937, 1.0
      %v1029 = vadd.f32 %v939, 1.0
      %v1030 = vadd.f32 %v941, 1.0
      %v1031 = vadd.f32 %v943, 1.0
      %v1032 = vadd.f32 %v945, 1.0
      %v1033 = vadd.f32 %v947, 1.0
      %v1034 = vadd.f32 %v949, 1.0
      %v1035 = vadd.f32 %v951, 1.0
      %v1036 = vadd.f32 %v953, 1.0
      %v1037 = vadd.f32 %v955, 1.0
      %v1038 = vadd.f32 %v957, 1.0
      %v1039 = vadd.f32 %v959, 1.0
      %v1040 = vadd.f32 %v961, 1.0
      %v1041 = vadd.f32 %v963, 1.0
      %v1042 = vadd.f32 %v965, 1.0
      %v1043 = vadd.f32 %v967, 1.0
      %v1044 = vadd.f32 %v969, 1.0
      %v1045 = vadd.f32 %v971, 1.0
      %v1046 = vadd.f32 %v973, 1.0
      %v1047 = vadd.f32 %v975, 1.0
      %v1048 = vadd.f32 %v977, 1.0
      %v1049 = vadd.f32 %v979, 1.0
      %v1050 = vadd.f32 %v981, 1.0
      %v1051 = vadd.f32 %v983, 1.0
      %v1052 = vadd.f32 %v985, 1.0
      %v1053 = vadd.f32 %v987, 1.0
      %v1054 = vadd.f32 %v989, 1.0
      %v1055 = vadd.f32 %v991, 1.0
      %v1056 = vrcp.pop %v992
      %v1057 = vrcp.pop %v993
      %v1058 = vrcp.pop %v994
      %v1059 = vrcp.pop %v995
      %v1060 = vrcp.pop %v996
      %v1061 = vrcp.pop %v997
      %v1062 = vrcp.pop %v998
      %v1063 = vrcp.pop %v999
      %v1064 = vrcp.pop %v1000
      %v1065 = vrcp.pop %v1001
      %v1066 = vrcp.pop %v1002
      %v1067 = vrcp.pop %v1003
      %v1068 = vrcp.pop %v1004
      %v1069 = vrcp.pop %v1005
      %v1070 = vrcp.pop %v1006
      %v1071 = vrcp.pop %v1007
      %v1072 = vrcp.pop %v1008
      %v1073 = vrcp.pop %v1009
      %v1074 = vrcp.pop %v1010
      %v1075 = vrcp.pop %v1011
      %v1076 = vrcp.pop %v1012
      %v1077 = vrcp.pop %v1013
      %v1078 = vrcp.pop %v1014
      %v1079 = vrcp.pop %v1015
      %v1080 = vrcp.pop %v1016
      %v1081 = vrcp.pop %v1017
      %v1082 = vrcp.pop %v1018
      %v1083 = vrcp.pop %v1019
      %v1084 = vrcp.pop %v1020
      %v1085 = vrcp.pop %v1021
      %v1086 = vrcp.pop %v1022
      %v1087 = vrcp.pop %v1023
      %v1088 = vrcp.pop %v1024
      %v1089 = vrcp.pop %v1025
      %v1090 = vrcp.pop %v1026
      %v1091 = vrcp.pop %v1027
      %v1092 = vrcp.pop %v1028
      %v1093 = vrcp.pop %v1029
      %v1094 = vrcp.pop %v1030
      %v1095 = vrcp.pop %v1031
      %v1096 = vrcp.pop %v1032
      %v1097 = vrcp.pop %v1033
      %v1098 = vrcp.pop %v1034
      %v1099 = vrcp.pop %v1035
      %v1100 = vrcp.pop %v1036
      %v1101 = vrcp.pop %v1037
      %v1102 = vrcp.pop %v1038
      %v1103 = vrcp.pop %v1039
      %v1104 = vrcp.pop %v1040
      %v1105 = vrcp.pop %v1041
      %v1106 = vrcp.pop %v1042
      %v1107 = vrcp.pop %v1043
      %v1108 = vrcp.pop %v1044
      %v1109 = vrcp.pop %v1045
      %v1110 = vrcp.pop %v1046
      %v1111 = vrcp.pop %v1047
      %v1112 = vrcp.pop %v1048
      %v1113 = vrcp.pop %v1049
      %v1114 = vrcp.pop %v1050
      %v1115 = vrcp.pop %v1051
      %v1116 = vrcp.pop %v1052
      %v1117 = vrcp.pop %v1053
      %v1118 = vrcp.pop %v1054
      %v1119 = vrcp.pop %v1055
      %vm1120 = vcmask 23552
      %1121 = vst.msk [vmem:[%s172] sm:$0xff] %vm1120, %v1056
      %1122 = vst.msk [vmem:[%s172 + $0x8] sm:$0xff] %vm1120, %v1057
      %1123 = vst.msk [vmem:[%s172 + $0x10] sm:$0xff] %vm1120, %v1058
      %1124 = vst.msk [vmem:[%s172 + $0x18] sm:$0xff] %vm1120, %v1059
      %1125 = vst.msk [vmem:[%s172 + $0x20] sm:$0xff] %vm1120, %v1060
      %1126 = vst.msk [vmem:[%s172 + $0x28] sm:$0xff] %vm1120, %v1061
      %1127 = vst.msk [vmem:[%s172 + $0x30] sm:$0xff] %vm1120, %v1062
      %1128 = vst.msk [vmem:[%s172 + $0x38] sm:$0xff] %vm1120, %v1063
      %1129 = vst.msk [vmem:[%s172 + $0x40] sm:$0xff] %vm1120, %v1064
      %1130 = vst.msk [vmem:[%s172 + $0x48] sm:$0xff] %vm1120, %v1065
      %1131 = vst.msk [vmem:[%s172 + $0x50] sm:$0xff] %vm1120, %v1066
      %1132 = vst.msk [vmem:[%s172 + $0x58] sm:$0xff] %vm1120, %v1067
      %1133 = vst.msk [vmem:[%s172 + $0x60] sm:$0xff] %vm1120, %v1068
      %1134 = vst.msk [vmem:[%s172 + $0x68] sm:$0xff] %vm1120, %v1069
      %1135 = vst.msk [vmem:[%s172 + $0x70] sm:$0xff] %vm1120, %v1070
      %1136 = vst.msk [vmem:[%s172 + $0x78] sm:$0xff] %vm1120, %v1071
      %1137 = vst.msk [vmem:[%s172 + $0x80] sm:$0xff] %vm1120, %v1072
      %1138 = vst.msk [vmem:[%s172 + $0x88] sm:$0xff] %vm1120, %v1073
      %1139 = vst.msk [vmem:[%s172 + $0x90] sm:$0xff] %vm1120, %v1074
      %1140 = vst.msk [vmem:[%s172 + $0x98] sm:$0xff] %vm1120, %v1075
      %1141 = vst.msk [vmem:[%s172 + $0xa0] sm:$0xff] %vm1120, %v1076
      %1142 = vst.msk [vmem:[%s172 + $0xa8] sm:$0xff] %vm1120, %v1077
      %1143 = vst.msk [vmem:[%s172 + $0xb0] sm:$0xff] %vm1120, %v1078
      %1144 = vst.msk [vmem:[%s172 + $0xb8] sm:$0xff] %vm1120, %v1079
      %1145 = vst.msk [vmem:[%s172 + $0xc0] sm:$0xff] %vm1120, %v1080
      %1146 = vst.msk [vmem:[%s172 + $0xc8] sm:$0xff] %vm1120, %v1081
      %1147 = vst.msk [vmem:[%s172 + $0xd0] sm:$0xff] %vm1120, %v1082
      %1148 = vst.msk [vmem:[%s172 + $0xd8] sm:$0xff] %vm1120, %v1083
      %1149 = vst.msk [vmem:[%s172 + $0xe0] sm:$0xff] %vm1120, %v1084
      %1150 = vst.msk [vmem:[%s172 + $0xe8] sm:$0xff] %vm1120, %v1085
      %1151 = vst.msk [vmem:[%s172 + $0xf0] sm:$0xff] %vm1120, %v1086
      %1152 = vst.msk [vmem:[%s172 + $0xf8] sm:$0xff] %vm1120, %v1087
      %1153 = vst.msk [vmem:[%s172 + $0x100] sm:$0xff] %vm1120, %v1088
      %1154 = vst.msk [vmem:[%s172 + $0x108] sm:$0xff] %vm1120, %v1089
      %1155 = vst.msk [vmem:[%s172 + $0x110] sm:$0xff] %vm1120, %v1090
      %1156 = vst.msk [vmem:[%s172 + $0x118] sm:$0xff] %vm1120, %v1091
      %1157 = vst.msk [vmem:[%s172 + $0x120] sm:$0xff] %vm1120, %v1092
      %1158 = vst.msk [vmem:[%s172 + $0x128] sm:$0xff] %vm1120, %v1093
      %1159 = vst.msk [vmem:[%s172 + $0x130] sm:$0xff] %vm1120, %v1094
      %1160 = vst.msk [vmem:[%s172 + $0x138] sm:$0xff] %vm1120, %v1095
      %1161 = vst.msk [vmem:[%s172 + $0x140] sm:$0xff] %vm1120, %v1096
      %1162 = vst.msk [vmem:[%s172 + $0x148] sm:$0xff] %vm1120, %v1097
      %1163 = vst.msk [vmem:[%s172 + $0x150] sm:$0xff] %vm1120, %v1098
      %1164 = vst.msk [vmem:[%s172 + $0x158] sm:$0xff] %vm1120, %v1099
      %1165 = vst.msk [vmem:[%s172 + $0x160] sm:$0xff] %vm1120, %v1100
      %1166 = vst.msk [vmem:[%s172 + $0x168] sm:$0xff] %vm1120, %v1101
      %1167 = vst.msk [vmem:[%s172 + $0x170] sm:$0xff] %vm1120, %v1102
      %1168 = vst.msk [vmem:[%s172 + $0x178] sm:$0xff] %vm1120, %v1103
      %1169 = vst.msk [vmem:[%s172 + $0x180] sm:$0xff] %vm1120, %v1104
      %1170 = vst.msk [vmem:[%s172 + $0x188] sm:$0xff] %vm1120, %v1105
      %1171 = vst.msk [vmem:[%s172 + $0x190] sm:$0xff] %vm1120, %v1106
      %1172 = vst.msk [vmem:[%s172 + $0x198] sm:$0xff] %vm1120, %v1107
      %1173 = vst.msk [vmem:[%s172 + $0x1a0] sm:$0xff] %vm1120, %v1108
      %1174 = vst.msk [vmem:[%s172 + $0x1a8] sm:$0xff] %vm1120, %v1109
      %1175 = vst.msk [vmem:[%s172 + $0x1b0] sm:$0xff] %vm1120, %v1110
      %1176 = vst.msk [vmem:[%s172 + $0x1b8] sm:$0xff] %vm1120, %v1111
      %1177 = vst.msk [vmem:[%s172 + $0x1c0] sm:$0xff] %vm1120, %v1112
      %1178 = vst.msk [vmem:[%s172 + $0x1c8] sm:$0xff] %vm1120, %v1113
      %1179 = vst.msk [vmem:[%s172 + $0x1d0] sm:$0xff] %vm1120, %v1114
      %1180 = vst.msk [vmem:[%s172 + $0x1d8] sm:$0xff] %vm1120, %v1115
      %1181 = vst.msk [vmem:[%s172 + $0x1e0] sm:$0xff] %vm1120, %v1116
      %1182 = vst.msk [vmem:[%s172 + $0x1e8] sm:$0xff] %vm1120, %v1117
      %1183 = vst.msk [vmem:[%s172 + $0x1f0] sm:$0xff] %vm1120, %v1118
      %1184 = vst.msk [vmem:[%s172 + $0x1f8] sm:$0xff] %vm1120, %v1119
      %s1185 = smul.u32 64, %s14
      %p1186 = scmp.lt.s32.totalorder %s1185, 255
      %s1187 = scalar_select %p1186, %s1185, 255
      %s1188 = smul.addr %s1187, 8
      %s1189 = scalar_lea.vmem %s3, %s1188
      // Predicated region
      $region33: #{autoencoder_forward.46} parent=31 // pred_check
        %p1190 = pneg %p100
      $region34: #{autoencoder_forward.46} parent=31 // pred_check_branch
        %1192 = sbr.rel (%p1190) target = $region36
      $region35: #{autoencoder_forward.46} parent=31 // pred_region
        %s1193 = smul.u32 64, %s14
      $region36: #{autoencoder_forward.46} parent=31 // pred_fallthru
        _
    $region32: #{autoencoder_forward.46} parent=5 // pred_fallthru
      _
    %p1194 = scmp.le.s32.totalorder 2, %s9
    // Predicated region
    $region37: #{autoencoder_forward.46} parent=5 // pred_check
      %p1195 = pneg %p1194
    $region38: #{autoencoder_forward.46} parent=5 // pred_check_branch
      %1197 = sbr.rel (%p1195) target = $region40
    $region39: #{autoencoder_forward.46} parent=5 // pred_region
      %s1198 = ssub.s32 %s9, 2
      // Predicated region
      $region41: #{autoencoder_forward.46} parent=39 // pred_check
        %p1199 = pneg %p106
      $region42: #{autoencoder_forward.46} parent=39 // pred_check_branch
        %1201 = sbr.rel (%p1199) target = $region44
      $region43: #{autoencoder_forward.46} parent=39 // pred_region
        %s1202 = smul.u32 64, %s15
        %p1203 = scmp.lt.s32.totalorder %s1202, 255
        %s1204 = scalar_select %p1203, %s1202, 255
        %s1205 = smul.addr %s1204, 8
        %s1206 = scalar_lea.vmem %s3, %s1205
      $region44: #{autoencoder_forward.46} parent=39 // pred_fallthru
        _
    $region40: #{autoencoder_forward.46} parent=5 // pred_fallthru
      _
  $region6: #{autoencoder_forward.46} parent=0 // loop_footer
    %s13 = sadd.s32 1, %s9
  $region7: #{autoencoder_forward.46} parent=0 // loop_footer_branch
    %8 = sbr.rel target = $region3
  $region8: #{autoencoder_forward.46} parent=0 // loop_exit
    _

</llo_original>
